<compile_context>
chip_gen: v6e
topology: v6e:2x2x1
jax: 0.10.0
libtpu: 0.0.40
codegen_flags: <defaults>
</compile_context>

<pallas_src>
import functools

import numpy as np
import jax
import jax.numpy as jnp
from jax.experimental import pallas as pl
from jax.experimental.pallas import tpu as pltpu  # noqa: F401  (TPU backend)


# ----------------------------------------------------------------------------
# In-kernel helpers
# ----------------------------------------------------------------------------

def _prompt(x, p):
    """AugmentPrompt.compute: x + softmax(x @ P^T) @ P  (row-wise)."""
    s = jax.lax.dot_general(x, p, (((1,), (1,)), ((), ())),
                            preferred_element_type=jnp.float32)
    s = s - jnp.max(s, axis=-1, keepdims=True)
    e = jnp.exp(s)
    w = e * pl.reciprocal(jnp.sum(e, axis=-1, keepdims=True), approx=True)
    return x + jnp.dot(w, p, preferred_element_type=jnp.float32)


# ----------------------------------------------------------------------------
# Kernel A: prompt-augmented input construction + two batched 2-layer GCNs
# ----------------------------------------------------------------------------

def _prep_gcn_kernel(q1_ref, q2_ref, sel_ref, rem_ref, p_ref, aw_ref, ab_ref,
                     a_ref, w1_ref, b1_ref, w2_ref, b2_ref, o_ref):
    q1 = q1_ref[...]
    q2 = q2_ref[...]
    p = p_ref[...]

    # AdaptPrompt (linear) applied row-wise, masked to the remaining rows.
    adapt_all = jnp.dot(q1, aw_ref[...],
                        preferred_element_type=jnp.float32) + ab_ref[...]

    aug_q2 = _prompt(q2, p)            # for selected rows
    aug_adapt = _prompt(adapt_all, p)  # for remaining rows
    aug_q1 = _prompt(q1, p)            # Q1_aug_x (all rows)

    sel = sel_ref[...]                 # (N, 1) 0/1 masks
    rem = rem_ref[...]
    input_x = sel * aug_q2 + rem * aug_adapt + (1.0 - sel - rem) * q1

    # Batched 2-layer GCN: lanes [0:H) = emb(input_x), lanes [H:2H) = Q1_emb.
    a = a_ref[...]
    w1 = w1_ref[...]
    xw = jnp.concatenate(
        [jnp.dot(input_x, w1, preferred_element_type=jnp.float32),
         jnp.dot(aug_q1, w1, preferred_element_type=jnp.float32)], axis=1)
    h1 = jnp.maximum(
        jnp.dot(a, xw, preferred_element_type=jnp.float32) + b1_ref[...], 0.0)
    h2 = jnp.dot(a, jnp.dot(h1, w2_ref[...],
                            preferred_element_type=jnp.float32),
                 preferred_element_type=jnp.float32) + b2_ref[...]
    o_ref[...] = h2


def _full_spec(shape):
    return pl.BlockSpec(shape, lambda i: (0,) * len(shape))


def prep_gcn_pallas(q1_x, q2_x, sel_mask, rem_mask, aug_p, adapt_w, adapt_b,
                    a_hat, w1, b1cat, w2bd, b2cat):
    N = q1_x.shape[0]
    H2 = w2bd.shape[1]
    args = (q1_x, q2_x, sel_mask, rem_mask, aug_p, adapt_w, adapt_b,
            a_hat, w1, b1cat, w2bd, b2cat)
    return pl.pallas_call(
        _prep_gcn_kernel,
        out_shape=jax.ShapeDtypeStruct((N, H2), jnp.float32),
        grid=(1,),
        in_specs=[_full_spec(a.shape) for a in args],
        out_specs=_full_spec((N, H2)),
    )(*args)


# ----------------------------------------------------------------------------
# Kernel B: delta tensor + dire/dist prompts + both MLP heads (fused)
# ----------------------------------------------------------------------------

def _heads_kernel(s_ref, c_ref, r_ref, t_ref, dirp_ref, dstp_ref,
                  w1_ref, b1_ref, w2_ref, b2_ref, o_ref):
    s = s_ref[...]                     # (n_sel, H)
    c = c_ref[...]                     # (2C, H)
    # delta[i*2C + k] = s[i] - c[k] + s[i]*c[k]  via constant 0/1 expansions.
    sr = jnp.dot(r_ref[...], s, preferred_element_type=jnp.float32)
    ct = jnp.dot(t_ref[...], c, preferred_element_type=jnp.float32)
    delta = sr - ct + sr * ct          # (n_sel*2C, H)

    dire_e = _prompt(delta, dirp_ref[...])
    dist_e = _prompt(delta, dstp_ref[...])

    # Both heads packed via block-diagonal weights; lane-concat inputs.
    x = jnp.concatenate([dire_e, jnp.abs(dist_e)], axis=1)      # (rows, 2H)
    h = jnp.maximum(
        jnp.dot(x, w1_ref[...], preferred_element_type=jnp.float32)
        + b1_ref[...], 0.0)
    o_ref[...] = jnp.dot(h, w2_ref[...],
                         preferred_element_type=jnp.float32) + b2_ref[...]


def heads_pallas(sel_emb, centers, r_mat, t_mat, dire_p, dist_p,
                 w1bd, b1cat, w2bd, b2cat):
    rows = r_mat.shape[0]
    out_w = w2bd.shape[1]
    args = (sel_emb, centers, r_mat, t_mat, dire_p, dist_p,
            w1bd, b1cat, w2bd, b2cat)
    return pl.pallas_call(
        _heads_kernel,
        out_shape=jax.ShapeDtypeStruct((rows, out_w), jnp.float32),
        grid=(1,),
        in_specs=[_full_spec(a.shape) for a in args],
        out_specs=_full_spec((rows, out_w)),
    )(*args)


# ----------------------------------------------------------------------------
# Glue (tiny XLA ops) + forward pass
# ----------------------------------------------------------------------------

def _softmax(x, axis):
    x = x - jnp.max(x, axis=axis, keepdims=True)
    e = jnp.exp(x)
    return e / jnp.sum(e, axis=axis, keepdims=True)


def _blockdiag(a, b):
    za = jnp.zeros((a.shape[0], b.shape[1]), a.dtype)
    zb = jnp.zeros((b.shape[0], a.shape[1]), b.dtype)
    return jnp.block([[a, za], [zb, b]])


@functools.partial(jax.jit, static_argnames=("output_dim",))
def downstream_forward(params, q1_x, q1_y, q2_x, q2_y, a_hat,
                       selected_idxes, remaining_idxes, output_dim=4):
    N, _ = q1_x.shape
    H = params["gcn_w2"].shape[1]
    C = output_dim
    n_sel = selected_idxes.shape[0]
    n_cen = 2 * C

    sel_vec = jnp.zeros((N,), jnp.float32).at[selected_idxes].set(1.0)
    rem_vec = jnp.zeros((N,), jnp.float32).at[remaining_idxes].set(1.0)

    # ---------- fused input construction + both GCN passes (1 kernel) -------
    b1cat = jnp.concatenate([params["gcn_b1"], params["gcn_b1"]])[None, :]
    b2cat = jnp.concatenate([params["gcn_b2"], params["gcn_b2"]])[None, :]
    w2bd = _blockdiag(params["gcn_w2"], params["gcn_w2"])
    emb_cat = prep_gcn_pallas(
        q1_x, q2_x, sel_vec[:, None], rem_vec[:, None],
        params["augment_p"], params["adapt_w"], params["adapt_b"][None, :],
        a_hat, params["gcn_w1"], b1cat, w2bd, b2cat)
    emb = emb_cat[:, :H]
    q1_emb = emb_cat[:, H:]

    # ---------- labels & class centers (one-hot matmuls) --------------------
    sel_bool = sel_vec > 0.5
    rem_bool = rem_vec > 0.5
    input_y = jnp.where(sel_bool, q2_y, q1_y)

    def centers_from(e, oh):
        # mean of empty class -> NaN, matching torch tensor.mean() semantics.
        cnt = jnp.sum(oh, axis=0)[:, None]
        return (oh.T @ e) / cnt

    q1_centers = centers_from(q1_emb, jax.nn.one_hot(q1_y, C, dtype=jnp.float32))
    few_oh = jax.nn.one_hot(input_y, C, dtype=jnp.float32) * sel_vec[:, None]
    few_centers = centers_from(emb, few_oh)

    eps = 1e-8
    en = emb / jnp.maximum(jnp.linalg.norm(emb, axis=-1, keepdims=True), eps)
    cn = few_centers / jnp.maximum(
        jnp.linalg.norm(few_centers, axis=-1, keepdims=True), eps)
    pseudo = jnp.argmax(en @ cn.T, axis=1).astype(input_y.dtype)
    input_y = jnp.where(rem_bool, pseudo, input_y)

    q2_centers = centers_from(emb, jax.nn.one_hot(input_y, C, dtype=jnp.float32))
    centers = jnp.concatenate([q1_centers, q2_centers], axis=0)   # (2C, H)

    sel_emb = emb[selected_idxes]                                 # (n_sel, H)

    # ---------- fused delta + dual prompt + dual MLP head (1 kernel) --------
    r_mat = jnp.repeat(jnp.eye(n_sel, dtype=jnp.float32), n_cen, axis=0)
    t_mat = jnp.tile(jnp.eye(n_cen, dtype=jnp.float32), (n_sel, 1))
    w1bd = _blockdiag(params["dire_w1"], params["dist_w1"])
    b1c = jnp.concatenate([params["dire_b1"], params["dist_b1"]])[None, :]
    w2bd_h = _blockdiag(params["dire_w2"], params["dist_w2"])
    b2c = jnp.concatenate([params["dire_b2"], params["dist_b2"]])[None, :]

    logits = heads_pallas(sel_emb, centers, r_mat, t_mat,
                          params["dire_p"], params["dist_p"],
                          w1bd, b1c, w2bd_h, b2c)                 # (n_sel*2C, 3+C)

    dire_logits = logits[:, :3].reshape(n_sel, n_cen, 3)
    dist_logits = logits[:, 3:3 + C].reshape(n_sel, n_cen, C)
    # Sequential's Softmax(dim=1) on 3-D tensor, then F.softmax(dim=2).
    dire_probs = _softmax(_softmax(dire_logits, axis=1), axis=2)
    dist_probs = _softmax(_softmax(dist_logits, axis=1), axis=2)

    # ---------- combine dire x dist probabilities (single einsum) -----------
    m_map = np.zeros((3, C, 2 * C - 1), np.float32)
    for d in range(3):
        for f in range(C):
            m_map[d, f, (d - 1) * f + (C - 1)] = 1.0
    s_map = np.zeros((n_cen, C), np.float32)
    for i in range(n_cen):
        s_map[i, i % C] = 1.0
    combined = jnp.einsum("nid,nif,ic,dfp->ncp",
                          dire_probs, dist_probs,
                          jnp.asarray(s_map), jnp.asarray(m_map))

    out = jnp.zeros((n_sel, C), jnp.float32)
    for class_idx in range(C):
        lo = (C - 1) - class_idx
        pre = combined[:, class_idx, lo:lo + C]
        out = out + _softmax(pre, axis=1)
    out = _softmax(out, axis=1)

    # F.cross_entropy treats `out` as logits (faithful to the original quirk).
    targets = input_y[selected_idxes]
    lse = jax.scipy.special.logsumexp(out, axis=1)
    picked = jnp.take_along_axis(out, targets[:, None], axis=1)[:, 0]
    return jnp.mean(lse - picked)


# ----------------------------------------------------------------------------
# Parameter init + graph helpers + example run
# ----------------------------------------------------------------------------

def init_params(key, input_dim, hid_dim, aug_num_in, aug_num_hid):
    ks = jax.random.split(key, 16)

    def u(k, shape, scale=0.2):
        return jax.random.uniform(k, shape, jnp.float32, -scale, scale)

    return {
        "gcn_w1": u(ks[0], (input_dim, hid_dim)),
        "gcn_b1": u(ks[1], (hid_dim,)),
        "gcn_w2": u(ks[2], (hid_dim, hid_dim)),
        "gcn_b2": u(ks[3], (hid_dim,)),
        "augment_p": u(ks[4], (aug_num_in, input_dim)),
        "dist_p": u(ks[5], (aug_num_hid, hid_dim)),
        "dire_p": u(ks[6], (aug_num_hid, hid_dim)),
        "dist_w1": u(ks[7], (hid_dim, hid_dim)),
        "dist_b1": u(ks[8], (hid_dim,)),
        "dist_w2": u(ks[9], (hid_dim, 4)),
        "dist_b2": u(ks[10], (4,)),
        "dire_w1": u(ks[11], (hid_dim, hid_dim)),
        "dire_b1": u(ks[12], (hid_dim,)),
        "dire_w2": u(ks[13], (hid_dim, 3)),
        "dire_b2": u(ks[14], (3,)),
        # TODO(synk): AdaptPrompt is not defined in the provided source;
        # approximated as a learnable linear map on node features.
        "adapt_w": u(ks[15], (input_dim, input_dim)),
        "adapt_b": jnp.zeros((input_dim,), jnp.float32),
    }


def normalized_adjacency(edge_index, num_nodes):
    src, dst = edge_index
    a = jnp.zeros((num_nodes, num_nodes), jnp.float32)
    a = a.at[src, dst].set(1.0)
    a = jnp.maximum(a, a.T)                     # symmetrize
    a = a + jnp.eye(num_nodes, dtype=jnp.float32)
    deg = jnp.sum(a, axis=1)
    d_inv_sqrt = 1.0 / jnp.sqrt(deg)
    return a * d_inv_sqrt[:, None] * d_inv_sqrt[None, :]


if __name__ == "__main__":
    N_NODES = 32
    INPUT_DIM = 16
    HID_DIM = 32
    OUTPUT_DIM = 4
    AUG_NUM_IN = 4
    AUG_NUM_HID = 4
    N_EDGES = 64

    key = jax.random.PRNGKey(0)
    k_param, k_x1, k_x2, k_edge = jax.random.split(key, 4)

    params = init_params(k_param, INPUT_DIM, HID_DIM, AUG_NUM_IN, AUG_NUM_HID)

    q1_x = jax.random.normal(k_x1, (N_NODES, INPUT_DIM), jnp.float32)
    q2_x = jax.random.normal(k_x2, (N_NODES, INPUT_DIM), jnp.float32)
    q1_y = (jnp.arange(N_NODES) % OUTPUT_DIM).astype(jnp.int32)
    q2_y = ((jnp.arange(N_NODES) + 1) % OUTPUT_DIM).astype(jnp.int32)

    edge_index = jax.random.randint(k_edge, (2, N_EDGES), 0, N_NODES,
                                    dtype=jnp.int32)
    a_hat = normalized_adjacency(edge_index, N_NODES)

    selected_idxes = jnp.arange(8, dtype=jnp.int32)              # 2 nodes/class
    remaining_idxes = jnp.arange(8, N_NODES, dtype=jnp.int32)

    loss = downstream_forward(params, q1_x, q1_y, q2_x, q2_y, a_hat,
                              selected_idxes, remaining_idxes,
                              output_dim=OUTPUT_DIM)
    jax.block_until_ready(loss)
    assert jnp.isfinite(loss)
    print("KERNEL_OK")
</pallas_src>

<mosaic_0001>
module attributes {stable_mosaic.version = 11 : i64} {
  func.func @_prep_gcn_kernel(%arg0: i32, %arg1: memref<32x16xf32, #tpu.memory_space<vmem>>, %arg2: memref<32x16xf32, #tpu.memory_space<vmem>>, %arg3: memref<32x1xf32, #tpu.memory_space<vmem>>, %arg4: memref<32x1xf32, #tpu.memory_space<vmem>>, %arg5: memref<4x16xf32, #tpu.memory_space<vmem>>, %arg6: memref<16x16xf32, #tpu.memory_space<vmem>>, %arg7: memref<1x16xf32, #tpu.memory_space<vmem>>, %arg8: memref<32x32xf32, #tpu.memory_space<vmem>>, %arg9: memref<16x32xf32, #tpu.memory_space<vmem>>, %arg10: memref<1x64xf32, #tpu.memory_space<vmem>>, %arg11: memref<64x64xf32, #tpu.memory_space<vmem>>, %arg12: memref<1x64xf32, #tpu.memory_space<vmem>>, %arg13: memref<32x64xf32, #tpu.memory_space<vmem>>) attributes {dimension_semantics = [#tpu.dimension_semantics<arbitrary>], iteration_bounds = array<i64: 1>, scalar_prefetch = 0 : i64, scratch_operands = 0 : i64, tpu.core_type = #tpu.core_type<tc>, window_params = [{pipeline_mode = #tpu.pipeline_mode<synchronous>, transform_indices = @transform_0, window_bounds = array<i64: 32, 16>}, {pipeline_mode = #tpu.pipeline_mode<synchronous>, transform_indices = @transform_1, window_bounds = array<i64: 32, 16>}, {pipeline_mode = #tpu.pipeline_mode<synchronous>, transform_indices = @transform_2, window_bounds = array<i64: 32, 1>}, {pipeline_mode = #tpu.pipeline_mode<synchronous>, transform_indices = @transform_3, window_bounds = array<i64: 32, 1>}, {pipeline_mode = #tpu.pipeline_mode<synchronous>, transform_indices = @transform_4, window_bounds = array<i64: 4, 16>}, {pipeline_mode = #tpu.pipeline_mode<synchronous>, transform_indices = @transform_5, window_bounds = array<i64: 16, 16>}, {pipeline_mode = #tpu.pipeline_mode<synchronous>, transform_indices = @transform_6, window_bounds = array<i64: 1, 16>}, {pipeline_mode = #tpu.pipeline_mode<synchronous>, transform_indices = @transform_7, window_bounds = array<i64: 32, 32>}, {pipeline_mode = #tpu.pipeline_mode<synchronous>, transform_indices = @transform_8, window_bounds = array<i64: 16, 32>}, {pipeline_mode = #tpu.pipeline_mode<synchronous>, transform_indices = @transform_9, window_bounds = array<i64: 1, 64>}, {pipeline_mode = #tpu.pipeline_mode<synchronous>, transform_indices = @transform_10, window_bounds = array<i64: 64, 64>}, {pipeline_mode = #tpu.pipeline_mode<synchronous>, transform_indices = @transform_11, window_bounds = array<i64: 1, 64>}, {pipeline_mode = #tpu.pipeline_mode<synchronous>, transform_indices = @transform_12, window_bounds = array<i64: 32, 64>}]} {
    %c0 = arith.constant 0 : index
    %c0_0 = arith.constant 0 : index
    %0 = vector.load %arg1[%c0, %c0_0] : memref<32x16xf32, #tpu.memory_space<vmem>>, vector<32x16xf32>
    %c0_1 = arith.constant 0 : index
    %c0_2 = arith.constant 0 : index
    %1 = vector.load %arg2[%c0_1, %c0_2] : memref<32x16xf32, #tpu.memory_space<vmem>>, vector<32x16xf32>
    %c0_3 = arith.constant 0 : index
    %c0_4 = arith.constant 0 : index
    %2 = vector.load %arg5[%c0_3, %c0_4] : memref<4x16xf32, #tpu.memory_space<vmem>>, vector<4x16xf32>
    %c0_5 = arith.constant 0 : index
    %c0_6 = arith.constant 0 : index
    %3 = vector.load %arg6[%c0_5, %c0_6] : memref<16x16xf32, #tpu.memory_space<vmem>>, vector<16x16xf32>
    %cst = arith.constant dense<0.000000e+00> : vector<32x16xf32>
    %4 = tpu.matmul %0, %3, %cst {dimension_numbers = #tpu.dot_dimension_numbers<[1], [0], [0], [1], [0, 0, 1, 1], [], []>} : vector<32x16xf32>, vector<16x16xf32>, vector<32x16xf32> -> vector<32x16xf32>
    %c0_7 = arith.constant 0 : index
    %c0_8 = arith.constant 0 : index
    %5 = vector.load %arg7[%c0_7, %c0_8] : memref<1x16xf32, #tpu.memory_space<vmem>>, vector<1x16xf32>
    %6 = vector.broadcast %5 : vector<1x16xf32> to vector<32x16xf32>
    %7 = arith.addf %4, %6 : vector<32x16xf32>
    %cst_9 = arith.constant dense<0.000000e+00> : vector<32x4xf32>
    %8 = tpu.matmul %1, %2, %cst_9 {dimension_numbers = #tpu.dot_dimension_numbers<[1], [1], [0], [0], [0, 0, 1, 0], [], []>} : vector<32x16xf32>, vector<4x16xf32>, vector<32x4xf32> -> vector<32x4xf32>
    %cst_10 = arith.constant dense<0xFF800000> : vector<32xf32>
    %9 = vector.multi_reduction <maximumf>, %8, %cst_10 [1] : vector<32x4xf32> to vector<32xf32>
    %10 = vector.shape_cast %9 : vector<32xf32> to vector<32x1xf32>
    %11 = vector.broadcast %10 : vector<32x1xf32> to vector<32x4xf32>
    %12 = arith.subf %8, %11 : vector<32x4xf32>
    %13 = math.exp %12 : vector<32x4xf32>
    %cst_11 = arith.constant dense<0.000000e+00> : vector<32xf32>
    %14 = vector.multi_reduction <add>, %13, %cst_11 [1] : vector<32x4xf32> to vector<32xf32>
    %15 = vector.shape_cast %14 : vector<32xf32> to vector<32x1xf32>
    %16 = tpu.reciprocal %15 {approx = true} : vector<32x1xf32> -> vector<32x1xf32>
    %17 = vector.broadcast %16 : vector<32x1xf32> to vector<32x4xf32>
    %18 = arith.mulf %13, %17 : vector<32x4xf32>
    %cst_12 = arith.constant dense<0.000000e+00> : vector<32x16xf32>
    %19 = tpu.matmul %18, %2, %cst_12 {dimension_numbers = #tpu.dot_dimension_numbers<[1], [0], [0], [1], [0, 0, 1, 1], [], []>} : vector<32x4xf32>, vector<4x16xf32>, vector<32x16xf32> -> vector<32x16xf32>
    %20 = arith.addf %1, %19 : vector<32x16xf32>
    %cst_13 = arith.constant dense<0.000000e+00> : vector<32x4xf32>
    %21 = tpu.matmul %7, %2, %cst_13 {dimension_numbers = #tpu.dot_dimension_numbers<[1], [1], [0], [0], [0, 0, 1, 0], [], []>} : vector<32x16xf32>, vector<4x16xf32>, vector<32x4xf32> -> vector<32x4xf32>
    %cst_14 = arith.constant dense<0xFF800000> : vector<32xf32>
    %22 = vector.multi_reduction <maximumf>, %21, %cst_14 [1] : vector<32x4xf32> to vector<32xf32>
    %23 = vector.shape_cast %22 : vector<32xf32> to vector<32x1xf32>
    %24 = vector.broadcast %23 : vector<32x1xf32> to vector<32x4xf32>
    %25 = arith.subf %21, %24 : vector<32x4xf32>
    %26 = math.exp %25 : vector<32x4xf32>
    %cst_15 = arith.constant dense<0.000000e+00> : vector<32xf32>
    %27 = vector.multi_reduction <add>, %26, %cst_15 [1] : vector<32x4xf32> to vector<32xf32>
    %28 = vector.shape_cast %27 : vector<32xf32> to vector<32x1xf32>
    %29 = tpu.reciprocal %28 {approx = true} : vector<32x1xf32> -> vector<32x1xf32>
    %30 = vector.broadcast %29 : vector<32x1xf32> to vector<32x4xf32>
    %31 = arith.mulf %26, %30 : vector<32x4xf32>
    %cst_16 = arith.constant dense<0.000000e+00> : vector<32x16xf32>
    %32 = tpu.matmul %31, %2, %cst_16 {dimension_numbers = #tpu.dot_dimension_numbers<[1], [0], [0], [1], [0, 0, 1, 1], [], []>} : vector<32x4xf32>, vector<4x16xf32>, vector<32x16xf32> -> vector<32x16xf32>
    %33 = arith.addf %7, %32 : vector<32x16xf32>
    %cst_17 = arith.constant dense<0.000000e+00> : vector<32x4xf32>
    %34 = tpu.matmul %0, %2, %cst_17 {dimension_numbers = #tpu.dot_dimension_numbers<[1], [1], [0], [0], [0, 0, 1, 0], [], []>} : vector<32x16xf32>, vector<4x16xf32>, vector<32x4xf32> -> vector<32x4xf32>
    %cst_18 = arith.constant dense<0xFF800000> : vector<32xf32>
    %35 = vector.multi_reduction <maximumf>, %34, %cst_18 [1] : vector<32x4xf32> to vector<32xf32>
    %36 = vector.shape_cast %35 : vector<32xf32> to vector<32x1xf32>
    %37 = vector.broadcast %36 : vector<32x1xf32> to vector<32x4xf32>
    %38 = arith.subf %34, %37 : vector<32x4xf32>
    %39 = math.exp %38 : vector<32x4xf32>
    %cst_19 = arith.constant dense<0.000000e+00> : vector<32xf32>
    %40 = vector.multi_reduction <add>, %39, %cst_19 [1] : vector<32x4xf32> to vector<32xf32>
    %41 = vector.shape_cast %40 : vector<32xf32> to vector<32x1xf32>
    %42 = tpu.reciprocal %41 {approx = true} : vector<32x1xf32> -> vector<32x1xf32>
    %43 = vector.broadcast %42 : vector<32x1xf32> to vector<32x4xf32>
    %44 = arith.mulf %39, %43 : vector<32x4xf32>
    %cst_20 = arith.constant dense<0.000000e+00> : vector<32x16xf32>
    %45 = tpu.matmul %44, %2, %cst_20 {dimension_numbers = #tpu.dot_dimension_numbers<[1], [0], [0], [1], [0, 0, 1, 1], [], []>} : vector<32x4xf32>, vector<4x16xf32>, vector<32x16xf32> -> vector<32x16xf32>
    %46 = arith.addf %0, %45 : vector<32x16xf32>
    %c0_21 = arith.constant 0 : index
    %c0_22 = arith.constant 0 : index
    %47 = vector.load %arg3[%c0_21, %c0_22] : memref<32x1xf32, #tpu.memory_space<vmem>>, vector<32x1xf32>
    %c0_23 = arith.constant 0 : index
    %c0_24 = arith.constant 0 : index
    %48 = vector.load %arg4[%c0_23, %c0_24] : memref<32x1xf32, #tpu.memory_space<vmem>>, vector<32x1xf32>
    %49 = vector.broadcast %47 : vector<32x1xf32> to vector<32x16xf32>
    %50 = arith.mulf %49, %20 : vector<32x16xf32>
    %51 = vector.broadcast %48 : vector<32x1xf32> to vector<32x16xf32>
    %52 = arith.mulf %51, %33 : vector<32x16xf32>
    %53 = arith.addf %50, %52 : vector<32x16xf32>
    %cst_25 = arith.constant 1.000000e+00 : f32
    %54 = vector.broadcast %cst_25 : f32 to vector<32x1xf32>
    %55 = arith.subf %54, %47 : vector<32x1xf32>
    %56 = arith.subf %55, %48 : vector<32x1xf32>
    %57 = vector.broadcast %56 : vector<32x1xf32> to vector<32x16xf32>
    %58 = arith.mulf %57, %0 : vector<32x16xf32>
    %59 = arith.addf %53, %58 : vector<32x16xf32>
    %c0_26 = arith.constant 0 : index
    %c0_27 = arith.constant 0 : index
    %60 = vector.load %arg8[%c0_26, %c0_27] : memref<32x32xf32, #tpu.memory_space<vmem>>, vector<32x32xf32>
    %c0_28 = arith.constant 0 : index
    %c0_29 = arith.constant 0 : index
    %61 = vector.load %arg9[%c0_28, %c0_29] : memref<16x32xf32, #tpu.memory_space<vmem>>, vector<16x32xf32>
    %cst_30 = arith.constant dense<0.000000e+00> : vector<32x32xf32>
    %62 = tpu.matmul %59, %61, %cst_30 {dimension_numbers = #tpu.dot_dimension_numbers<[1], [0], [0], [1], [0, 0, 1, 1], [], []>} : vector<32x16xf32>, vector<16x32xf32>, vector<32x32xf32> -> vector<32x32xf32>
    %cst_31 = arith.constant dense<0.000000e+00> : vector<32x32xf32>
    %63 = tpu.matmul %46, %61, %cst_31 {dimension_numbers = #tpu.dot_dimension_numbers<[1], [0], [0], [1], [0, 0, 1, 1], [], []>} : vector<32x16xf32>, vector<16x32xf32>, vector<32x32xf32> -> vector<32x32xf32>
    %64 = tpu.concatenate %62, %63 in 1 : vector<32x32xf32>, vector<32x32xf32> -> vector<32x64xf32>
    %cst_32 = arith.constant dense<0.000000e+00> : vector<32x64xf32>
    %65 = tpu.matmul %60, %64, %cst_32 {dimension_numbers = #tpu.dot_dimension_numbers<[1], [0], [0], [1], [0, 0, 1, 1], [], []>} : vector<32x32xf32>, vector<32x64xf32>, vector<32x64xf32> -> vector<32x64xf32>
    %c0_33 = arith.constant 0 : index
    %c0_34 = arith.constant 0 : index
    %66 = vector.load %arg10[%c0_33, %c0_34] : memref<1x64xf32, #tpu.memory_space<vmem>>, vector<1x64xf32>
    %67 = vector.broadcast %66 : vector<1x64xf32> to vector<32x64xf32>
    %68 = arith.addf %65, %67 : vector<32x64xf32>
    %cst_35 = arith.constant 0.000000e+00 : f32
    %69 = vector.broadcast %cst_35 : f32 to vector<32x64xf32>
    %70 = arith.maximumf %68, %69 : vector<32x64xf32>
    %c0_36 = arith.constant 0 : index
    %c0_37 = arith.constant 0 : index
    %71 = vector.load %arg11[%c0_36, %c0_37] : memref<64x64xf32, #tpu.memory_space<vmem>>, vector<64x64xf32>
    %cst_38 = arith.constant dense<0.000000e+00> : vector<32x64xf32>
    %72 = tpu.matmul %70, %71, %cst_38 {dimension_numbers = #tpu.dot_dimension_numbers<[1], [0], [0], [1], [0, 0, 1, 1], [], []>} : vector<32x64xf32>, vector<64x64xf32>, vector<32x64xf32> -> vector<32x64xf32>
    %cst_39 = arith.constant dense<0.000000e+00> : vector<32x64xf32>
    %73 = tpu.matmul %60, %72, %cst_39 {dimension_numbers = #tpu.dot_dimension_numbers<[1], [0], [0], [1], [0, 0, 1, 1], [], []>} : vector<32x32xf32>, vector<32x64xf32>, vector<32x64xf32> -> vector<32x64xf32>
    %c0_40 = arith.constant 0 : index
    %c0_41 = arith.constant 0 : index
    %74 = vector.load %arg12[%c0_40, %c0_41] : memref<1x64xf32, #tpu.memory_space<vmem>>, vector<1x64xf32>
    %75 = vector.broadcast %74 : vector<1x64xf32> to vector<32x64xf32>
    %76 = arith.addf %73, %75 : vector<32x64xf32>
    %c0_42 = arith.constant 0 : index
    %c0_43 = arith.constant 0 : index
    %77 = vector.load %arg13[%c0_42, %c0_43] : memref<32x64xf32, #tpu.memory_space<vmem>>, vector<32x64xf32>
    tpu.vector_store %arg13[%c0_42, %c0_43], %76 {strides = array<i32>} : memref<32x64xf32, #tpu.memory_space<vmem>>, vector<32x64xf32>,
    return
  }
  func.func @transform_0(%arg0: i32) -> (i32, i32) {
    %c0_i32 = arith.constant 0 : i32
    %c0_i32_0 = arith.constant 0 : i32
    %c0_i32_1 = arith.constant 0 : i32
    return %c0_i32, %c0_i32_0 : i32, i32
  }
  func.func @transform_1(%arg0: i32) -> (i32, i32) {
    %c0_i32 = arith.constant 0 : i32
    %c0_i32_0 = arith.constant 0 : i32
    %c0_i32_1 = arith.constant 0 : i32
    return %c0_i32, %c0_i32_0 : i32, i32
  }
  func.func @transform_2(%arg0: i32) -> (i32, i32) {
    %c0_i32 = arith.constant 0 : i32
    %c0_i32_0 = arith.constant 0 : i32
    %c0_i32_1 = arith.constant 0 : i32
    return %c0_i32, %c0_i32_0 : i32, i32
  }
  func.func @transform_3(%arg0: i32) -> (i32, i32) {
    %c0_i32 = arith.constant 0 : i32
    %c0_i32_0 = arith.constant 0 : i32
    %c0_i32_1 = arith.constant 0 : i32
    return %c0_i32, %c0_i32_0 : i32, i32
  }
  func.func @transform_4(%arg0: i32) -> (i32, i32) {
    %c0_i32 = arith.constant 0 : i32
    %c0_i32_0 = arith.constant 0 : i32
    %c0_i32_1 = arith.constant 0 : i32
    return %c0_i32, %c0_i32_0 : i32, i32
  }
  func.func @transform_5(%arg0: i32) -> (i32, i32) {
    %c0_i32 = arith.constant 0 : i32
    %c0_i32_0 = arith.constant 0 : i32
    %c0_i32_1 = arith.constant 0 : i32
    return %c0_i32, %c0_i32_0 : i32, i32
  }
  func.func @transform_6(%arg0: i32) -> (i32, i32) {
    %c0_i32 = arith.constant 0 : i32
    %c0_i32_0 = arith.constant 0 : i32
    %c0_i32_1 = arith.constant 0 : i32
    return %c0_i32, %c0_i32_0 : i32, i32
  }
  func.func @transform_7(%arg0: i32) -> (i32, i32) {
    %c0_i32 = arith.constant 0 : i32
    %c0_i32_0 = arith.constant 0 : i32
    %c0_i32_1 = arith.constant 0 : i32
    return %c0_i32, %c0_i32_0 : i32, i32
  }
  func.func @transform_8(%arg0: i32) -> (i32, i32) {
    %c0_i32 = arith.constant 0 : i32
    %c0_i32_0 = arith.constant 0 : i32
    %c0_i32_1 = arith.constant 0 : i32
    return %c0_i32, %c0_i32_0 : i32, i32
  }
  func.func @transform_9(%arg0: i32) -> (i32, i32) {
    %c0_i32 = arith.constant 0 : i32
    %c0_i32_0 = arith.constant 0 : i32
    %c0_i32_1 = arith.constant 0 : i32
    return %c0_i32, %c0_i32_0 : i32, i32
  }
  func.func @transform_10(%arg0: i32) -> (i32, i32) {
    %c0_i32 = arith.constant 0 : i32
    %c0_i32_0 = arith.constant 0 : i32
    %c0_i32_1 = arith.constant 0 : i32
    return %c0_i32, %c0_i32_0 : i32, i32
  }
  func.func @transform_11(%arg0: i32) -> (i32, i32) {
    %c0_i32 = arith.constant 0 : i32
    %c0_i32_0 = arith.constant 0 : i32
    %c0_i32_1 = arith.constant 0 : i32
    return %c0_i32, %c0_i32_0 : i32, i32
  }
  func.func @transform_12(%arg0: i32) -> (i32, i32) {
    %c0_i32 = arith.constant 0 : i32
    %c0_i32_0 = arith.constant 0 : i32
    %c0_i32_1 = arith.constant 0 : i32
    return %c0_i32, %c0_i32_0 : i32, i32
  }
}

module attributes {stable_mosaic.version = 11 : i64} {
  func.func @_heads_kernel(%arg0: i32, %arg1: memref<8x32xf32, #tpu.memory_space<vmem>>, %arg2: memref<8x32xf32, #tpu.memory_space<vmem>>, %arg3: memref<64x8xf32, #tpu.memory_space<vmem>>, %arg4: memref<64x8xf32, #tpu.memory_space<vmem>>, %arg5: memref<4x32xf32, #tpu.memory_space<vmem>>, %arg6: memref<4x32xf32, #tpu.memory_space<vmem>>, %arg7: memref<64x64xf32, #tpu.memory_space<vmem>>, %arg8: memref<1x64xf32, #tpu.memory_space<vmem>>, %arg9: memref<64x7xf32, #tpu.memory_space<vmem>>, %arg10: memref<1x7xf32, #tpu.memory_space<vmem>>, %arg11: memref<64x7xf32, #tpu.memory_space<vmem>>) attributes {dimension_semantics = [#tpu.dimension_semantics<arbitrary>], iteration_bounds = array<i64: 1>, scalar_prefetch = 0 : i64, scratch_operands = 0 : i64, tpu.core_type = #tpu.core_type<tc>, window_params = [{pipeline_mode = #tpu.pipeline_mode<synchronous>, transform_indices = @transform_0, window_bounds = array<i64: 8, 32>}, {pipeline_mode = #tpu.pipeline_mode<synchronous>, transform_indices = @transform_1, window_bounds = array<i64: 8, 32>}, {pipeline_mode = #tpu.pipeline_mode<synchronous>, transform_indices = @transform_2, window_bounds = array<i64: 64, 8>}, {pipeline_mode = #tpu.pipeline_mode<synchronous>, transform_indices = @transform_3, window_bounds = array<i64: 64, 8>}, {pipeline_mode = #tpu.pipeline_mode<synchronous>, transform_indices = @transform_4, window_bounds = array<i64: 4, 32>}, {pipeline_mode = #tpu.pipeline_mode<synchronous>, transform_indices = @transform_5, window_bounds = array<i64: 4, 32>}, {pipeline_mode = #tpu.pipeline_mode<synchronous>, transform_indices = @transform_6, window_bounds = array<i64: 64, 64>}, {pipeline_mode = #tpu.pipeline_mode<synchronous>, transform_indices = @transform_7, window_bounds = array<i64: 1, 64>}, {pipeline_mode = #tpu.pipeline_mode<synchronous>, transform_indices = @transform_8, window_bounds = array<i64: 64, 7>}, {pipeline_mode = #tpu.pipeline_mode<synchronous>, transform_indices = @transform_9, window_bounds = array<i64: 1, 7>}, {pipeline_mode = #tpu.pipeline_mode<synchronous>, transform_indices = @transform_10, window_bounds = array<i64: 64, 7>}]} {
    %c0 = arith.constant 0 : index
    %c0_0 = arith.constant 0 : index
    %0 = vector.load %arg1[%c0, %c0_0] : memref<8x32xf32, #tpu.memory_space<vmem>>, vector<8x32xf32>
    %c0_1 = arith.constant 0 : index
    %c0_2 = arith.constant 0 : index
    %1 = vector.load %arg2[%c0_1, %c0_2] : memref<8x32xf32, #tpu.memory_space<vmem>>, vector<8x32xf32>
    %c0_3 = arith.constant 0 : index
    %c0_4 = arith.constant 0 : index
    %2 = vector.load %arg3[%c0_3, %c0_4] : memref<64x8xf32, #tpu.memory_space<vmem>>, vector<64x8xf32>
    %cst = arith.constant dense<0.000000e+00> : vector<64x32xf32>
    %3 = tpu.matmul %2, %0, %cst {dimension_numbers = #tpu.dot_dimension_numbers<[1], [0], [0], [1], [0, 0, 1, 1], [], []>} : vector<64x8xf32>, vector<8x32xf32>, vector<64x32xf32> -> vector<64x32xf32>
    %c0_5 = arith.constant 0 : index
    %c0_6 = arith.constant 0 : index
    %4 = vector.load %arg4[%c0_5, %c0_6] : memref<64x8xf32, #tpu.memory_space<vmem>>, vector<64x8xf32>
    %cst_7 = arith.constant dense<0.000000e+00> : vector<64x32xf32>
    %5 = tpu.matmul %4, %1, %cst_7 {dimension_numbers = #tpu.dot_dimension_numbers<[1], [0], [0], [1], [0, 0, 1, 1], [], []>} : vector<64x8xf32>, vector<8x32xf32>, vector<64x32xf32> -> vector<64x32xf32>
    %6 = arith.subf %3, %5 : vector<64x32xf32>
    %7 = arith.mulf %3, %5 : vector<64x32xf32>
    %8 = arith.addf %6, %7 : vector<64x32xf32>
    %c0_8 = arith.constant 0 : index
    %c0_9 = arith.constant 0 : index
    %9 = vector.load %arg5[%c0_8, %c0_9] : memref<4x32xf32, #tpu.memory_space<vmem>>, vector<4x32xf32>
    %cst_10 = arith.constant dense<0.000000e+00> : vector<64x4xf32>
    %10 = tpu.matmul %8, %9, %cst_10 {dimension_numbers = #tpu.dot_dimension_numbers<[1], [1], [0], [0], [0, 0, 1, 0], [], []>} : vector<64x32xf32>, vector<4x32xf32>, vector<64x4xf32> -> vector<64x4xf32>
    %cst_11 = arith.constant dense<0xFF800000> : vector<64xf32>
    %11 = vector.multi_reduction <maximumf>, %10, %cst_11 [1] : vector<64x4xf32> to vector<64xf32>
    %12 = vector.shape_cast %11 : vector<64xf32> to vector<64x1xf32>
    %13 = vector.broadcast %12 : vector<64x1xf32> to vector<64x4xf32>
    %14 = arith.subf %10, %13 : vector<64x4xf32>
    %15 = math.exp %14 : vector<64x4xf32>
    %cst_12 = arith.constant dense<0.000000e+00> : vector<64xf32>
    %16 = vector.multi_reduction <add>, %15, %cst_12 [1] : vector<64x4xf32> to vector<64xf32>
    %17 = vector.shape_cast %16 : vector<64xf32> to vector<64x1xf32>
    %18 = tpu.reciprocal %17 {approx = true} : vector<64x1xf32> -> vector<64x1xf32>
    %19 = vector.broadcast %18 : vector<64x1xf32> to vector<64x4xf32>
    %20 = arith.mulf %15, %19 : vector<64x4xf32>
    %cst_13 = arith.constant dense<0.000000e+00> : vector<64x32xf32>
    %21 = tpu.matmul %20, %9, %cst_13 {dimension_numbers = #tpu.dot_dimension_numbers<[1], [0], [0], [1], [0, 0, 1, 1], [], []>} : vector<64x4xf32>, vector<4x32xf32>, vector<64x32xf32> -> vector<64x32xf32>
    %22 = arith.addf %8, %21 : vector<64x32xf32>
    %c0_14 = arith.constant 0 : index
    %c0_15 = arith.constant 0 : index
    %23 = vector.load %arg6[%c0_14, %c0_15] : memref<4x32xf32, #tpu.memory_space<vmem>>, vector<4x32xf32>
    %cst_16 = arith.constant dense<0.000000e+00> : vector<64x4xf32>
    %24 = tpu.matmul %8, %23, %cst_16 {dimension_numbers = #tpu.dot_dimension_numbers<[1], [1], [0], [0], [0, 0, 1, 0], [], []>} : vector<64x32xf32>, vector<4x32xf32>, vector<64x4xf32> -> vector<64x4xf32>
    %cst_17 = arith.constant dense<0xFF800000> : vector<64xf32>
    %25 = vector.multi_reduction <maximumf>, %24, %cst_17 [1] : vector<64x4xf32> to vector<64xf32>
    %26 = vector.shape_cast %25 : vector<64xf32> to vector<64x1xf32>
    %27 = vector.broadcast %26 : vector<64x1xf32> to vector<64x4xf32>
    %28 = arith.subf %24, %27 : vector<64x4xf32>
    %29 = math.exp %28 : vector<64x4xf32>
    %cst_18 = arith.constant dense<0.000000e+00> : vector<64xf32>
    %30 = vector.multi_reduction <add>, %29, %cst_18 [1] : vector<64x4xf32> to vector<64xf32>
    %31 = vector.shape_cast %30 : vector<64xf32> to vector<64x1xf32>
    %32 = tpu.reciprocal %31 {approx = true} : vector<64x1xf32> -> vector<64x1xf32>
    %33 = vector.broadcast %32 : vector<64x1xf32> to vector<64x4xf32>
    %34 = arith.mulf %29, %33 : vector<64x4xf32>
    %cst_19 = arith.constant dense<0.000000e+00> : vector<64x32xf32>
    %35 = tpu.matmul %34, %23, %cst_19 {dimension_numbers = #tpu.dot_dimension_numbers<[1], [0], [0], [1], [0, 0, 1, 1], [], []>} : vector<64x4xf32>, vector<4x32xf32>, vector<64x32xf32> -> vector<64x32xf32>
    %36 = arith.addf %8, %35 : vector<64x32xf32>
    %37 = math.absf %36 : vector<64x32xf32>
    %38 = tpu.concatenate %22, %37 in 1 : vector<64x32xf32>, vector<64x32xf32> -> vector<64x64xf32>
    %c0_20 = arith.constant 0 : index
    %c0_21 = arith.constant 0 : index
    %39 = vector.load %arg7[%c0_20, %c0_21] : memref<64x64xf32, #tpu.memory_space<vmem>>, vector<64x64xf32>
    %cst_22 = arith.constant dense<0.000000e+00> : vector<64x64xf32>
    %40 = tpu.matmul %38, %39, %cst_22 {dimension_numbers = #tpu.dot_dimension_numbers<[1], [0], [0], [1], [0, 0, 1, 1], [], []>} : vector<64x64xf32>, vector<64x64xf32>, vector<64x64xf32> -> vector<64x64xf32>
    %c0_23 = arith.constant 0 : index
    %c0_24 = arith.constant 0 : index
    %41 = vector.load %arg8[%c0_23, %c0_24] : memref<1x64xf32, #tpu.memory_space<vmem>>, vector<1x64xf32>
    %42 = vector.broadcast %41 : vector<1x64xf32> to vector<64x64xf32>
    %43 = arith.addf %40, %42 : vector<64x64xf32>
    %cst_25 = arith.constant 0.000000e+00 : f32
    %44 = vector.broadcast %cst_25 : f32 to vector<64x64xf32>
    %45 = arith.maximumf %43, %44 : vector<64x64xf32>
    %c0_26 = arith.constant 0 : index
    %c0_27 = arith.constant 0 : index
    %46 = vector.load %arg9[%c0_26, %c0_27] : memref<64x7xf32, #tpu.memory_space<vmem>>, vector<64x7xf32>
    %cst_28 = arith.constant dense<0.000000e+00> : vector<64x7xf32>
    %47 = tpu.matmul %45, %46, %cst_28 {dimension_numbers = #tpu.dot_dimension_numbers<[1], [0], [0], [1], [0, 0, 1, 1], [], []>} : vector<64x64xf32>, vector<64x7xf32>, vector<64x7xf32> -> vector<64x7xf32>
    %c0_29 = arith.constant 0 : index
    %c0_30 = arith.constant 0 : index
    %48 = vector.load %arg10[%c0_29, %c0_30] : memref<1x7xf32, #tpu.memory_space<vmem>>, vector<1x7xf32>
    %49 = vector.broadcast %48 : vector<1x7xf32> to vector<64x7xf32>
    %50 = arith.addf %47, %49 : vector<64x7xf32>
    %c0_31 = arith.constant 0 : index
    %c0_32 = arith.constant 0 : index
    %51 = vector.load %arg11[%c0_31, %c0_32] : memref<64x7xf32, #tpu.memory_space<vmem>>, vector<64x7xf32>
    tpu.vector_store %arg11[%c0_31, %c0_32], %50 {strides = array<i32>} : memref<64x7xf32, #tpu.memory_space<vmem>>, vector<64x7xf32>,
    return
  }
  func.func @transform_0(%arg0: i32) -> (i32, i32) {
    %c0_i32 = arith.constant 0 : i32
    %c0_i32_0 = arith.constant 0 : i32
    %c0_i32_1 = arith.constant 0 : i32
    return %c0_i32, %c0_i32_0 : i32, i32
  }
  func.func @transform_1(%arg0: i32) -> (i32, i32) {
    %c0_i32 = arith.constant 0 : i32
    %c0_i32_0 = arith.constant 0 : i32
    %c0_i32_1 = arith.constant 0 : i32
    return %c0_i32, %c0_i32_0 : i32, i32
  }
  func.func @transform_2(%arg0: i32) -> (i32, i32) {
    %c0_i32 = arith.constant 0 : i32
    %c0_i32_0 = arith.constant 0 : i32
    %c0_i32_1 = arith.constant 0 : i32
    return %c0_i32, %c0_i32_0 : i32, i32
  }
  func.func @transform_3(%arg0: i32) -> (i32, i32) {
    %c0_i32 = arith.constant 0 : i32
    %c0_i32_0 = arith.constant 0 : i32
    %c0_i32_1 = arith.constant 0 : i32
    return %c0_i32, %c0_i32_0 : i32, i32
  }
  func.func @transform_4(%arg0: i32) -> (i32, i32) {
    %c0_i32 = arith.constant 0 : i32
    %c0_i32_0 = arith.constant 0 : i32
    %c0_i32_1 = arith.constant 0 : i32
    return %c0_i32, %c0_i32_0 : i32, i32
  }
  func.func @transform_5(%arg0: i32) -> (i32, i32) {
    %c0_i32 = arith.constant 0 : i32
    %c0_i32_0 = arith.constant 0 : i32
    %c0_i32_1 = arith.constant 0 : i32
    return %c0_i32, %c0_i32_0 : i32, i32
  }
  func.func @transform_6(%arg0: i32) -> (i32, i32) {
    %c0_i32 = arith.constant 0 : i32
    %c0_i32_0 = arith.constant 0 : i32
    %c0_i32_1 = arith.constant 0 : i32
    return %c0_i32, %c0_i32_0 : i32, i32
  }
  func.func @transform_7(%arg0: i32) -> (i32, i32) {
    %c0_i32 = arith.constant 0 : i32
    %c0_i32_0 = arith.constant 0 : i32
    %c0_i32_1 = arith.constant 0 : i32
    return %c0_i32, %c0_i32_0 : i32, i32
  }
  func.func @transform_8(%arg0: i32) -> (i32, i32) {
    %c0_i32 = arith.constant 0 : i32
    %c0_i32_0 = arith.constant 0 : i32
    %c0_i32_1 = arith.constant 0 : i32
    return %c0_i32, %c0_i32_0 : i32, i32
  }
  func.func @transform_9(%arg0: i32) -> (i32, i32) {
    %c0_i32 = arith.constant 0 : i32
    %c0_i32_0 = arith.constant 0 : i32
    %c0_i32_1 = arith.constant 0 : i32
    return %c0_i32, %c0_i32_0 : i32, i32
  }
  func.func @transform_10(%arg0: i32) -> (i32, i32) {
    %c0_i32 = arith.constant 0 : i32
    %c0_i32_0 = arith.constant 0 : i32
    %c0_i32_1 = arith.constant 0 : i32
    return %c0_i32, %c0_i32_0 : i32, i32
  }
}

</mosaic_0001>

<llo_original>
// kernel: div.90
$region0: #{div.90}
  %s0 = inlined_call_operand.vmem [shape: f32[64], index: 0, kind: input, shape index: {}]
  %s1 = inlined_call_operand.vmem [shape: f32[8,8], index: 1, kind: output, shape index: {}]
  $region1: #{div.90} parent=0
    #allocation0 [shape = 'u8[4096]{0}', space=vmem, size = 0x1000, scoped, tag = 'scoped mem for input reshape']
    %s3 = sshll.u32 1, 1
    %s4 = ssub.s32 %s3, 1
    %v5 = vld [vmem:[%s0] sm:%s4]
    %6 = vst [vmem:[#allocation0] sm:%s4] %v5
    %v7 = vld [vmem:[#allocation0] sm:$0x1]
    %vm8 = vcmask 64512
    %9 = vst.msk [vmem:[%s1] sm:$0x1] %vm8, %v7
    %v10 = vld [vmem:[#allocation0] sm:$0x1]
    %11 = vrot.lane.b32.xlu0 %v10, 120
    %v12 = vpop.permute.xlu0 %11
    %vm13 = vcmask 64512
    %s14 = scalar_lea.vmem %s1, 1
    %15 = vst.msk [vmem:[%s14] sm:$0x1] %vm13, %v12
    %v16 = vld [vmem:[#allocation0] sm:$0x1]
    %17 = vrot.lane.b32.xlu0 %v16, 112
    %v18 = vpop.permute.xlu0 %17
    %vm19 = vcmask 64512
    %s20 = scalar_lea.vmem %s1, 2
    %21 = vst.msk [vmem:[%s20] sm:$0x1] %vm19, %v18
    %v22 = vld [vmem:[#allocation0] sm:$0x1]
    %23 = vrot.lane.b32.xlu0 %v22, 104
    %v24 = vpop.permute.xlu0 %23
    %vm25 = vcmask 64512
    %s26 = scalar_lea.vmem %s1, 3
    %27 = vst.msk [vmem:[%s26] sm:$0x1] %vm25, %v24
    %v28 = vld [vmem:[#allocation0] sm:$0x1]
    %29 = vrot.lane.b32.xlu0 %v28, 96
    %v30 = vpop.permute.xlu0 %29
    %vm31 = vcmask 64512
    %s32 = scalar_lea.vmem %s1, 4
    %33 = vst.msk [vmem:[%s32] sm:$0x1] %vm31, %v30
    %v34 = vld [vmem:[#allocation0] sm:$0x1]
    %35 = vrot.lane.b32.xlu0 %v34, 88
    %v36 = vpop.permute.xlu0 %35
    %vm37 = vcmask 64512
    %s38 = scalar_lea.vmem %s1, 5
    %39 = vst.msk [vmem:[%s38] sm:$0x1] %vm37, %v36
    %v40 = vld [vmem:[#allocation0] sm:$0x1]
    %41 = vrot.lane.b32.xlu0 %v40, 80
    %v42 = vpop.permute.xlu0 %41
    %vm43 = vcmask 64512
    %s44 = scalar_lea.vmem %s1, 6
    %45 = vst.msk [vmem:[%s44] sm:$0x1] %vm43, %v42
    %v46 = vld [vmem:[#allocation0] sm:$0x1]
    %47 = vrot.lane.b32.xlu0 %v46, 72
    %v48 = vpop.permute.xlu0 %47
    %vm49 = vcmask 64512
    %s50 = scalar_lea.vmem %s1, 7
    %51 = vst.msk [vmem:[%s50] sm:$0x1] %vm49, %v48

// kernel: downstream_forward.2
$region0: #{downstream_forward.2}
  #allocation0 [shape = 'u32[]', space=smem, size = 0x4, offset = 0x4, fixed_abs, tag = 'smem constant byte address 0x4 - core index']
  #allocation1 [shape = 'u32[144,128]{1,0:T(1,128)}', space=vmem, size = 0x12000, scoped, tag = 'internal scratch']
  %s0 = inlined_call_operand.vmem [shape: f32[32,16], index: 0, kind: input, shape index: {}]
  %s1 = inlined_call_operand.vmem [shape: f32[32,16], index: 1, kind: input, shape index: {}]
  %s2 = inlined_call_operand.vmem [shape: f32[32,1], index: 2, kind: input, shape index: {}]
  %s3 = inlined_call_operand.vmem [shape: f32[32,1], index: 3, kind: input, shape index: {}]
  %s4 = inlined_call_operand.vmem [shape: f32[4,16], index: 4, kind: input, shape index: {}]
  %s5 = inlined_call_operand.vmem [shape: f32[16,16], index: 5, kind: input, shape index: {}]
  %s6 = inlined_call_operand.vmem [shape: f32[1,16], index: 6, kind: input, shape index: {}]
  %s7 = inlined_call_operand.vmem [shape: f32[32,32], index: 7, kind: input, shape index: {}]
  %s8 = inlined_call_operand.vmem [shape: f32[16,32], index: 8, kind: input, shape index: {}]
  %s9 = inlined_call_operand.vmem [shape: f32[1,64], index: 9, kind: input, shape index: {}]
  %s10 = inlined_call_operand.vmem [shape: f32[64,64], index: 10, kind: input, shape index: {}]
  %s11 = inlined_call_operand.vmem [shape: f32[1,64], index: 11, kind: input, shape index: {}]
  %s12 = inlined_call_operand.vmem [shape: f32[32,64], index: 12, kind: output, shape index: {}]
  %s13 = sld [smem:[#allocation0]]
  $region58: #{downstream_forward.2} parent=0
    _
  %s15 = ssub.s32 1, %s13
  %s16 = scalar_select 0, %s15, %s13
  // Predicated region
  $region2: #{downstream_forward.2} parent=0 // pred_check
    _
  $region3: #{downstream_forward.2} parent=0 // pred_check_branch
    %18 = sbr.rel (0) target = $region5
  $region4: #{downstream_forward.2} parent=0 // pred_region
    _
  $region5: #{downstream_forward.2} parent=0 // pred_fallthru
    _
  // Predicated region
  $region6: #{downstream_forward.2} parent=0 // pred_check
    _
  $region7: #{downstream_forward.2} parent=0 // pred_check_branch
    %20 = sbr.rel (0) target = $region9
  $region8: #{downstream_forward.2} parent=0 // pred_region
    _
  $region9: #{downstream_forward.2} parent=0 // pred_fallthru
    _
  // Predicated region
  $region10: #{downstream_forward.2} parent=0 // pred_check
    _
  $region11: #{downstream_forward.2} parent=0 // pred_check_branch
    %22 = sbr.rel (0) target = $region13
  $region12: #{downstream_forward.2} parent=0 // pred_region
    _
  $region13: #{downstream_forward.2} parent=0 // pred_fallthru
    _
  // Predicated region
  $region14: #{downstream_forward.2} parent=0 // pred_check
    _
  $region15: #{downstream_forward.2} parent=0 // pred_check_branch
    %24 = sbr.rel (0) target = $region17
  $region16: #{downstream_forward.2} parent=0 // pred_region
    _
  $region17: #{downstream_forward.2} parent=0 // pred_fallthru
    _
  // Predicated region
  $region18: #{downstream_forward.2} parent=0 // pred_check
    _
  $region19: #{downstream_forward.2} parent=0 // pred_check_branch
    %26 = sbr.rel (0) target = $region21
  $region20: #{downstream_forward.2} parent=0 // pred_region
    _
  $region21: #{downstream_forward.2} parent=0 // pred_fallthru
    _
  // Predicated region
  $region22: #{downstream_forward.2} parent=0 // pred_check
    _
  $region23: #{downstream_forward.2} parent=0 // pred_check_branch
    %28 = sbr.rel (0) target = $region25
  $region24: #{downstream_forward.2} parent=0 // pred_region
    _
  $region25: #{downstream_forward.2} parent=0 // pred_fallthru
    _
  // Predicated region
  $region26: #{downstream_forward.2} parent=0 // pred_check
    _
  $region27: #{downstream_forward.2} parent=0 // pred_check_branch
    %30 = sbr.rel (0) target = $region29
  $region28: #{downstream_forward.2} parent=0 // pred_region
    _
  $region29: #{downstream_forward.2} parent=0 // pred_fallthru
    _
  // Predicated region
  $region30: #{downstream_forward.2} parent=0 // pred_check
    _
  $region31: #{downstream_forward.2} parent=0 // pred_check_branch
    %32 = sbr.rel (0) target = $region33
  $region32: #{downstream_forward.2} parent=0 // pred_region
    _
  $region33: #{downstream_forward.2} parent=0 // pred_fallthru
    _
  // Predicated region
  $region34: #{downstream_forward.2} parent=0 // pred_check
    _
  $region35: #{downstream_forward.2} parent=0 // pred_check_branch
    %34 = sbr.rel (0) target = $region37
  $region36: #{downstream_forward.2} parent=0 // pred_region
    _
  $region37: #{downstream_forward.2} parent=0 // pred_fallthru
    _
  // Predicated region
  $region38: #{downstream_forward.2} parent=0 // pred_check
    _
  $region39: #{downstream_forward.2} parent=0 // pred_check_branch
    %36 = sbr.rel (0) target = $region41
  $region40: #{downstream_forward.2} parent=0 // pred_region
    _
  $region41: #{downstream_forward.2} parent=0 // pred_fallthru
    _
  // Predicated region
  $region42: #{downstream_forward.2} parent=0 // pred_check
    _
  $region43: #{downstream_forward.2} parent=0 // pred_check_branch
    %38 = sbr.rel (0) target = $region45
  $region44: #{downstream_forward.2} parent=0 // pred_region
    _
  $region45: #{downstream_forward.2} parent=0 // pred_fallthru
    _
  // Predicated region
  $region46: #{downstream_forward.2} parent=0 // pred_check
    _
  $region47: #{downstream_forward.2} parent=0 // pred_check_branch
    %40 = sbr.rel (0) target = $region49
  $region48: #{downstream_forward.2} parent=0 // pred_region
    _
  $region49: #{downstream_forward.2} parent=0 // pred_fallthru
    _
  %v41 = vld [vmem:[%s0] sm:$0xff]
  %v42 = vld [vmem:[%s0 + $0x8] sm:$0xff]
  %v43 = vld [vmem:[%s0 + $0x10] sm:$0xff]
  %v44 = vld [vmem:[%s0 + $0x18] sm:$0xff]
  %v45 = vld [vmem:[%s1] sm:$0xff]
  %v46 = vld [vmem:[%s1 + $0x8] sm:$0xff]
  %v47 = vld [vmem:[%s1 + $0x10] sm:$0xff]
  %v48 = vld [vmem:[%s1 + $0x18] sm:$0xff]
  %v49 = vld [vmem:[%s4] sm:$0xf]
  %v50 = vld [vmem:[%s5] sm:$0xff]
  %v51 = vld [vmem:[%s5 + $0x8] sm:$0xff]
  %v52 = vld [vmem:[%s6] sm:$0x1]
  %v54 = vlaneseq
  %v55 = vshrl.u32 %v54, 7
  %v56 = vsub.s32 0, %v55
  %v57 = vrot.slane %v52, %v56
  %vm59 = vcmask 130048
  %v61 = vsel %vm59, %v41, 0
  %v64 = vsel %vm59, %v42, 0
  %v67 = vsel %vm59, %v43, 0
  %v70 = vsel %vm59, %v44, 0
  %72 = vmatprep.subr.mxu0 0.0
  %73 = vmatpush1.msra.mxu0 0.0
  %74 = vmatprep.subr.mxu0 0.0
  %75 = vmatpush1.msra.mxu0 0.0
  %76 = vmatprep.subr.mxu0 0.0
  %77 = vmatpush1.msra.mxu0 0.0
  %78 = vmatprep.subr.mxu0 0.0
  %79 = vmatpush1.msra.mxu0 0.0
  %80 = vmatprep.subr.mxu0 0.0
  %81 = vmatpush1.msra.mxu0 0.0
  %82 = vmatprep.subr.mxu0 0.0
  %83 = vmatpush1.msra.mxu0 0.0
  %84 = vmatprep.subr.mxu0 0.0
  %85 = vmatpush1.msra.mxu0 0.0
  %86 = vmatprep.subr.mxu0 0.0
  %87 = vmatpush1.msra.mxu0 0.0
  %88 = vmatprep.subr.mxu0 0.0
  %89 = vmatpush1.msra.mxu0 0.0
  %90 = vmatprep.subr.mxu0 0.0
  %91 = vmatpush1.msra.mxu0 0.0
  %92 = vmatprep.subr.mxu0 0.0
  %93 = vmatpush1.msra.mxu0 0.0
  %94 = vmatprep.subr.mxu0 0.0
  %95 = vmatpush1.msra.mxu0 0.0
  %96 = vmatprep.subr.mxu0 0.0
  %97 = vmatpush1.msra.mxu0 0.0
  %98 = vmatprep.subr.mxu0 0.0
  %99 = vmatpush1.msra.mxu0 0.0
  %100 = vmatprep.subr.mxu0 0.0
  %101 = vmatpush1.msra.mxu0 %v51
  %102 = vmatprep.subr.mxu0 0.0
  %103 = vmatpush1.msra.mxu0 %v50
  %104 = vmatprep.subr.mxu0 0.0
  %105 = vmatpush2.msra.mxu0 0.0
  %106 = vmatprep.subr.mxu0 0.0
  %107 = vmatpush2.msra.mxu0 0.0
  %108 = vmatprep.subr.mxu0 0.0
  %109 = vmatpush2.msra.mxu0 0.0
  %110 = vmatprep.subr.mxu0 0.0
  %111 = vmatpush2.msra.mxu0 0.0
  %112 = vmatprep.subr.mxu0 0.0
  %113 = vmatpush2.msra.mxu0 0.0
  %114 = vmatprep.subr.mxu0 0.0
  %115 = vmatpush2.msra.mxu0 0.0
  %116 = vmatprep.subr.mxu0 0.0
  %117 = vmatpush2.msra.mxu0 0.0
  %118 = vmatprep.subr.mxu0 0.0
  %119 = vmatpush2.msra.mxu0 0.0
  %120 = vmatprep.subr.mxu0 0.0
  %121 = vmatpush2.msra.mxu0 0.0
  %122 = vmatprep.subr.mxu0 0.0
  %123 = vmatpush2.msra.mxu0 0.0
  %124 = vmatprep.subr.mxu0 0.0
  %125 = vmatpush2.msra.mxu0 0.0
  %126 = vmatprep.subr.mxu0 0.0
  %127 = vmatpush2.msra.mxu0 0.0
  %128 = vmatprep.subr.mxu0 0.0
  %129 = vmatpush2.msra.mxu0 0.0
  %130 = vmatprep.subr.mxu0 0.0
  %131 = vmatpush2.msra.mxu0 0.0
  %132 = vmatprep.subr.mxu0 0.0
  %133 = vmatpush2.msra.mxu0 0.0
  %134 = vmatprep.subr.mxu0 0.0
  %135 = vmatpush2.msra.mxu0 0.0
  %136 = vmatprep.mubr.f32.mxu0 0.0
  %137 = vmatmul.mubr.f32.gmra.mxu0 %v61
  %v138 = vpop.f32.mrf.mxu0
  %v139 = vadd.f32 %v57, %v138
  %v140 = vpop.f32.mrf.mxu0
  %141 = vmatprep.mubr.f32.mxu0 0.0
  %142 = vmatmul.mubr.f32.gmra.mxu0 %v64
  %v143 = vpop.f32.mrf.mxu0
  %v144 = vadd.f32 %v57, %v143
  %v145 = vpop.f32.mrf.mxu0
  %146 = vmatprep.mubr.f32.mxu0 0.0
  %147 = vmatmul.mubr.f32.gmra.mxu0 %v67
  %v148 = vpop.f32.mrf.mxu0
  %v149 = vadd.f32 %v57, %v148
  %v150 = vpop.f32.mrf.mxu0
  %151 = vmatprep.mubr.f32.mxu0 0.0
  %152 = vmatmul.mubr.f32.gmra.mxu0 %v70
  %v153 = vpop.f32.mrf.mxu0
  %v154 = vadd.f32 %v57, %v153
  %v155 = vpop.f32.mrf.mxu0
  %156 = vdwg.mxu0
  %v158 = vsel %vm59, %v45, 0
  %v161 = vsel %vm59, %v46, 0
  %v164 = vsel %vm59, %v47, 0
  %v167 = vsel %vm59, %v48, 0
  %v170 = vsel %vm59, %v49, 0
  %172 = vmatprep.subr.mxu0 0.0
  %173 = vmatpush1.xpose.msra.mxu0 0.0
  %174 = vmatprep.subr.mxu0 0.0
  %175 = vmatpush1.xpose.msra.mxu0 0.0
  %176 = vmatprep.subr.mxu0 0.0
  %177 = vmatpush1.xpose.msra.mxu0 0.0
  %178 = vmatprep.subr.mxu0 0.0
  %179 = vmatpush1.xpose.msra.mxu0 0.0
  %180 = vmatprep.subr.mxu0 0.0
  %181 = vmatpush1.xpose.msra.mxu0 0.0
  %182 = vmatprep.subr.mxu0 0.0
  %183 = vmatpush1.xpose.msra.mxu0 0.0
  %184 = vmatprep.subr.mxu0 0.0
  %185 = vmatpush1.xpose.msra.mxu0 0.0
  %186 = vmatprep.subr.mxu0 0.0
  %187 = vmatpush1.xpose.msra.mxu0 0.0
  %188 = vmatprep.subr.mxu0 0.0
  %189 = vmatpush1.xpose.msra.mxu0 0.0
  %190 = vmatprep.subr.mxu0 0.0
  %191 = vmatpush1.xpose.msra.mxu0 0.0
  %192 = vmatprep.subr.mxu0 0.0
  %193 = vmatpush1.xpose.msra.mxu0 0.0
  %194 = vmatprep.subr.mxu0 0.0
  %195 = vmatpush1.xpose.msra.mxu0 0.0
  %196 = vmatprep.subr.mxu0 0.0
  %197 = vmatpush1.xpose.msra.mxu0 0.0
  %198 = vmatprep.subr.mxu0 0.0
  %199 = vmatpush1.xpose.msra.mxu0 0.0
  %200 = vmatprep.subr.mxu0 0.0
  %201 = vmatpush1.xpose.msra.mxu0 0.0
  %202 = vmatprep.subr.mxu0 0.0
  %203 = vmatpush1.xpose.msra.mxu0 %v170
  %204 = vmatprep.subr.mxu0 0.0
  %205 = vmatpush2.xpose.msra.mxu0 0.0
  %206 = vmatprep.subr.mxu0 0.0
  %207 = vmatpush2.xpose.msra.mxu0 0.0
  %208 = vmatprep.subr.mxu0 0.0
  %209 = vmatpush2.xpose.msra.mxu0 0.0
  %210 = vmatprep.subr.mxu0 0.0
  %211 = vmatpush2.xpose.msra.mxu0 0.0
  %212 = vmatprep.subr.mxu0 0.0
  %213 = vmatpush2.xpose.msra.mxu0 0.0
  %214 = vmatprep.subr.mxu0 0.0
  %215 = vmatpush2.xpose.msra.mxu0 0.0
  %216 = vmatprep.subr.mxu0 0.0
  %217 = vmatpush2.xpose.msra.mxu0 0.0
  %218 = vmatprep.subr.mxu0 0.0
  %219 = vmatpush2.xpose.msra.mxu0 0.0
  %220 = vmatprep.subr.mxu0 0.0
  %221 = vmatpush2.xpose.msra.mxu0 0.0
  %222 = vmatprep.subr.mxu0 0.0
  %223 = vmatpush2.xpose.msra.mxu0 0.0
  %224 = vmatprep.subr.mxu0 0.0
  %225 = vmatpush2.xpose.msra.mxu0 0.0
  %226 = vmatprep.subr.mxu0 0.0
  %227 = vmatpush2.xpose.msra.mxu0 0.0
  %228 = vmatprep.subr.mxu0 0.0
  %229 = vmatpush2.xpose.msra.mxu0 0.0
  %230 = vmatprep.subr.mxu0 0.0
  %231 = vmatpush2.xpose.msra.mxu0 0.0
  %232 = vmatprep.subr.mxu0 0.0
  %233 = vmatpush2.xpose.msra.mxu0 0.0
  %234 = vmatprep.subr.mxu0 0.0
  %235 = vmatpush2.xpose.msra.mxu0 0.0
  %236 = vmatprep.mubr.f32.mxu0 0.0
  %237 = vmatmul.mubr.f32.gmra.mxu0 %v158
  %v238 = vpop.f32.mrf.mxu0
  %v239 = vadd.f32 0.0, %v238
  %v240 = vpop.f32.mrf.mxu0
  %241 = vmatprep.mubr.f32.mxu0 0.0
  %242 = vmatmul.mubr.f32.gmra.mxu0 %v161
  %v243 = vpop.f32.mrf.mxu0
  %v244 = vadd.f32 0.0, %v243
  %v245 = vpop.f32.mrf.mxu0
  %246 = vmatprep.mubr.f32.mxu0 0.0
  %247 = vmatmul.mubr.f32.gmra.mxu0 %v164
  %v248 = vpop.f32.mrf.mxu0
  %v249 = vadd.f32 0.0, %v248
  %v250 = vpop.f32.mrf.mxu0
  %251 = vmatprep.mubr.f32.mxu0 0.0
  %252 = vmatmul.mubr.f32.gmra.mxu0 %v167
  %v253 = vpop.f32.mrf.mxu0
  %v254 = vadd.f32 0.0, %v253
  %v255 = vpop.f32.mrf.mxu0
  %256 = vdwg.mxu0
  %vm257 = vcmask 31744
  %v258 = vsel %vm257, %v239, -inf
  %259 = vmax.xlane.f32.xlu0 %v258
  %v260 = vpop.xlane.xlu0 %259
  %v261 = vsel %vm257, %v244, -inf
  %262 = vmax.xlane.f32.xlu0 %v261
  %v263 = vpop.xlane.xlu0 %262
  %v264 = vsel %vm257, %v249, -inf
  %265 = vmax.xlane.f32.xlu0 %v264
  %v266 = vpop.xlane.xlu0 %265
  %v267 = vsel %vm257, %v254, -inf
  %268 = vmax.xlane.f32.xlu0 %v267
  %v269 = vpop.xlane.xlu0 %268
  %v270 = vsub.f32 %v239, %v260
  %v271 = vsub.f32 %v244, %v263
  %v272 = vsub.f32 %v249, %v266
  %v273 = vsub.f32 %v254, %v269
  %v274 = vmul.f32 %v270, 1.442695
  %v275 = vpow.pop %v274
  %v276 = vmul.f32 %v271, 1.442695
  %v277 = vpow.pop %v276
  %v278 = vmul.f32 %v272, 1.442695
  %v279 = vpow.pop %v278
  %v280 = vmul.f32 %v273, 1.442695
  %v281 = vpow.pop %v280
  %v282 = vsel %vm257, %v275, 0.0
  %283 = vadd.xlane.f32.xlu0 %v282
  %v284 = vpop.xlane.xlu0 %283
  %v285 = vsel %vm257, %v277, 0.0
  %286 = vadd.xlane.f32.xlu0 %v285
  %v287 = vpop.xlane.xlu0 %286
  %v288 = vsel %vm257, %v279, 0.0
  %289 = vadd.xlane.f32.xlu0 %v288
  %v290 = vpop.xlane.xlu0 %289
  %v291 = vsel %vm257, %v281, 0.0
  %292 = vadd.xlane.f32.xlu0 %v291
  %v293 = vpop.xlane.xlu0 %292
  %v294 = vrcp.pop %v284
  %v295 = vrcp.pop %v287
  %v296 = vrcp.pop %v290
  %v297 = vrcp.pop %v293
  %v298 = vmul.f32 %v275, %v294
  %v299 = vmul.f32 %v277, %v295
  %v300 = vmul.f32 %v279, %v296
  %v301 = vmul.f32 %v281, %v297
  %v303 = vsel %vm257, %v298, 0
  %v306 = vsel %vm257, %v299, 0
  %v309 = vsel %vm257, %v300, 0
  %v312 = vsel %vm257, %v301, 0
  %vm314 = vcmask 1043456
  %v315 = vsel %vm314, %v49, 0
  %317 = vmatprep.subr.mxu0 0.0
  %318 = vmatpush1.msra.mxu0 0.0
  %319 = vmatprep.subr.mxu0 0.0
  %320 = vmatpush1.msra.mxu0 0.0
  %321 = vmatprep.subr.mxu0 0.0
  %322 = vmatpush1.msra.mxu0 0.0
  %323 = vmatprep.subr.mxu0 0.0
  %324 = vmatpush1.msra.mxu0 0.0
  %325 = vmatprep.subr.mxu0 0.0
  %326 = vmatpush1.msra.mxu0 0.0
  %327 = vmatprep.subr.mxu0 0.0
  %328 = vmatpush1.msra.mxu0 0.0
  %329 = vmatprep.subr.mxu0 0.0
  %330 = vmatpush1.msra.mxu0 0.0
  %331 = vmatprep.subr.mxu0 0.0
  %332 = vmatpush1.msra.mxu0 0.0
  %333 = vmatprep.subr.mxu0 0.0
  %334 = vmatpush1.msra.mxu0 0.0
  %335 = vmatprep.subr.mxu0 0.0
  %336 = vmatpush1.msra.mxu0 0.0
  %337 = vmatprep.subr.mxu0 0.0
  %338 = vmatpush1.msra.mxu0 0.0
  %339 = vmatprep.subr.mxu0 0.0
  %340 = vmatpush1.msra.mxu0 0.0
  %341 = vmatprep.subr.mxu0 0.0
  %342 = vmatpush1.msra.mxu0 0.0
  %343 = vmatprep.subr.mxu0 0.0
  %344 = vmatpush1.msra.mxu0 0.0
  %345 = vmatprep.subr.mxu0 0.0
  %346 = vmatpush1.msra.mxu0 0.0
  %347 = vmatprep.subr.mxu0 0.0
  %348 = vmatpush1.msra.mxu0 %v315
  %349 = vmatprep.subr.mxu0 0.0
  %350 = vmatpush2.msra.mxu0 0.0
  %351 = vmatprep.subr.mxu0 0.0
  %352 = vmatpush2.msra.mxu0 0.0
  %353 = vmatprep.subr.mxu0 0.0
  %354 = vmatpush2.msra.mxu0 0.0
  %355 = vmatprep.subr.mxu0 0.0
  %356 = vmatpush2.msra.mxu0 0.0
  %357 = vmatprep.subr.mxu0 0.0
  %358 = vmatpush2.msra.mxu0 0.0
  %359 = vmatprep.subr.mxu0 0.0
  %360 = vmatpush2.msra.mxu0 0.0
  %361 = vmatprep.subr.mxu0 0.0
  %362 = vmatpush2.msra.mxu0 0.0
  %363 = vmatprep.subr.mxu0 0.0
  %364 = vmatpush2.msra.mxu0 0.0
  %365 = vmatprep.subr.mxu0 0.0
  %366 = vmatpush2.msra.mxu0 0.0
  %367 = vmatprep.subr.mxu0 0.0
  %368 = vmatpush2.msra.mxu0 0.0
  %369 = vmatprep.subr.mxu0 0.0
  %370 = vmatpush2.msra.mxu0 0.0
  %371 = vmatprep.subr.mxu0 0.0
  %372 = vmatpush2.msra.mxu0 0.0
  %373 = vmatprep.subr.mxu0 0.0
  %374 = vmatpush2.msra.mxu0 0.0
  %375 = vmatprep.subr.mxu0 0.0
  %376 = vmatpush2.msra.mxu0 0.0
  %377 = vmatprep.subr.mxu0 0.0
  %378 = vmatpush2.msra.mxu0 0.0
  %379 = vmatprep.subr.mxu0 0.0
  %380 = vmatpush2.msra.mxu0 0.0
  %381 = vmatprep.mubr.f32.mxu0 0.0
  %382 = vmatmul.mubr.f32.gmra.mxu0 %v303
  %v383 = vpop.f32.mrf.mxu0
  %v384 = vadd.f32 0.0, %v383
  %v385 = vpop.f32.mrf.mxu0
  %386 = vmatprep.mubr.f32.mxu0 0.0
  %387 = vmatmul.mubr.f32.gmra.mxu0 %v306
  %v388 = vpop.f32.mrf.mxu0
  %v389 = vadd.f32 0.0, %v388
  %v390 = vpop.f32.mrf.mxu0
  %391 = vmatprep.mubr.f32.mxu0 0.0
  %392 = vmatmul.mubr.f32.gmra.mxu0 %v309
  %v393 = vpop.f32.mrf.mxu0
  %v394 = vadd.f32 0.0, %v393
  %v395 = vpop.f32.mrf.mxu0
  %396 = vmatprep.mubr.f32.mxu0 0.0
  %397 = vmatmul.mubr.f32.gmra.mxu0 %v312
  %v398 = vpop.f32.mrf.mxu0
  %v399 = vadd.f32 0.0, %v398
  %v400 = vpop.f32.mrf.mxu0
  %401 = vdwg.mxu0
  %v402 = vadd.f32 %v45, %v384
  %v403 = vadd.f32 %v46, %v389
  %v404 = vadd.f32 %v47, %v394
  %v405 = vadd.f32 %v48, %v399
  %v407 = vsel %vm59, %v139, 0
  %v410 = vsel %vm59, %v144, 0
  %v413 = vsel %vm59, %v149, 0
  %v416 = vsel %vm59, %v154, 0
  %418 = vmatprep.subr.mxu0 0.0
  %419 = vmatpush1.xpose.msra.mxu0 0.0
  %420 = vmatprep.subr.mxu0 0.0
  %421 = vmatpush1.xpose.msra.mxu0 0.0
  %422 = vmatprep.subr.mxu0 0.0
  %423 = vmatpush1.xpose.msra.mxu0 0.0
  %424 = vmatprep.subr.mxu0 0.0
  %425 = vmatpush1.xpose.msra.mxu0 0.0
  %426 = vmatprep.subr.mxu0 0.0
  %427 = vmatpush1.xpose.msra.mxu0 0.0
  %428 = vmatprep.subr.mxu0 0.0
  %429 = vmatpush1.xpose.msra.mxu0 0.0
  %430 = vmatprep.subr.mxu0 0.0
  %431 = vmatpush1.xpose.msra.mxu0 0.0
  %432 = vmatprep.subr.mxu0 0.0
  %433 = vmatpush1.xpose.msra.mxu0 0.0
  %434 = vmatprep.subr.mxu0 0.0
  %435 = vmatpush1.xpose.msra.mxu0 0.0
  %436 = vmatprep.subr.mxu0 0.0
  %437 = vmatpush1.xpose.msra.mxu0 0.0
  %438 = vmatprep.subr.mxu0 0.0
  %439 = vmatpush1.xpose.msra.mxu0 0.0
  %440 = vmatprep.subr.mxu0 0.0
  %441 = vmatpush1.xpose.msra.mxu0 0.0
  %442 = vmatprep.subr.mxu0 0.0
  %443 = vmatpush1.xpose.msra.mxu0 0.0
  %444 = vmatprep.subr.mxu0 0.0
  %445 = vmatpush1.xpose.msra.mxu0 0.0
  %446 = vmatprep.subr.mxu0 0.0
  %447 = vmatpush1.xpose.msra.mxu0 0.0
  %448 = vmatprep.subr.mxu0 0.0
  %449 = vmatpush1.xpose.msra.mxu0 %v170
  %450 = vmatprep.subr.mxu0 0.0
  %451 = vmatpush2.xpose.msra.mxu0 0.0
  %452 = vmatprep.subr.mxu0 0.0
  %453 = vmatpush2.xpose.msra.mxu0 0.0
  %454 = vmatprep.subr.mxu0 0.0
  %455 = vmatpush2.xpose.msra.mxu0 0.0
  %456 = vmatprep.subr.mxu0 0.0
  %457 = vmatpush2.xpose.msra.mxu0 0.0
  %458 = vmatprep.subr.mxu0 0.0
  %459 = vmatpush2.xpose.msra.mxu0 0.0
  %460 = vmatprep.subr.mxu0 0.0
  %461 = vmatpush2.xpose.msra.mxu0 0.0
  %462 = vmatprep.subr.mxu0 0.0
  %463 = vmatpush2.xpose.msra.mxu0 0.0
  %464 = vmatprep.subr.mxu0 0.0
  %465 = vmatpush2.xpose.msra.mxu0 0.0
  %466 = vmatprep.subr.mxu0 0.0
  %467 = vmatpush2.xpose.msra.mxu0 0.0
  %468 = vmatprep.subr.mxu0 0.0
  %469 = vmatpush2.xpose.msra.mxu0 0.0
  %470 = vmatprep.subr.mxu0 0.0
  %471 = vmatpush2.xpose.msra.mxu0 0.0
  %472 = vmatprep.subr.mxu0 0.0
  %473 = vmatpush2.xpose.msra.mxu0 0.0
  %474 = vmatprep.subr.mxu0 0.0
  %475 = vmatpush2.xpose.msra.mxu0 0.0
  %476 = vmatprep.subr.mxu0 0.0
  %477 = vmatpush2.xpose.msra.mxu0 0.0
  %478 = vmatprep.subr.mxu0 0.0
  %479 = vmatpush2.xpose.msra.mxu0 0.0
  %480 = vmatprep.subr.mxu0 0.0
  %481 = vmatpush2.xpose.msra.mxu0 0.0
  %482 = vmatprep.mubr.f32.mxu0 0.0
  %483 = vmatmul.mubr.f32.gmra.mxu0 %v407
  %v484 = vpop.f32.mrf.mxu0
  %v485 = vadd.f32 0.0, %v484
  %v486 = vpop.f32.mrf.mxu0
  %487 = vmatprep.mubr.f32.mxu0 0.0
  %488 = vmatmul.mubr.f32.gmra.mxu0 %v410
  %v489 = vpop.f32.mrf.mxu0
  %v490 = vadd.f32 0.0, %v489
  %v491 = vpop.f32.mrf.mxu0
  %492 = vmatprep.mubr.f32.mxu0 0.0
  %493 = vmatmul.mubr.f32.gmra.mxu0 %v413
  %v494 = vpop.f32.mrf.mxu0
  %v495 = vadd.f32 0.0, %v494
  %v496 = vpop.f32.mrf.mxu0
  %497 = vmatprep.mubr.f32.mxu0 0.0
  %498 = vmatmul.mubr.f32.gmra.mxu0 %v416
  %v499 = vpop.f32.mrf.mxu0
  %v500 = vadd.f32 0.0, %v499
  %v501 = vpop.f32.mrf.mxu0
  %502 = vdwg.mxu0
  %v503 = vsel %vm257, %v485, -inf
  %504 = vmax.xlane.f32.xlu0 %v503
  %v505 = vpop.xlane.xlu0 %504
  %v506 = vsel %vm257, %v490, -inf
  %507 = vmax.xlane.f32.xlu0 %v506
  %v508 = vpop.xlane.xlu0 %507
  %v509 = vsel %vm257, %v495, -inf
  %510 = vmax.xlane.f32.xlu0 %v509
  %v511 = vpop.xlane.xlu0 %510
  %v512 = vsel %vm257, %v500, -inf
  %513 = vmax.xlane.f32.xlu0 %v512
  %v514 = vpop.xlane.xlu0 %513
  %v515 = vsub.f32 %v485, %v505
  %v516 = vsub.f32 %v490, %v508
  %v517 = vsub.f32 %v495, %v511
  %v518 = vsub.f32 %v500, %v514
  %v519 = vmul.f32 %v515, 1.442695
  %v520 = vpow.pop %v519
  %v521 = vmul.f32 %v516, 1.442695
  %v522 = vpow.pop %v521
  %v523 = vmul.f32 %v517, 1.442695
  %v524 = vpow.pop %v523
  %v525 = vmul.f32 %v518, 1.442695
  %v526 = vpow.pop %v525
  %v527 = vsel %vm257, %v520, 0.0
  %528 = vadd.xlane.f32.xlu0 %v527
  %v529 = vpop.xlane.xlu0 %528
  %v530 = vsel %vm257, %v522, 0.0
  %531 = vadd.xlane.f32.xlu0 %v530
  %v532 = vpop.xlane.xlu0 %531
  %v533 = vsel %vm257, %v524, 0.0
  %534 = vadd.xlane.f32.xlu0 %v533
  %v535 = vpop.xlane.xlu0 %534
  %v536 = vsel %vm257, %v526, 0.0
  %537 = vadd.xlane.f32.xlu0 %v536
  %v538 = vpop.xlane.xlu0 %537
  %v539 = vrcp.pop %v529
  %v540 = vrcp.pop %v532
  %v541 = vrcp.pop %v535
  %v542 = vrcp.pop %v538
  %v543 = vmul.f32 %v520, %v539
  %v544 = vmul.f32 %v522, %v540
  %v545 = vmul.f32 %v524, %v541
  %v546 = vmul.f32 %v526, %v542
  %v548 = vsel %vm257, %v543, 0
  %v551 = vsel %vm257, %v544, 0
  %v554 = vsel %vm257, %v545, 0
  %v557 = vsel %vm257, %v546, 0
  %559 = vmatprep.subr.mxu0 0.0
  %560 = vmatpush1.msra.mxu0 0.0
  %561 = vmatprep.subr.mxu0 0.0
  %562 = vmatpush1.msra.mxu0 0.0
  %563 = vmatprep.subr.mxu0 0.0
  %564 = vmatpush1.msra.mxu0 0.0
  %565 = vmatprep.subr.mxu0 0.0
  %566 = vmatpush1.msra.mxu0 0.0
  %567 = vmatprep.subr.mxu0 0.0
  %568 = vmatpush1.msra.mxu0 0.0
  %569 = vmatprep.subr.mxu0 0.0
  %570 = vmatpush1.msra.mxu0 0.0
  %571 = vmatprep.subr.mxu0 0.0
  %572 = vmatpush1.msra.mxu0 0.0
  %573 = vmatprep.subr.mxu0 0.0
  %574 = vmatpush1.msra.mxu0 0.0
  %575 = vmatprep.subr.mxu0 0.0
  %576 = vmatpush1.msra.mxu0 0.0
  %577 = vmatprep.subr.mxu0 0.0
  %578 = vmatpush1.msra.mxu0 0.0
  %579 = vmatprep.subr.mxu0 0.0
  %580 = vmatpush1.msra.mxu0 0.0
  %581 = vmatprep.subr.mxu0 0.0
  %582 = vmatpush1.msra.mxu0 0.0
  %583 = vmatprep.subr.mxu0 0.0
  %584 = vmatpush1.msra.mxu0 0.0
  %585 = vmatprep.subr.mxu0 0.0
  %586 = vmatpush1.msra.mxu0 0.0
  %587 = vmatprep.subr.mxu0 0.0
  %588 = vmatpush1.msra.mxu0 0.0
  %589 = vmatprep.subr.mxu0 0.0
  %590 = vmatpush1.msra.mxu0 %v315
  %591 = vmatprep.subr.mxu0 0.0
  %592 = vmatpush2.msra.mxu0 0.0
  %593 = vmatprep.subr.mxu0 0.0
  %594 = vmatpush2.msra.mxu0 0.0
  %595 = vmatprep.subr.mxu0 0.0
  %596 = vmatpush2.msra.mxu0 0.0
  %597 = vmatprep.subr.mxu0 0.0
  %598 = vmatpush2.msra.mxu0 0.0
  %599 = vmatprep.subr.mxu0 0.0
  %600 = vmatpush2.msra.mxu0 0.0
  %601 = vmatprep.subr.mxu0 0.0
  %602 = vmatpush2.msra.mxu0 0.0
  %603 = vmatprep.subr.mxu0 0.0
  %604 = vmatpush2.msra.mxu0 0.0
  %605 = vmatprep.subr.mxu0 0.0
  %606 = vmatpush2.msra.mxu0 0.0
  %607 = vmatprep.subr.mxu0 0.0
  %608 = vmatpush2.msra.mxu0 0.0
  %609 = vmatprep.subr.mxu0 0.0
  %610 = vmatpush2.msra.mxu0 0.0
  %611 = vmatprep.subr.mxu0 0.0
  %612 = vmatpush2.msra.mxu0 0.0
  %613 = vmatprep.subr.mxu0 0.0
  %614 = vmatpush2.msra.mxu0 0.0
  %615 = vmatprep.subr.mxu0 0.0
  %616 = vmatpush2.msra.mxu0 0.0
  %617 = vmatprep.subr.mxu0 0.0
  %618 = vmatpush2.msra.mxu0 0.0
  %619 = vmatprep.subr.mxu0 0.0
  %620 = vmatpush2.msra.mxu0 0.0
  %621 = vmatprep.subr.mxu0 0.0
  %622 = vmatpush2.msra.mxu0 0.0
  %623 = vmatprep.mubr.f32.mxu0 0.0
  %624 = vmatmul.mubr.f32.gmra.mxu0 %v548
  %v625 = vpop.f32.mrf.mxu0
  %v626 = vadd.f32 0.0, %v625
  %v627 = vpop.f32.mrf.mxu0
  %628 = vmatprep.mubr.f32.mxu0 0.0
  %629 = vmatmul.mubr.f32.gmra.mxu0 %v551
  %v630 = vpop.f32.mrf.mxu0
  %v631 = vadd.f32 0.0, %v630
  %v632 = vpop.f32.mrf.mxu0
  %633 = vmatprep.mubr.f32.mxu0 0.0
  %634 = vmatmul.mubr.f32.gmra.mxu0 %v554
  %v635 = vpop.f32.mrf.mxu0
  %v636 = vadd.f32 0.0, %v635
  %v637 = vpop.f32.mrf.mxu0
  %638 = vmatprep.mubr.f32.mxu0 0.0
  %639 = vmatmul.mubr.f32.gmra.mxu0 %v557
  %v640 = vpop.f32.mrf.mxu0
  %v641 = vadd.f32 0.0, %v640
  %v642 = vpop.f32.mrf.mxu0
  %643 = vdwg.mxu0
  %v644 = vadd.f32 %v139, %v626
  %v645 = vadd.f32 %v144, %v631
  %v646 = vadd.f32 %v149, %v636
  %v647 = vadd.f32 %v154, %v641
  %648 = vmatprep.subr.mxu0 0.0
  %649 = vmatpush1.xpose.msra.mxu0 0.0
  %650 = vmatprep.subr.mxu0 0.0
  %651 = vmatpush1.xpose.msra.mxu0 0.0
  %652 = vmatprep.subr.mxu0 0.0
  %653 = vmatpush1.xpose.msra.mxu0 0.0
  %654 = vmatprep.subr.mxu0 0.0
  %655 = vmatpush1.xpose.msra.mxu0 0.0
  %656 = vmatprep.subr.mxu0 0.0
  %657 = vmatpush1.xpose.msra.mxu0 0.0
  %658 = vmatprep.subr.mxu0 0.0
  %659 = vmatpush1.xpose.msra.mxu0 0.0
  %660 = vmatprep.subr.mxu0 0.0
  %661 = vmatpush1.xpose.msra.mxu0 0.0
  %662 = vmatprep.subr.mxu0 0.0
  %663 = vmatpush1.xpose.msra.mxu0 0.0
  %664 = vmatprep.subr.mxu0 0.0
  %665 = vmatpush1.xpose.msra.mxu0 0.0
  %666 = vmatprep.subr.mxu0 0.0
  %667 = vmatpush1.xpose.msra.mxu0 0.0
  %668 = vmatprep.subr.mxu0 0.0
  %669 = vmatpush1.xpose.msra.mxu0 0.0
  %670 = vmatprep.subr.mxu0 0.0
  %671 = vmatpush1.xpose.msra.mxu0 0.0
  %672 = vmatprep.subr.mxu0 0.0
  %673 = vmatpush1.xpose.msra.mxu0 0.0
  %674 = vmatprep.subr.mxu0 0.0
  %675 = vmatpush1.xpose.msra.mxu0 0.0
  %676 = vmatprep.subr.mxu0 0.0
  %677 = vmatpush1.xpose.msra.mxu0 0.0
  %678 = vmatprep.subr.mxu0 0.0
  %679 = vmatpush1.xpose.msra.mxu0 %v170
  %680 = vmatprep.subr.mxu0 0.0
  %681 = vmatpush2.xpose.msra.mxu0 0.0
  %682 = vmatprep.subr.mxu0 0.0
  %683 = vmatpush2.xpose.msra.mxu0 0.0
  %684 = vmatprep.subr.mxu0 0.0
  %685 = vmatpush2.xpose.msra.mxu0 0.0
  %686 = vmatprep.subr.mxu0 0.0
  %687 = vmatpush2.xpose.msra.mxu0 0.0
  %688 = vmatprep.subr.mxu0 0.0
  %689 = vmatpush2.xpose.msra.mxu0 0.0
  %690 = vmatprep.subr.mxu0 0.0
  %691 = vmatpush2.xpose.msra.mxu0 0.0
  %692 = vmatprep.subr.mxu0 0.0
  %693 = vmatpush2.xpose.msra.mxu0 0.0
  %694 = vmatprep.subr.mxu0 0.0
  %695 = vmatpush2.xpose.msra.mxu0 0.0
  %696 = vmatprep.subr.mxu0 0.0
  %697 = vmatpush2.xpose.msra.mxu0 0.0
  %698 = vmatprep.subr.mxu0 0.0
  %699 = vmatpush2.xpose.msra.mxu0 0.0
  %700 = vmatprep.subr.mxu0 0.0
  %701 = vmatpush2.xpose.msra.mxu0 0.0
  %702 = vmatprep.subr.mxu0 0.0
  %703 = vmatpush2.xpose.msra.mxu0 0.0
  %704 = vmatprep.subr.mxu0 0.0
  %705 = vmatpush2.xpose.msra.mxu0 0.0
  %706 = vmatprep.subr.mxu0 0.0
  %707 = vmatpush2.xpose.msra.mxu0 0.0
  %708 = vmatprep.subr.mxu0 0.0
  %709 = vmatpush2.xpose.msra.mxu0 0.0
  %710 = vmatprep.subr.mxu0 0.0
  %711 = vmatpush2.xpose.msra.mxu0 0.0
  %712 = vmatprep.mubr.f32.mxu0 0.0
  %713 = vmatmul.mubr.f32.gmra.mxu0 %v61
  %v714 = vpop.f32.mrf.mxu0
  %v715 = vadd.f32 0.0, %v714
  %v716 = vpop.f32.mrf.mxu0
  %717 = vmatprep.mubr.f32.mxu0 0.0
  %718 = vmatmul.mubr.f32.gmra.mxu0 %v64
  %v719 = vpop.f32.mrf.mxu0
  %v720 = vadd.f32 0.0, %v719
  %v721 = vpop.f32.mrf.mxu0
  %722 = vmatprep.mubr.f32.mxu0 0.0
  %723 = vmatmul.mubr.f32.gmra.mxu0 %v67
  %v724 = vpop.f32.mrf.mxu0
  %v725 = vadd.f32 0.0, %v724
  %v726 = vpop.f32.mrf.mxu0
  %727 = vmatprep.mubr.f32.mxu0 0.0
  %728 = vmatmul.mubr.f32.gmra.mxu0 %v70
  %v729 = vpop.f32.mrf.mxu0
  %v730 = vadd.f32 0.0, %v729
  %v731 = vpop.f32.mrf.mxu0
  %732 = vdwg.mxu0
  %v733 = vsel %vm257, %v715, -inf
  %734 = vmax.xlane.f32.xlu0 %v733
  %v735 = vpop.xlane.xlu0 %734
  %v736 = vsel %vm257, %v720, -inf
  %737 = vmax.xlane.f32.xlu0 %v736
  %v738 = vpop.xlane.xlu0 %737
  %v739 = vsel %vm257, %v725, -inf
  %740 = vmax.xlane.f32.xlu0 %v739
  %v741 = vpop.xlane.xlu0 %740
  %v742 = vsel %vm257, %v730, -inf
  %743 = vmax.xlane.f32.xlu0 %v742
  %v744 = vpop.xlane.xlu0 %743
  %v745 = vsub.f32 %v715, %v735
  %v746 = vsub.f32 %v720, %v738
  %v747 = vsub.f32 %v725, %v741
  %v748 = vsub.f32 %v730, %v744
  %v749 = vmul.f32 %v745, 1.442695
  %v750 = vpow.pop %v749
  %v751 = vmul.f32 %v746, 1.442695
  %v752 = vpow.pop %v751
  %v753 = vmul.f32 %v747, 1.442695
  %v754 = vpow.pop %v753
  %v755 = vmul.f32 %v748, 1.442695
  %v756 = vpow.pop %v755
  %v757 = vsel %vm257, %v750, 0.0
  %758 = vadd.xlane.f32.xlu0 %v757
  %v759 = vpop.xlane.xlu0 %758
  %v760 = vsel %vm257, %v752, 0.0
  %761 = vadd.xlane.f32.xlu0 %v760
  %v762 = vpop.xlane.xlu0 %761
  %v763 = vsel %vm257, %v754, 0.0
  %764 = vadd.xlane.f32.xlu0 %v763
  %v765 = vpop.xlane.xlu0 %764
  %v766 = vsel %vm257, %v756, 0.0
  %767 = vadd.xlane.f32.xlu0 %v766
  %v768 = vpop.xlane.xlu0 %767
  %v769 = vrcp.pop %v759
  %v770 = vrcp.pop %v762
  %v771 = vrcp.pop %v765
  %v772 = vrcp.pop %v768
  %v773 = vmul.f32 %v750, %v769
  %v774 = vmul.f32 %v752, %v770
  %v775 = vmul.f32 %v754, %v771
  %v776 = vmul.f32 %v756, %v772
  %v778 = vsel %vm257, %v773, 0
  %v781 = vsel %vm257, %v774, 0
  %v784 = vsel %vm257, %v775, 0
  %v787 = vsel %vm257, %v776, 0
  %789 = vmatprep.subr.mxu0 0.0
  %790 = vmatpush1.msra.mxu0 0.0
  %791 = vmatprep.subr.mxu0 0.0
  %792 = vmatpush1.msra.mxu0 0.0
  %793 = vmatprep.subr.mxu0 0.0
  %794 = vmatpush1.msra.mxu0 0.0
  %795 = vmatprep.subr.mxu0 0.0
  %796 = vmatpush1.msra.mxu0 0.0
  %797 = vmatprep.subr.mxu0 0.0
  %798 = vmatpush1.msra.mxu0 0.0
  %799 = vmatprep.subr.mxu0 0.0
  %800 = vmatpush1.msra.mxu0 0.0
  %801 = vmatprep.subr.mxu0 0.0
  %802 = vmatpush1.msra.mxu0 0.0
  %803 = vmatprep.subr.mxu0 0.0
  %804 = vmatpush1.msra.mxu0 0.0
  %805 = vmatprep.subr.mxu0 0.0
  %806 = vmatpush1.msra.mxu0 0.0
  %807 = vmatprep.subr.mxu0 0.0
  %808 = vmatpush1.msra.mxu0 0.0
  %809 = vmatprep.subr.mxu0 0.0
  %810 = vmatpush1.msra.mxu0 0.0
  %811 = vmatprep.subr.mxu0 0.0
  %812 = vmatpush1.msra.mxu0 0.0
  %813 = vmatprep.subr.mxu0 0.0
  %814 = vmatpush1.msra.mxu0 0.0
  %815 = vmatprep.subr.mxu0 0.0
  %816 = vmatpush1.msra.mxu0 0.0
  %817 = vmatprep.subr.mxu0 0.0
  %818 = vmatpush1.msra.mxu0 0.0
  %819 = vmatprep.subr.mxu0 0.0
  %820 = vmatpush1.msra.mxu0 %v315
  %821 = vmatprep.subr.mxu0 0.0
  %822 = vmatpush2.msra.mxu0 0.0
  %823 = vmatprep.subr.mxu0 0.0
  %824 = vmatpush2.msra.mxu0 0.0
  %825 = vmatprep.subr.mxu0 0.0
  %826 = vmatpush2.msra.mxu0 0.0
  %827 = vmatprep.subr.mxu0 0.0
  %828 = vmatpush2.msra.mxu0 0.0
  %829 = vmatprep.subr.mxu0 0.0
  %830 = vmatpush2.msra.mxu0 0.0
  %831 = vmatprep.subr.mxu0 0.0
  %832 = vmatpush2.msra.mxu0 0.0
  %833 = vmatprep.subr.mxu0 0.0
  %834 = vmatpush2.msra.mxu0 0.0
  %835 = vmatprep.subr.mxu0 0.0
  %836 = vmatpush2.msra.mxu0 0.0
  %837 = vmatprep.subr.mxu0 0.0
  %838 = vmatpush2.msra.mxu0 0.0
  %839 = vmatprep.subr.mxu0 0.0
  %840 = vmatpush2.msra.mxu0 0.0
  %841 = vmatprep.subr.mxu0 0.0
  %842 = vmatpush2.msra.mxu0 0.0
  %843 = vmatprep.subr.mxu0 0.0
  %844 = vmatpush2.msra.mxu0 0.0
  %845 = vmatprep.subr.mxu0 0.0
  %846 = vmatpush2.msra.mxu0 0.0
  %847 = vmatprep.subr.mxu0 0.0
  %848 = vmatpush2.msra.mxu0 0.0
  %849 = vmatprep.subr.mxu0 0.0
  %850 = vmatpush2.msra.mxu0 0.0
  %851 = vmatprep.subr.mxu0 0.0
  %852 = vmatpush2.msra.mxu0 0.0
  %853 = vmatprep.mubr.f32.mxu0 0.0
  %854 = vmatmul.mubr.f32.gmra.mxu0 %v778
  %v855 = vpop.f32.mrf.mxu0
  %v856 = vadd.f32 0.0, %v855
  %v857 = vpop.f32.mrf.mxu0
  %858 = vmatprep.mubr.f32.mxu0 0.0
  %859 = vmatmul.mubr.f32.gmra.mxu0 %v781
  %v860 = vpop.f32.mrf.mxu0
  %v861 = vadd.f32 0.0, %v860
  %v862 = vpop.f32.mrf.mxu0
  %863 = vmatprep.mubr.f32.mxu0 0.0
  %864 = vmatmul.mubr.f32.gmra.mxu0 %v784
  %v865 = vpop.f32.mrf.mxu0
  %v866 = vadd.f32 0.0, %v865
  %v867 = vpop.f32.mrf.mxu0
  %868 = vmatprep.mubr.f32.mxu0 0.0
  %869 = vmatmul.mubr.f32.gmra.mxu0 %v787
  %v870 = vpop.f32.mrf.mxu0
  %v871 = vadd.f32 0.0, %v870
  %v872 = vpop.f32.mrf.mxu0
  %873 = vdwg.mxu0
  %v874 = vadd.f32 %v41, %v856
  %v875 = vadd.f32 %v42, %v861
  %v876 = vadd.f32 %v43, %v866
  %v877 = vadd.f32 %v44, %v871
  %v878 = vld [vmem:[%s2] sm:$0xff]
  %v879 = vld [vmem:[%s2 + $0x8] sm:$0xff]
  %v880 = vld [vmem:[%s2 + $0x10] sm:$0xff]
  %v881 = vld [vmem:[%s2 + $0x18] sm:$0xff]
  %v882 = vld [vmem:[%s3] sm:$0xff]
  %v883 = vld [vmem:[%s3 + $0x8] sm:$0xff]
  %v884 = vld [vmem:[%s3 + $0x10] sm:$0xff]
  %v885 = vld [vmem:[%s3 + $0x18] sm:$0xff]
  %887 = vset.pattern.permute.xlu0 0
  %888 = vperm.xlu0 %887, %v878
  %v889 = vpop.permute.xlu0 %888
  %892 = vset.pattern.permute.xlu0 0
  %893 = vperm.xlu0 %892, %v879
  %v894 = vpop.permute.xlu0 %893
  %897 = vset.pattern.permute.xlu0 0
  %898 = vperm.xlu0 %897, %v880
  %v899 = vpop.permute.xlu0 %898
  %902 = vset.pattern.permute.xlu0 0
  %903 = vperm.xlu0 %902, %v881
  %v904 = vpop.permute.xlu0 %903
  %v906 = vmul.f32 %v889, %v402
  %v907 = vmul.f32 %v894, %v403
  %v908 = vmul.f32 %v899, %v404
  %v909 = vmul.f32 %v904, %v405
  %911 = vset.pattern.permute.xlu0 0
  %912 = vperm.xlu0 %911, %v882
  %v913 = vpop.permute.xlu0 %912
  %916 = vset.pattern.permute.xlu0 0
  %917 = vperm.xlu0 %916, %v883
  %v918 = vpop.permute.xlu0 %917
  %921 = vset.pattern.permute.xlu0 0
  %922 = vperm.xlu0 %921, %v884
  %v923 = vpop.permute.xlu0 %922
  %926 = vset.pattern.permute.xlu0 0
  %927 = vperm.xlu0 %926, %v885
  %v928 = vpop.permute.xlu0 %927
  %v930 = vmul.f32 %v913, %v644
  %v931 = vmul.f32 %v918, %v645
  %v932 = vmul.f32 %v923, %v646
  %v933 = vmul.f32 %v928, %v647
  %v934 = vadd.f32 %v906, %v930
  %v935 = vadd.f32 %v907, %v931
  %v936 = vadd.f32 %v908, %v932
  %v937 = vadd.f32 %v909, %v933
  %v938 = vsub.f32 1.0, %v878
  %v939 = vsub.f32 1.0, %v879
  %v940 = vsub.f32 1.0, %v880
  %v941 = vsub.f32 1.0, %v881
  %v942 = vsub.f32 %v938, %v882
  %v943 = vsub.f32 %v939, %v883
  %v944 = vsub.f32 %v940, %v884
  %v945 = vsub.f32 %v941, %v885
  %947 = vset.pattern.permute.xlu0 0
  %948 = vperm.xlu0 %947, %v942
  %v949 = vpop.permute.xlu0 %948
  %952 = vset.pattern.permute.xlu0 0
  %953 = vperm.xlu0 %952, %v943
  %v954 = vpop.permute.xlu0 %953
  %957 = vset.pattern.permute.xlu0 0
  %958 = vperm.xlu0 %957, %v944
  %v959 = vpop.permute.xlu0 %958
  %962 = vset.pattern.permute.xlu0 0
  %963 = vperm.xlu0 %962, %v945
  %v964 = vpop.permute.xlu0 %963
  %v966 = vmul.f32 %v949, %v41
  %v967 = vmul.f32 %v954, %v42
  %v968 = vmul.f32 %v959, %v43
  %v969 = vmul.f32 %v964, %v44
  %v970 = vadd.f32 %v934, %v966
  %v971 = vadd.f32 %v935, %v967
  %v972 = vadd.f32 %v936, %v968
  %v973 = vadd.f32 %v937, %v969
  %v974 = vld [vmem:[%s7] sm:$0xff]
  %v975 = vld [vmem:[%s7 + $0x8] sm:$0xff]
  %v976 = vld [vmem:[%s7 + $0x10] sm:$0xff]
  %v977 = vld [vmem:[%s7 + $0x18] sm:$0xff]
  %v978 = vld [vmem:[%s8] sm:$0xff]
  %v979 = vld [vmem:[%s8 + $0x8] sm:$0xff]
  %v981 = vsel %vm59, %v970, 0
  %v984 = vsel %vm59, %v971, 0
  %v987 = vsel %vm59, %v972, 0
  %v990 = vsel %vm59, %v973, 0
  %992 = vmatprep.subr.mxu0 0.0
  %993 = vmatpush1.msra.mxu0 0.0
  %994 = vmatprep.subr.mxu0 0.0
  %995 = vmatpush1.msra.mxu0 0.0
  %996 = vmatprep.subr.mxu0 0.0
  %997 = vmatpush1.msra.mxu0 0.0
  %998 = vmatprep.subr.mxu0 0.0
  %999 = vmatpush1.msra.mxu0 0.0
  %1000 = vmatprep.subr.mxu0 0.0
  %1001 = vmatpush1.msra.mxu0 0.0
  %1002 = vmatprep.subr.mxu0 0.0
  %1003 = vmatpush1.msra.mxu0 0.0
  %1004 = vmatprep.subr.mxu0 0.0
  %1005 = vmatpush1.msra.mxu0 0.0
  %1006 = vmatprep.subr.mxu0 0.0
  %1007 = vmatpush1.msra.mxu0 0.0
  %1008 = vmatprep.subr.mxu0 0.0
  %1009 = vmatpush1.msra.mxu0 0.0
  %1010 = vmatprep.subr.mxu0 0.0
  %1011 = vmatpush1.msra.mxu0 0.0
  %1012 = vmatprep.subr.mxu0 0.0
  %1013 = vmatpush1.msra.mxu0 0.0
  %1014 = vmatprep.subr.mxu0 0.0
  %1015 = vmatpush1.msra.mxu0 0.0
  %1016 = vmatprep.subr.mxu0 0.0
  %1017 = vmatpush1.msra.mxu0 0.0
  %1018 = vmatprep.subr.mxu0 0.0
  %1019 = vmatpush1.msra.mxu0 0.0
  %1020 = vmatprep.subr.mxu0 0.0
  %1021 = vmatpush1.msra.mxu0 %v979
  %1022 = vmatprep.subr.mxu0 0.0
  %1023 = vmatpush1.msra.mxu0 %v978
  %1024 = vmatprep.subr.mxu0 0.0
  %1025 = vmatpush2.msra.mxu0 0.0
  %1026 = vmatprep.subr.mxu0 0.0
  %1027 = vmatpush2.msra.mxu0 0.0
  %1028 = vmatprep.subr.mxu0 0.0
  %1029 = vmatpush2.msra.mxu0 0.0
  %1030 = vmatprep.subr.mxu0 0.0
  %1031 = vmatpush2.msra.mxu0 0.0
  %1032 = vmatprep.subr.mxu0 0.0
  %1033 = vmatpush2.msra.mxu0 0.0
  %1034 = vmatprep.subr.mxu0 0.0
  %1035 = vmatpush2.msra.mxu0 0.0
  %1036 = vmatprep.subr.mxu0 0.0
  %1037 = vmatpush2.msra.mxu0 0.0
  %1038 = vmatprep.subr.mxu0 0.0
  %1039 = vmatpush2.msra.mxu0 0.0
  %1040 = vmatprep.subr.mxu0 0.0
  %1041 = vmatpush2.msra.mxu0 0.0
  %1042 = vmatprep.subr.mxu0 0.0
  %1043 = vmatpush2.msra.mxu0 0.0
  %1044 = vmatprep.subr.mxu0 0.0
  %1045 = vmatpush2.msra.mxu0 0.0
  %1046 = vmatprep.subr.mxu0 0.0
  %1047 = vmatpush2.msra.mxu0 0.0
  %1048 = vmatprep.subr.mxu0 0.0
  %1049 = vmatpush2.msra.mxu0 0.0
  %1050 = vmatprep.subr.mxu0 0.0
  %1051 = vmatpush2.msra.mxu0 0.0
  %1052 = vmatprep.subr.mxu0 0.0
  %1053 = vmatpush2.msra.mxu0 0.0
  %1054 = vmatprep.subr.mxu0 0.0
  %1055 = vmatpush2.msra.mxu0 0.0
  %1056 = vmatprep.mubr.f32.mxu0 0.0
  %1057 = vmatmul.mubr.f32.gmra.mxu0 %v981
  %v1058 = vpop.f32.mrf.mxu0
  %v1059 = vadd.f32 0.0, %v1058
  %v1060 = vpop.f32.mrf.mxu0
  %1061 = vmatprep.mubr.f32.mxu0 0.0
  %1062 = vmatmul.mubr.f32.gmra.mxu0 %v984
  %v1063 = vpop.f32.mrf.mxu0
  %v1064 = vadd.f32 0.0, %v1063
  %v1065 = vpop.f32.mrf.mxu0
  %1066 = vmatprep.mubr.f32.mxu0 0.0
  %1067 = vmatmul.mubr.f32.gmra.mxu0 %v987
  %v1068 = vpop.f32.mrf.mxu0
  %v1069 = vadd.f32 0.0, %v1068
  %v1070 = vpop.f32.mrf.mxu0
  %1071 = vmatprep.mubr.f32.mxu0 0.0
  %1072 = vmatmul.mubr.f32.gmra.mxu0 %v990
  %v1073 = vpop.f32.mrf.mxu0
  %v1074 = vadd.f32 0.0, %v1073
  %v1075 = vpop.f32.mrf.mxu0
  %1076 = vdwg.mxu0
  %v1078 = vsel %vm59, %v874, 0
  %v1081 = vsel %vm59, %v875, 0
  %v1084 = vsel %vm59, %v876, 0
  %v1087 = vsel %vm59, %v877, 0
  %1089 = vmatprep.subr.mxu0 0.0
  %1090 = vmatpush1.msra.mxu0 0.0
  %1091 = vmatprep.subr.mxu0 0.0
  %1092 = vmatpush1.msra.mxu0 0.0
  %1093 = vmatprep.subr.mxu0 0.0
  %1094 = vmatpush1.msra.mxu0 0.0
  %1095 = vmatprep.subr.mxu0 0.0
  %1096 = vmatpush1.msra.mxu0 0.0
  %1097 = vmatprep.subr.mxu0 0.0
  %1098 = vmatpush1.msra.mxu0 0.0
  %1099 = vmatprep.subr.mxu0 0.0
  %1100 = vmatpush1.msra.mxu0 0.0
  %1101 = vmatprep.subr.mxu0 0.0
  %1102 = vmatpush1.msra.mxu0 0.0
  %1103 = vmatprep.subr.mxu0 0.0
  %1104 = vmatpush1.msra.mxu0 0.0
  %1105 = vmatprep.subr.mxu0 0.0
  %1106 = vmatpush1.msra.mxu0 0.0
  %1107 = vmatprep.subr.mxu0 0.0
  %1108 = vmatpush1.msra.mxu0 0.0
  %1109 = vmatprep.subr.mxu0 0.0
  %1110 = vmatpush1.msra.mxu0 0.0
  %1111 = vmatprep.subr.mxu0 0.0
  %1112 = vmatpush1.msra.mxu0 0.0
  %1113 = vmatprep.subr.mxu0 0.0
  %1114 = vmatpush1.msra.mxu0 0.0
  %1115 = vmatprep.subr.mxu0 0.0
  %1116 = vmatpush1.msra.mxu0 0.0
  %1117 = vmatprep.subr.mxu0 0.0
  %1118 = vmatpush1.msra.mxu0 %v979
  %1119 = vmatprep.subr.mxu0 0.0
  %1120 = vmatpush1.msra.mxu0 %v978
  %1121 = vmatprep.subr.mxu0 0.0
  %1122 = vmatpush2.msra.mxu0 0.0
  %1123 = vmatprep.subr.mxu0 0.0
  %1124 = vmatpush2.msra.mxu0 0.0
  %1125 = vmatprep.subr.mxu0 0.0
  %1126 = vmatpush2.msra.mxu0 0.0
  %1127 = vmatprep.subr.mxu0 0.0
  %1128 = vmatpush2.msra.mxu0 0.0
  %1129 = vmatprep.subr.mxu0 0.0
  %1130 = vmatpush2.msra.mxu0 0.0
  %1131 = vmatprep.subr.mxu0 0.0
  %1132 = vmatpush2.msra.mxu0 0.0
  %1133 = vmatprep.subr.mxu0 0.0
  %1134 = vmatpush2.msra.mxu0 0.0
  %1135 = vmatprep.subr.mxu0 0.0
  %1136 = vmatpush2.msra.mxu0 0.0
  %1137 = vmatprep.subr.mxu0 0.0
  %1138 = vmatpush2.msra.mxu0 0.0
  %1139 = vmatprep.subr.mxu0 0.0
  %1140 = vmatpush2.msra.mxu0 0.0
  %1141 = vmatprep.subr.mxu0 0.0
  %1142 = vmatpush2.msra.mxu0 0.0
  %1143 = vmatprep.subr.mxu0 0.0
  %1144 = vmatpush2.msra.mxu0 0.0
  %1145 = vmatprep.subr.mxu0 0.0
  %1146 = vmatpush2.msra.mxu0 0.0
  %1147 = vmatprep.subr.mxu0 0.0
  %1148 = vmatpush2.msra.mxu0 0.0
  %1149 = vmatprep.subr.mxu0 0.0
  %1150 = vmatpush2.msra.mxu0 0.0
  %1151 = vmatprep.subr.mxu0 0.0
  %1152 = vmatpush2.msra.mxu0 0.0
  %1153 = vmatprep.mubr.f32.mxu0 0.0
  %1154 = vmatmul.mubr.f32.gmra.mxu0 %v1078
  %v1155 = vpop.f32.mrf.mxu0
  %v1156 = vadd.f32 0.0, %v1155
  %v1157 = vpop.f32.mrf.mxu0
  %1158 = vmatprep.mubr.f32.mxu0 0.0
  %1159 = vmatmul.mubr.f32.gmra.mxu0 %v1081
  %v1160 = vpop.f32.mrf.mxu0
  %v1161 = vadd.f32 0.0, %v1160
  %v1162 = vpop.f32.mrf.mxu0
  %1163 = vmatprep.mubr.f32.mxu0 0.0
  %1164 = vmatmul.mubr.f32.gmra.mxu0 %v1084
  %v1165 = vpop.f32.mrf.mxu0
  %v1166 = vadd.f32 0.0, %v1165
  %v1167 = vpop.f32.mrf.mxu0
  %1168 = vmatprep.mubr.f32.mxu0 0.0
  %1169 = vmatmul.mubr.f32.gmra.mxu0 %v1087
  %v1170 = vpop.f32.mrf.mxu0
  %v1171 = vadd.f32 0.0, %v1170
  %v1172 = vpop.f32.mrf.mxu0
  %1173 = vdwg.mxu0
  %1178 = vrot.lane.b32.xlu0 %v1156, 32
  %v1179 = vpop.permute.xlu0 %1178
  %1180 = vrot.lane.b32.xlu0 %v1161, 32
  %v1181 = vpop.permute.xlu0 %1180
  %1182 = vrot.lane.b32.xlu0 %v1166, 32
  %v1183 = vpop.permute.xlu0 %1182
  %1184 = vrot.lane.b32.xlu0 %v1171, 32
  %v1185 = vpop.permute.xlu0 %1184
  %vm1190 = vcmask 261120
  %v1191 = vsel %vm1190, %v1059, %v1179
  %v1192 = vsel %vm1190, %v1064, %v1181
  %v1193 = vsel %vm1190, %v1069, %v1183
  %v1194 = vsel %vm1190, %v1074, %v1185
  %v1195 = vld [vmem:[%s9] sm:$0x1]
  %v1197 = vlaneseq
  %v1198 = vshrl.u32 %v1197, 7
  %v1199 = vsub.s32 0, %v1198
  %v1200 = vrot.slane %v1195, %v1199
  %v1203 = vsel %vm1190, %v974, 0
  %v1206 = vsel %vm1190, %v975, 0
  %v1209 = vsel %vm1190, %v976, 0
  %v1212 = vsel %vm1190, %v977, 0
  %1214 = vmatprep.subr.mxu0 0.0
  %1215 = vmatpush1.msra.mxu0 0.0
  %1216 = vmatprep.subr.mxu0 0.0
  %1217 = vmatpush1.msra.mxu0 0.0
  %1218 = vmatprep.subr.mxu0 0.0
  %1219 = vmatpush1.msra.mxu0 0.0
  %1220 = vmatprep.subr.mxu0 0.0
  %1221 = vmatpush1.msra.mxu0 0.0
  %1222 = vmatprep.subr.mxu0 0.0
  %1223 = vmatpush1.msra.mxu0 0.0
  %1224 = vmatprep.subr.mxu0 0.0
  %1225 = vmatpush1.msra.mxu0 0.0
  %1226 = vmatprep.subr.mxu0 0.0
  %1227 = vmatpush1.msra.mxu0 0.0
  %1228 = vmatprep.subr.mxu0 0.0
  %1229 = vmatpush1.msra.mxu0 0.0
  %1230 = vmatprep.subr.mxu0 0.0
  %1231 = vmatpush1.msra.mxu0 0.0
  %1232 = vmatprep.subr.mxu0 0.0
  %1233 = vmatpush1.msra.mxu0 0.0
  %1234 = vmatprep.subr.mxu0 0.0
  %1235 = vmatpush1.msra.mxu0 0.0
  %1236 = vmatprep.subr.mxu0 0.0
  %1237 = vmatpush1.msra.mxu0 0.0
  %1238 = vmatprep.subr.mxu0 0.0
  %1239 = vmatpush1.msra.mxu0 %v1194
  %1240 = vmatprep.subr.mxu0 0.0
  %1241 = vmatpush1.msra.mxu0 %v1193
  %1242 = vmatprep.subr.mxu0 0.0
  %1243 = vmatpush1.msra.mxu0 %v1192
  %1244 = vmatprep.subr.mxu0 0.0
  %1245 = vmatpush1.msra.mxu0 %v1191
  %1246 = vmatprep.subr.mxu0 0.0
  %1247 = vmatpush2.msra.mxu0 0.0
  %1248 = vmatprep.subr.mxu0 0.0
  %1249 = vmatpush2.msra.mxu0 0.0
  %1250 = vmatprep.subr.mxu0 0.0
  %1251 = vmatpush2.msra.mxu0 0.0
  %1252 = vmatprep.subr.mxu0 0.0
  %1253 = vmatpush2.msra.mxu0 0.0
  %1254 = vmatprep.subr.mxu0 0.0
  %1255 = vmatpush2.msra.mxu0 0.0
  %1256 = vmatprep.subr.mxu0 0.0
  %1257 = vmatpush2.msra.mxu0 0.0
  %1258 = vmatprep.subr.mxu0 0.0
  %1259 = vmatpush2.msra.mxu0 0.0
  %1260 = vmatprep.subr.mxu0 0.0
  %1261 = vmatpush2.msra.mxu0 0.0
  %1262 = vmatprep.subr.mxu0 0.0
  %1263 = vmatpush2.msra.mxu0 0.0
  %1264 = vmatprep.subr.mxu0 0.0
  %1265 = vmatpush2.msra.mxu0 0.0
  %1266 = vmatprep.subr.mxu0 0.0
  %1267 = vmatpush2.msra.mxu0 0.0
  %1268 = vmatprep.subr.mxu0 0.0
  %1269 = vmatpush2.msra.mxu0 0.0
  %1270 = vmatprep.subr.mxu0 0.0
  %1271 = vmatpush2.msra.mxu0 0.0
  %1272 = vmatprep.subr.mxu0 0.0
  %1273 = vmatpush2.msra.mxu0 0.0
  %1274 = vmatprep.subr.mxu0 0.0
  %1275 = vmatpush2.msra.mxu0 0.0
  %1276 = vmatprep.subr.mxu0 0.0
  %1277 = vmatpush2.msra.mxu0 0.0
  %1278 = vmatprep.mubr.f32.mxu0 0.0
  %1279 = vmatmul.mubr.f32.gmra.mxu0 %v1203
  %v1280 = vpop.f32.mrf.mxu0
  %v1281 = vadd.f32 %v1200, %v1280
  %v1282 = vpop.f32.mrf.mxu0
  %1283 = vmatprep.mubr.f32.mxu0 0.0
  %1284 = vmatmul.mubr.f32.gmra.mxu0 %v1206
  %v1285 = vpop.f32.mrf.mxu0
  %v1286 = vadd.f32 %v1200, %v1285
  %v1287 = vpop.f32.mrf.mxu0
  %1288 = vmatprep.mubr.f32.mxu0 0.0
  %1289 = vmatmul.mubr.f32.gmra.mxu0 %v1209
  %v1290 = vpop.f32.mrf.mxu0
  %v1291 = vadd.f32 %v1200, %v1290
  %v1292 = vpop.f32.mrf.mxu0
  %1293 = vmatprep.mubr.f32.mxu0 0.0
  %1294 = vmatmul.mubr.f32.gmra.mxu0 %v1212
  %v1295 = vpop.f32.mrf.mxu0
  %v1296 = vadd.f32 %v1200, %v1295
  %v1297 = vpop.f32.mrf.mxu0
  %1298 = vdwg.mxu0
  %v1299 = vmax.f32 %v1281, 0.0
  %v1300 = vmax.f32 %v1286, 0.0
  %v1301 = vmax.f32 %v1291, 0.0
  %v1302 = vmax.f32 %v1296, 0.0
  %v1303 = vld [vmem:[%s10] sm:$0xff]
  %v1304 = vld [vmem:[%s10 + $0x8] sm:$0xff]
  %v1305 = vld [vmem:[%s10 + $0x10] sm:$0xff]
  %v1306 = vld [vmem:[%s10 + $0x18] sm:$0xff]
  %v1307 = vld [vmem:[%s10 + $0x20] sm:$0xff]
  %v1308 = vld [vmem:[%s10 + $0x28] sm:$0xff]
  %v1309 = vld [vmem:[%s10 + $0x30] sm:$0xff]
  %v1310 = vld [vmem:[%s10 + $0x38] sm:$0xff]
  %vm1311 = vcmask 523264
  %v1313 = vsel %vm1311, %v1299, 0
  %v1316 = vsel %vm1311, %v1300, 0
  %v1319 = vsel %vm1311, %v1301, 0
  %v1322 = vsel %vm1311, %v1302, 0
  %1324 = vmatprep.subr.mxu0 0.0
  %1325 = vmatpush1.msra.mxu0 0.0
  %1326 = vmatprep.subr.mxu0 0.0
  %1327 = vmatpush1.msra.mxu0 0.0
  %1328 = vmatprep.subr.mxu0 0.0
  %1329 = vmatpush1.msra.mxu0 0.0
  %1330 = vmatprep.subr.mxu0 0.0
  %1331 = vmatpush1.msra.mxu0 0.0
  %1332 = vmatprep.subr.mxu0 0.0
  %1333 = vmatpush1.msra.mxu0 0.0
  %1334 = vmatprep.subr.mxu0 0.0
  %1335 = vmatpush1.msra.mxu0 0.0
  %1336 = vmatprep.subr.mxu0 0.0
  %1337 = vmatpush1.msra.mxu0 0.0
  %1338 = vmatprep.subr.mxu0 0.0
  %1339 = vmatpush1.msra.mxu0 0.0
  %1340 = vmatprep.subr.mxu0 0.0
  %1341 = vmatpush1.msra.mxu0 %v1310
  %1342 = vmatprep.subr.mxu0 0.0
  %1343 = vmatpush1.msra.mxu0 %v1309
  %1344 = vmatprep.subr.mxu0 0.0
  %1345 = vmatpush1.msra.mxu0 %v1308
  %1346 = vmatprep.subr.mxu0 0.0
  %1347 = vmatpush1.msra.mxu0 %v1307
  %1348 = vmatprep.subr.mxu0 0.0
  %1349 = vmatpush1.msra.mxu0 %v1306
  %1350 = vmatprep.subr.mxu0 0.0
  %1351 = vmatpush1.msra.mxu0 %v1305
  %1352 = vmatprep.subr.mxu0 0.0
  %1353 = vmatpush1.msra.mxu0 %v1304
  %1354 = vmatprep.subr.mxu0 0.0
  %1355 = vmatpush1.msra.mxu0 %v1303
  %1356 = vmatprep.subr.mxu0 0.0
  %1357 = vmatpush2.msra.mxu0 0.0
  %1358 = vmatprep.subr.mxu0 0.0
  %1359 = vmatpush2.msra.mxu0 0.0
  %1360 = vmatprep.subr.mxu0 0.0
  %1361 = vmatpush2.msra.mxu0 0.0
  %1362 = vmatprep.subr.mxu0 0.0
  %1363 = vmatpush2.msra.mxu0 0.0
  %1364 = vmatprep.subr.mxu0 0.0
  %1365 = vmatpush2.msra.mxu0 0.0
  %1366 = vmatprep.subr.mxu0 0.0
  %1367 = vmatpush2.msra.mxu0 0.0
  %1368 = vmatprep.subr.mxu0 0.0
  %1369 = vmatpush2.msra.mxu0 0.0
  %1370 = vmatprep.subr.mxu0 0.0
  %1371 = vmatpush2.msra.mxu0 0.0
  %1372 = vmatprep.subr.mxu0 0.0
  %1373 = vmatpush2.msra.mxu0 0.0
  %1374 = vmatprep.subr.mxu0 0.0
  %1375 = vmatpush2.msra.mxu0 0.0
  %1376 = vmatprep.subr.mxu0 0.0
  %1377 = vmatpush2.msra.mxu0 0.0
  %1378 = vmatprep.subr.mxu0 0.0
  %1379 = vmatpush2.msra.mxu0 0.0
  %1380 = vmatprep.subr.mxu0 0.0
  %1381 = vmatpush2.msra.mxu0 0.0
  %1382 = vmatprep.subr.mxu0 0.0
  %1383 = vmatpush2.msra.mxu0 0.0
  %1384 = vmatprep.subr.mxu0 0.0
  %1385 = vmatpush2.msra.mxu0 0.0
  %1386 = vmatprep.subr.mxu0 0.0
  %1387 = vmatpush2.msra.mxu0 0.0
  %1388 = vmatprep.mubr.f32.mxu0 0.0
  %1389 = vmatmul.mubr.f32.gmra.mxu0 %v1313
  %v1390 = vpop.f32.mrf.mxu0
  %v1391 = vadd.f32 0.0, %v1390
  %v1392 = vpop.f32.mrf.mxu0
  %1393 = vmatprep.mubr.f32.mxu0 0.0
  %1394 = vmatmul.mubr.f32.gmra.mxu0 %v1316
  %v1395 = vpop.f32.mrf.mxu0
  %v1396 = vadd.f32 0.0, %v1395
  %v1397 = vpop.f32.mrf.mxu0
  %1398 = vmatprep.mubr.f32.mxu0 0.0
  %1399 = vmatmul.mubr.f32.gmra.mxu0 %v1319
  %v1400 = vpop.f32.mrf.mxu0
  %v1401 = vadd.f32 0.0, %v1400
  %v1402 = vpop.f32.mrf.mxu0
  %1403 = vmatprep.mubr.f32.mxu0 0.0
  %1404 = vmatmul.mubr.f32.gmra.mxu0 %v1322
  %v1405 = vpop.f32.mrf.mxu0
  %v1406 = vadd.f32 0.0, %v1405
  %v1407 = vpop.f32.mrf.mxu0
  %1408 = vdwg.mxu0
  %v1409 = vld [vmem:[%s11] sm:$0x1]
  %v1411 = vlaneseq
  %v1412 = vshrl.u32 %v1411, 7
  %v1413 = vsub.s32 0, %v1412
  %v1414 = vrot.slane %v1409, %v1413
  %1416 = vmatprep.subr.mxu0 0.0
  %1417 = vmatpush1.msra.mxu0 0.0
  %1418 = vmatprep.subr.mxu0 0.0
  %1419 = vmatpush1.msra.mxu0 0.0
  %1420 = vmatprep.subr.mxu0 0.0
  %1421 = vmatpush1.msra.mxu0 0.0
  %1422 = vmatprep.subr.mxu0 0.0
  %1423 = vmatpush1.msra.mxu0 0.0
  %1424 = vmatprep.subr.mxu0 0.0
  %1425 = vmatpush1.msra.mxu0 0.0
  %1426 = vmatprep.subr.mxu0 0.0
  %1427 = vmatpush1.msra.mxu0 0.0
  %1428 = vmatprep.subr.mxu0 0.0
  %1429 = vmatpush1.msra.mxu0 0.0
  %1430 = vmatprep.subr.mxu0 0.0
  %1431 = vmatpush1.msra.mxu0 0.0
  %1432 = vmatprep.subr.mxu0 0.0
  %1433 = vmatpush1.msra.mxu0 0.0
  %1434 = vmatprep.subr.mxu0 0.0
  %1435 = vmatpush1.msra.mxu0 0.0
  %1436 = vmatprep.subr.mxu0 0.0
  %1437 = vmatpush1.msra.mxu0 0.0
  %1438 = vmatprep.subr.mxu0 0.0
  %1439 = vmatpush1.msra.mxu0 0.0
  %1440 = vmatprep.subr.mxu0 0.0
  %1441 = vmatpush1.msra.mxu0 %v1406
  %1442 = vmatprep.subr.mxu0 0.0
  %1443 = vmatpush1.msra.mxu0 %v1401
  %1444 = vmatprep.subr.mxu0 0.0
  %1445 = vmatpush1.msra.mxu0 %v1396
  %1446 = vmatprep.subr.mxu0 0.0
  %1447 = vmatpush1.msra.mxu0 %v1391
  %1448 = vmatprep.subr.mxu0 0.0
  %1449 = vmatpush2.msra.mxu0 0.0
  %1450 = vmatprep.subr.mxu0 0.0
  %1451 = vmatpush2.msra.mxu0 0.0
  %1452 = vmatprep.subr.mxu0 0.0
  %1453 = vmatpush2.msra.mxu0 0.0
  %1454 = vmatprep.subr.mxu0 0.0
  %1455 = vmatpush2.msra.mxu0 0.0
  %1456 = vmatprep.subr.mxu0 0.0
  %1457 = vmatpush2.msra.mxu0 0.0
  %1458 = vmatprep.subr.mxu0 0.0
  %1459 = vmatpush2.msra.mxu0 0.0
  %1460 = vmatprep.subr.mxu0 0.0
  %1461 = vmatpush2.msra.mxu0 0.0
  %1462 = vmatprep.subr.mxu0 0.0
  %1463 = vmatpush2.msra.mxu0 0.0
  %1464 = vmatprep.subr.mxu0 0.0
  %1465 = vmatpush2.msra.mxu0 0.0
  %1466 = vmatprep.subr.mxu0 0.0
  %1467 = vmatpush2.msra.mxu0 0.0
  %1468 = vmatprep.subr.mxu0 0.0
  %1469 = vmatpush2.msra.mxu0 0.0
  %1470 = vmatprep.subr.mxu0 0.0
  %1471 = vmatpush2.msra.mxu0 0.0
  %1472 = vmatprep.subr.mxu0 0.0
  %1473 = vmatpush2.msra.mxu0 0.0
  %1474 = vmatprep.subr.mxu0 0.0
  %1475 = vmatpush2.msra.mxu0 0.0
  %1476 = vmatprep.subr.mxu0 0.0
  %1477 = vmatpush2.msra.mxu0 0.0
  %1478 = vmatprep.subr.mxu0 0.0
  %1479 = vmatpush2.msra.mxu0 0.0
  %1480 = vmatprep.mubr.f32.mxu0 0.0
  %1481 = vmatmul.mubr.f32.gmra.mxu0 %v1203
  %v1482 = vpop.f32.mrf.mxu0
  %v1483 = vadd.f32 %v1414, %v1482
  %v1484 = vpop.f32.mrf.mxu0
  %1485 = vmatprep.mubr.f32.mxu0 0.0
  %1486 = vmatmul.mubr.f32.gmra.mxu0 %v1206
  %v1487 = vpop.f32.mrf.mxu0
  %v1488 = vadd.f32 %v1414, %v1487
  %v1489 = vpop.f32.mrf.mxu0
  %1490 = vmatprep.mubr.f32.mxu0 0.0
  %1491 = vmatmul.mubr.f32.gmra.mxu0 %v1209
  %v1492 = vpop.f32.mrf.mxu0
  %v1493 = vadd.f32 %v1414, %v1492
  %v1494 = vpop.f32.mrf.mxu0
  %1495 = vmatprep.mubr.f32.mxu0 0.0
  %1496 = vmatmul.mubr.f32.gmra.mxu0 %v1212
  %v1497 = vpop.f32.mrf.mxu0
  %v1498 = vadd.f32 %v1414, %v1497
  %v1499 = vpop.f32.mrf.mxu0
  %1500 = vdwg.mxu0
  %1501 = vst.msk [vmem:[%s12] sm:$0xff] %vm1311, %v1483
  %1502 = vst.msk [vmem:[%s12 + $0x8] sm:$0xff] %vm1311, %v1488
  %1503 = vst.msk [vmem:[%s12 + $0x10] sm:$0xff] %vm1311, %v1493
  %1504 = vst.msk [vmem:[%s12 + $0x18] sm:$0xff] %vm1311, %v1498
  // Predicated region
  $region50: #{downstream_forward.2} parent=0 // pred_check
    _
  $region51: #{downstream_forward.2} parent=0 // pred_check_branch
    %1506 = sbr.rel (0) target = $region53
  $region52: #{downstream_forward.2} parent=0 // pred_region
    _
  $region53: #{downstream_forward.2} parent=0 // pred_fallthru
    _
  // Predicated region
  $region54: #{downstream_forward.2} parent=0 // pred_check
    _
  $region55: #{downstream_forward.2} parent=0 // pred_check_branch
    %1508 = sbr.rel (0) target = $region57
  $region56: #{downstream_forward.2} parent=0 // pred_region
    _
  $region57: #{downstream_forward.2} parent=0 // pred_fallthru
    _

// kernel: downstream_forward.3
$region0: #{downstream_forward.3}
  #allocation0 [shape = 'u32[]', space=smem, size = 0x4, offset = 0x4, fixed_abs, tag = 'smem constant byte address 0x4 - core index']
  #allocation1 [shape = 'u32[144,128]{1,0:T(1,128)}', space=vmem, size = 0x12000, scoped, tag = 'internal scratch']
  %s0 = inlined_call_operand.vmem [shape: f32[8,32], index: 0, kind: input, shape index: {}]
  %s1 = inlined_call_operand.vmem [shape: f32[8,32], index: 1, kind: input, shape index: {}]
  %s2 = inlined_call_operand.vmem [shape: f32[64,8], index: 2, kind: input, shape index: {}]
  %s3 = inlined_call_operand.vmem [shape: f32[64,8], index: 3, kind: input, shape index: {}]
  %s4 = inlined_call_operand.vmem [shape: f32[4,32], index: 4, kind: input, shape index: {}]
  %s5 = inlined_call_operand.vmem [shape: f32[4,32], index: 5, kind: input, shape index: {}]
  %s6 = inlined_call_operand.vmem [shape: f32[64,64], index: 6, kind: input, shape index: {}]
  %s7 = inlined_call_operand.vmem [shape: f32[1,64], index: 7, kind: input, shape index: {}]
  %s8 = inlined_call_operand.vmem [shape: f32[64,7], index: 8, kind: input, shape index: {}]
  %s9 = inlined_call_operand.vmem [shape: f32[1,7], index: 9, kind: input, shape index: {}]
  %s10 = inlined_call_operand.vmem [shape: f32[64,7], index: 10, kind: output, shape index: {}]
  %s11 = sld [smem:[#allocation0]]
  $region50: #{downstream_forward.3} parent=0
    _
  %s13 = ssub.s32 1, %s11
  %s14 = scalar_select 0, %s13, %s11
  // Predicated region
  $region2: #{downstream_forward.3} parent=0 // pred_check
    _
  $region3: #{downstream_forward.3} parent=0 // pred_check_branch
    %16 = sbr.rel (0) target = $region5
  $region4: #{downstream_forward.3} parent=0 // pred_region
    _
  $region5: #{downstream_forward.3} parent=0 // pred_fallthru
    _
  // Predicated region
  $region6: #{downstream_forward.3} parent=0 // pred_check
    _
  $region7: #{downstream_forward.3} parent=0 // pred_check_branch
    %18 = sbr.rel (0) target = $region9
  $region8: #{downstream_forward.3} parent=0 // pred_region
    _
  $region9: #{downstream_forward.3} parent=0 // pred_fallthru
    _
  // Predicated region
  $region10: #{downstream_forward.3} parent=0 // pred_check
    _
  $region11: #{downstream_forward.3} parent=0 // pred_check_branch
    %20 = sbr.rel (0) target = $region13
  $region12: #{downstream_forward.3} parent=0 // pred_region
    _
  $region13: #{downstream_forward.3} parent=0 // pred_fallthru
    _
  // Predicated region
  $region14: #{downstream_forward.3} parent=0 // pred_check
    _
  $region15: #{downstream_forward.3} parent=0 // pred_check_branch
    %22 = sbr.rel (0) target = $region17
  $region16: #{downstream_forward.3} parent=0 // pred_region
    _
  $region17: #{downstream_forward.3} parent=0 // pred_fallthru
    _
  // Predicated region
  $region18: #{downstream_forward.3} parent=0 // pred_check
    _
  $region19: #{downstream_forward.3} parent=0 // pred_check_branch
    %24 = sbr.rel (0) target = $region21
  $region20: #{downstream_forward.3} parent=0 // pred_region
    _
  $region21: #{downstream_forward.3} parent=0 // pred_fallthru
    _
  // Predicated region
  $region22: #{downstream_forward.3} parent=0 // pred_check
    _
  $region23: #{downstream_forward.3} parent=0 // pred_check_branch
    %26 = sbr.rel (0) target = $region25
  $region24: #{downstream_forward.3} parent=0 // pred_region
    _
  $region25: #{downstream_forward.3} parent=0 // pred_fallthru
    _
  // Predicated region
  $region26: #{downstream_forward.3} parent=0 // pred_check
    _
  $region27: #{downstream_forward.3} parent=0 // pred_check_branch
    %28 = sbr.rel (0) target = $region29
  $region28: #{downstream_forward.3} parent=0 // pred_region
    _
  $region29: #{downstream_forward.3} parent=0 // pred_fallthru
    _
  // Predicated region
  $region30: #{downstream_forward.3} parent=0 // pred_check
    _
  $region31: #{downstream_forward.3} parent=0 // pred_check_branch
    %30 = sbr.rel (0) target = $region33
  $region32: #{downstream_forward.3} parent=0 // pred_region
    _
  $region33: #{downstream_forward.3} parent=0 // pred_fallthru
    _
  // Predicated region
  $region34: #{downstream_forward.3} parent=0 // pred_check
    _
  $region35: #{downstream_forward.3} parent=0 // pred_check_branch
    %32 = sbr.rel (0) target = $region37
  $region36: #{downstream_forward.3} parent=0 // pred_region
    _
  $region37: #{downstream_forward.3} parent=0 // pred_fallthru
    _
  // Predicated region
  $region38: #{downstream_forward.3} parent=0 // pred_check
    _
  $region39: #{downstream_forward.3} parent=0 // pred_check_branch
    %34 = sbr.rel (0) target = $region41
  $region40: #{downstream_forward.3} parent=0 // pred_region
    _
  $region41: #{downstream_forward.3} parent=0 // pred_fallthru
    _
  %v35 = vld [vmem:[%s0] sm:$0xff]
  %v36 = vld [vmem:[%s1] sm:$0xff]
  %v37 = vld [vmem:[%s2] sm:$0xff]
  %v38 = vld [vmem:[%s2 + $0x8] sm:$0xff]
  %v39 = vld [vmem:[%s2 + $0x10] sm:$0xff]
  %v40 = vld [vmem:[%s2 + $0x18] sm:$0xff]
  %v41 = vld [vmem:[%s2 + $0x20] sm:$0xff]
  %v42 = vld [vmem:[%s2 + $0x28] sm:$0xff]
  %v43 = vld [vmem:[%s2 + $0x30] sm:$0xff]
  %v44 = vld [vmem:[%s2 + $0x38] sm:$0xff]
  %vm45 = vcmask 64512
  %v47 = vsel %vm45, %v37, 0
  %v50 = vsel %vm45, %v38, 0
  %v53 = vsel %vm45, %v39, 0
  %v56 = vsel %vm45, %v40, 0
  %v59 = vsel %vm45, %v41, 0
  %v62 = vsel %vm45, %v42, 0
  %v65 = vsel %vm45, %v43, 0
  %v68 = vsel %vm45, %v44, 0
  %70 = vmatprep.subr.mxu0 0.0
  %71 = vmatpush1.msra.mxu0 0.0
  %72 = vmatprep.subr.mxu0 0.0
  %73 = vmatpush1.msra.mxu0 0.0
  %74 = vmatprep.subr.mxu0 0.0
  %75 = vmatpush1.msra.mxu0 0.0
  %76 = vmatprep.subr.mxu0 0.0
  %77 = vmatpush1.msra.mxu0 0.0
  %78 = vmatprep.subr.mxu0 0.0
  %79 = vmatpush1.msra.mxu0 0.0
  %80 = vmatprep.subr.mxu0 0.0
  %81 = vmatpush1.msra.mxu0 0.0
  %82 = vmatprep.subr.mxu0 0.0
  %83 = vmatpush1.msra.mxu0 0.0
  %84 = vmatprep.subr.mxu0 0.0
  %85 = vmatpush1.msra.mxu0 0.0
  %86 = vmatprep.subr.mxu0 0.0
  %87 = vmatpush1.msra.mxu0 0.0
  %88 = vmatprep.subr.mxu0 0.0
  %89 = vmatpush1.msra.mxu0 0.0
  %90 = vmatprep.subr.mxu0 0.0
  %91 = vmatpush1.msra.mxu0 0.0
  %92 = vmatprep.subr.mxu0 0.0
  %93 = vmatpush1.msra.mxu0 0.0
  %94 = vmatprep.subr.mxu0 0.0
  %95 = vmatpush1.msra.mxu0 0.0
  %96 = vmatprep.subr.mxu0 0.0
  %97 = vmatpush1.msra.mxu0 0.0
  %98 = vmatprep.subr.mxu0 0.0
  %99 = vmatpush1.msra.mxu0 0.0
  %100 = vmatprep.subr.mxu0 0.0
  %101 = vmatpush1.msra.mxu0 %v35
  %102 = vmatprep.subr.mxu0 0.0
  %103 = vmatpush2.msra.mxu0 0.0
  %104 = vmatprep.subr.mxu0 0.0
  %105 = vmatpush2.msra.mxu0 0.0
  %106 = vmatprep.subr.mxu0 0.0
  %107 = vmatpush2.msra.mxu0 0.0
  %108 = vmatprep.subr.mxu0 0.0
  %109 = vmatpush2.msra.mxu0 0.0
  %110 = vmatprep.subr.mxu0 0.0
  %111 = vmatpush2.msra.mxu0 0.0
  %112 = vmatprep.subr.mxu0 0.0
  %113 = vmatpush2.msra.mxu0 0.0
  %114 = vmatprep.subr.mxu0 0.0
  %115 = vmatpush2.msra.mxu0 0.0
  %116 = vmatprep.subr.mxu0 0.0
  %117 = vmatpush2.msra.mxu0 0.0
  %118 = vmatprep.subr.mxu0 0.0
  %119 = vmatpush2.msra.mxu0 0.0
  %120 = vmatprep.subr.mxu0 0.0
  %121 = vmatpush2.msra.mxu0 0.0
  %122 = vmatprep.subr.mxu0 0.0
  %123 = vmatpush2.msra.mxu0 0.0
  %124 = vmatprep.subr.mxu0 0.0
  %125 = vmatpush2.msra.mxu0 0.0
  %126 = vmatprep.subr.mxu0 0.0
  %127 = vmatpush2.msra.mxu0 0.0
  %128 = vmatprep.subr.mxu0 0.0
  %129 = vmatpush2.msra.mxu0 0.0
  %130 = vmatprep.subr.mxu0 0.0
  %131 = vmatpush2.msra.mxu0 0.0
  %132 = vmatprep.subr.mxu0 0.0
  %133 = vmatpush2.msra.mxu0 0.0
  %134 = vmatprep.mubr.f32.mxu0 0.0
  %135 = vmatmul.mubr.f32.gmra.mxu0 %v47
  %v136 = vpop.f32.mrf.mxu0
  %v137 = vadd.f32 0.0, %v136
  %v138 = vpop.f32.mrf.mxu0
  %139 = vmatprep.mubr.f32.mxu0 0.0
  %140 = vmatmul.mubr.f32.gmra.mxu0 %v50
  %v141 = vpop.f32.mrf.mxu0
  %v142 = vadd.f32 0.0, %v141
  %v143 = vpop.f32.mrf.mxu0
  %144 = vmatprep.mubr.f32.mxu0 0.0
  %145 = vmatmul.mubr.f32.gmra.mxu0 %v53
  %v146 = vpop.f32.mrf.mxu0
  %v147 = vadd.f32 0.0, %v146
  %v148 = vpop.f32.mrf.mxu0
  %149 = vmatprep.mubr.f32.mxu0 0.0
  %150 = vmatmul.mubr.f32.gmra.mxu0 %v56
  %v151 = vpop.f32.mrf.mxu0
  %v152 = vadd.f32 0.0, %v151
  %v153 = vpop.f32.mrf.mxu0
  %154 = vmatprep.mubr.f32.mxu0 0.0
  %155 = vmatmul.mubr.f32.gmra.mxu0 %v59
  %v156 = vpop.f32.mrf.mxu0
  %v157 = vadd.f32 0.0, %v156
  %v158 = vpop.f32.mrf.mxu0
  %159 = vmatprep.mubr.f32.mxu0 0.0
  %160 = vmatmul.mubr.f32.gmra.mxu0 %v62
  %v161 = vpop.f32.mrf.mxu0
  %v162 = vadd.f32 0.0, %v161
  %v163 = vpop.f32.mrf.mxu0
  %164 = vmatprep.mubr.f32.mxu0 0.0
  %165 = vmatmul.mubr.f32.gmra.mxu0 %v65
  %v166 = vpop.f32.mrf.mxu0
  %v167 = vadd.f32 0.0, %v166
  %v168 = vpop.f32.mrf.mxu0
  %169 = vmatprep.mubr.f32.mxu0 0.0
  %170 = vmatmul.mubr.f32.gmra.mxu0 %v68
  %v171 = vpop.f32.mrf.mxu0
  %v172 = vadd.f32 0.0, %v171
  %v173 = vpop.f32.mrf.mxu0
  %174 = vdwg.mxu0
  %v175 = vld [vmem:[%s3] sm:$0xff]
  %v176 = vld [vmem:[%s3 + $0x8] sm:$0xff]
  %v177 = vld [vmem:[%s3 + $0x10] sm:$0xff]
  %v178 = vld [vmem:[%s3 + $0x18] sm:$0xff]
  %v179 = vld [vmem:[%s3 + $0x20] sm:$0xff]
  %v180 = vld [vmem:[%s3 + $0x28] sm:$0xff]
  %v181 = vld [vmem:[%s3 + $0x30] sm:$0xff]
  %v182 = vld [vmem:[%s3 + $0x38] sm:$0xff]
  %v184 = vsel %vm45, %v175, 0
  %v187 = vsel %vm45, %v176, 0
  %v190 = vsel %vm45, %v177, 0
  %v193 = vsel %vm45, %v178, 0
  %v196 = vsel %vm45, %v179, 0
  %v199 = vsel %vm45, %v180, 0
  %v202 = vsel %vm45, %v181, 0
  %v205 = vsel %vm45, %v182, 0
  %207 = vmatprep.subr.mxu0 0.0
  %208 = vmatpush1.msra.mxu0 0.0
  %209 = vmatprep.subr.mxu0 0.0
  %210 = vmatpush1.msra.mxu0 0.0
  %211 = vmatprep.subr.mxu0 0.0
  %212 = vmatpush1.msra.mxu0 0.0
  %213 = vmatprep.subr.mxu0 0.0
  %214 = vmatpush1.msra.mxu0 0.0
  %215 = vmatprep.subr.mxu0 0.0
  %216 = vmatpush1.msra.mxu0 0.0
  %217 = vmatprep.subr.mxu0 0.0
  %218 = vmatpush1.msra.mxu0 0.0
  %219 = vmatprep.subr.mxu0 0.0
  %220 = vmatpush1.msra.mxu0 0.0
  %221 = vmatprep.subr.mxu0 0.0
  %222 = vmatpush1.msra.mxu0 0.0
  %223 = vmatprep.subr.mxu0 0.0
  %224 = vmatpush1.msra.mxu0 0.0
  %225 = vmatprep.subr.mxu0 0.0
  %226 = vmatpush1.msra.mxu0 0.0
  %227 = vmatprep.subr.mxu0 0.0
  %228 = vmatpush1.msra.mxu0 0.0
  %229 = vmatprep.subr.mxu0 0.0
  %230 = vmatpush1.msra.mxu0 0.0
  %231 = vmatprep.subr.mxu0 0.0
  %232 = vmatpush1.msra.mxu0 0.0
  %233 = vmatprep.subr.mxu0 0.0
  %234 = vmatpush1.msra.mxu0 0.0
  %235 = vmatprep.subr.mxu0 0.0
  %236 = vmatpush1.msra.mxu0 0.0
  %237 = vmatprep.subr.mxu0 0.0
  %238 = vmatpush1.msra.mxu0 %v36
  %239 = vmatprep.subr.mxu0 0.0
  %240 = vmatpush2.msra.mxu0 0.0
  %241 = vmatprep.subr.mxu0 0.0
  %242 = vmatpush2.msra.mxu0 0.0
  %243 = vmatprep.subr.mxu0 0.0
  %244 = vmatpush2.msra.mxu0 0.0
  %245 = vmatprep.subr.mxu0 0.0
  %246 = vmatpush2.msra.mxu0 0.0
  %247 = vmatprep.subr.mxu0 0.0
  %248 = vmatpush2.msra.mxu0 0.0
  %249 = vmatprep.subr.mxu0 0.0
  %250 = vmatpush2.msra.mxu0 0.0
  %251 = vmatprep.subr.mxu0 0.0
  %252 = vmatpush2.msra.mxu0 0.0
  %253 = vmatprep.subr.mxu0 0.0
  %254 = vmatpush2.msra.mxu0 0.0
  %255 = vmatprep.subr.mxu0 0.0
  %256 = vmatpush2.msra.mxu0 0.0
  %257 = vmatprep.subr.mxu0 0.0
  %258 = vmatpush2.msra.mxu0 0.0
  %259 = vmatprep.subr.mxu0 0.0
  %260 = vmatpush2.msra.mxu0 0.0
  %261 = vmatprep.subr.mxu0 0.0
  %262 = vmatpush2.msra.mxu0 0.0
  %263 = vmatprep.subr.mxu0 0.0
  %264 = vmatpush2.msra.mxu0 0.0
  %265 = vmatprep.subr.mxu0 0.0
  %266 = vmatpush2.msra.mxu0 0.0
  %267 = vmatprep.subr.mxu0 0.0
  %268 = vmatpush2.msra.mxu0 0.0
  %269 = vmatprep.subr.mxu0 0.0
  %270 = vmatpush2.msra.mxu0 0.0
  %271 = vmatprep.mubr.f32.mxu0 0.0
  %272 = vmatmul.mubr.f32.gmra.mxu0 %v184
  %v273 = vpop.f32.mrf.mxu0
  %v274 = vadd.f32 0.0, %v273
  %v275 = vpop.f32.mrf.mxu0
  %276 = vmatprep.mubr.f32.mxu0 0.0
  %277 = vmatmul.mubr.f32.gmra.mxu0 %v187
  %v278 = vpop.f32.mrf.mxu0
  %v279 = vadd.f32 0.0, %v278
  %v280 = vpop.f32.mrf.mxu0
  %281 = vmatprep.mubr.f32.mxu0 0.0
  %282 = vmatmul.mubr.f32.gmra.mxu0 %v190
  %v283 = vpop.f32.mrf.mxu0
  %v284 = vadd.f32 0.0, %v283
  %v285 = vpop.f32.mrf.mxu0
  %286 = vmatprep.mubr.f32.mxu0 0.0
  %287 = vmatmul.mubr.f32.gmra.mxu0 %v193
  %v288 = vpop.f32.mrf.mxu0
  %v289 = vadd.f32 0.0, %v288
  %v290 = vpop.f32.mrf.mxu0
  %291 = vmatprep.mubr.f32.mxu0 0.0
  %292 = vmatmul.mubr.f32.gmra.mxu0 %v196
  %v293 = vpop.f32.mrf.mxu0
  %v294 = vadd.f32 0.0, %v293
  %v295 = vpop.f32.mrf.mxu0
  %296 = vmatprep.mubr.f32.mxu0 0.0
  %297 = vmatmul.mubr.f32.gmra.mxu0 %v199
  %v298 = vpop.f32.mrf.mxu0
  %v299 = vadd.f32 0.0, %v298
  %v300 = vpop.f32.mrf.mxu0
  %301 = vmatprep.mubr.f32.mxu0 0.0
  %302 = vmatmul.mubr.f32.gmra.mxu0 %v202
  %v303 = vpop.f32.mrf.mxu0
  %v304 = vadd.f32 0.0, %v303
  %v305 = vpop.f32.mrf.mxu0
  %306 = vmatprep.mubr.f32.mxu0 0.0
  %307 = vmatmul.mubr.f32.gmra.mxu0 %v205
  %v308 = vpop.f32.mrf.mxu0
  %v309 = vadd.f32 0.0, %v308
  %v310 = vpop.f32.mrf.mxu0
  %311 = vdwg.mxu0
  %v312 = vsub.f32 %v137, %v274
  %v313 = vsub.f32 %v142, %v279
  %v314 = vsub.f32 %v147, %v284
  %v315 = vsub.f32 %v152, %v289
  %v316 = vsub.f32 %v157, %v294
  %v317 = vsub.f32 %v162, %v299
  %v318 = vsub.f32 %v167, %v304
  %v319 = vsub.f32 %v172, %v309
  %v320 = vmul.f32 %v137, %v274
  %v321 = vmul.f32 %v142, %v279
  %v322 = vmul.f32 %v147, %v284
  %v323 = vmul.f32 %v152, %v289
  %v324 = vmul.f32 %v157, %v294
  %v325 = vmul.f32 %v162, %v299
  %v326 = vmul.f32 %v167, %v304
  %v327 = vmul.f32 %v172, %v309
  %v328 = vadd.f32 %v312, %v320
  %v329 = vadd.f32 %v313, %v321
  %v330 = vadd.f32 %v314, %v322
  %v331 = vadd.f32 %v315, %v323
  %v332 = vadd.f32 %v316, %v324
  %v333 = vadd.f32 %v317, %v325
  %v334 = vadd.f32 %v318, %v326
  %v335 = vadd.f32 %v319, %v327
  %v336 = vld [vmem:[%s4] sm:$0xf]
  %vm337 = vcmask 261120
  %v339 = vsel %vm337, %v328, 0
  %v342 = vsel %vm337, %v329, 0
  %v345 = vsel %vm337, %v330, 0
  %v348 = vsel %vm337, %v331, 0
  %v351 = vsel %vm337, %v332, 0
  %v354 = vsel %vm337, %v333, 0
  %v357 = vsel %vm337, %v334, 0
  %v360 = vsel %vm337, %v335, 0
  %v363 = vsel %vm337, %v336, 0
  %365 = vmatprep.subr.mxu0 0.0
  %366 = vmatpush1.xpose.msra.mxu0 0.0
  %367 = vmatprep.subr.mxu0 0.0
  %368 = vmatpush1.xpose.msra.mxu0 0.0
  %369 = vmatprep.subr.mxu0 0.0
  %370 = vmatpush1.xpose.msra.mxu0 0.0
  %371 = vmatprep.subr.mxu0 0.0
  %372 = vmatpush1.xpose.msra.mxu0 0.0
  %373 = vmatprep.subr.mxu0 0.0
  %374 = vmatpush1.xpose.msra.mxu0 0.0
  %375 = vmatprep.subr.mxu0 0.0
  %376 = vmatpush1.xpose.msra.mxu0 0.0
  %377 = vmatprep.subr.mxu0 0.0
  %378 = vmatpush1.xpose.msra.mxu0 0.0
  %379 = vmatprep.subr.mxu0 0.0
  %380 = vmatpush1.xpose.msra.mxu0 0.0
  %381 = vmatprep.subr.mxu0 0.0
  %382 = vmatpush1.xpose.msra.mxu0 0.0
  %383 = vmatprep.subr.mxu0 0.0
  %384 = vmatpush1.xpose.msra.mxu0 0.0
  %385 = vmatprep.subr.mxu0 0.0
  %386 = vmatpush1.xpose.msra.mxu0 0.0
  %387 = vmatprep.subr.mxu0 0.0
  %388 = vmatpush1.xpose.msra.mxu0 0.0
  %389 = vmatprep.subr.mxu0 0.0
  %390 = vmatpush1.xpose.msra.mxu0 0.0
  %391 = vmatprep.subr.mxu0 0.0
  %392 = vmatpush1.xpose.msra.mxu0 0.0
  %393 = vmatprep.subr.mxu0 0.0
  %394 = vmatpush1.xpose.msra.mxu0 0.0
  %395 = vmatprep.subr.mxu0 0.0
  %396 = vmatpush1.xpose.msra.mxu0 %v363
  %397 = vmatprep.subr.mxu0 0.0
  %398 = vmatpush2.xpose.msra.mxu0 0.0
  %399 = vmatprep.subr.mxu0 0.0
  %400 = vmatpush2.xpose.msra.mxu0 0.0
  %401 = vmatprep.subr.mxu0 0.0
  %402 = vmatpush2.xpose.msra.mxu0 0.0
  %403 = vmatprep.subr.mxu0 0.0
  %404 = vmatpush2.xpose.msra.mxu0 0.0
  %405 = vmatprep.subr.mxu0 0.0
  %406 = vmatpush2.xpose.msra.mxu0 0.0
  %407 = vmatprep.subr.mxu0 0.0
  %408 = vmatpush2.xpose.msra.mxu0 0.0
  %409 = vmatprep.subr.mxu0 0.0
  %410 = vmatpush2.xpose.msra.mxu0 0.0
  %411 = vmatprep.subr.mxu0 0.0
  %412 = vmatpush2.xpose.msra.mxu0 0.0
  %413 = vmatprep.subr.mxu0 0.0
  %414 = vmatpush2.xpose.msra.mxu0 0.0
  %415 = vmatprep.subr.mxu0 0.0
  %416 = vmatpush2.xpose.msra.mxu0 0.0
  %417 = vmatprep.subr.mxu0 0.0
  %418 = vmatpush2.xpose.msra.mxu0 0.0
  %419 = vmatprep.subr.mxu0 0.0
  %420 = vmatpush2.xpose.msra.mxu0 0.0
  %421 = vmatprep.subr.mxu0 0.0
  %422 = vmatpush2.xpose.msra.mxu0 0.0
  %423 = vmatprep.subr.mxu0 0.0
  %424 = vmatpush2.xpose.msra.mxu0 0.0
  %425 = vmatprep.subr.mxu0 0.0
  %426 = vmatpush2.xpose.msra.mxu0 0.0
  %427 = vmatprep.subr.mxu0 0.0
  %428 = vmatpush2.xpose.msra.mxu0 0.0
  %429 = vmatprep.mubr.f32.mxu0 0.0
  %430 = vmatmul.mubr.f32.gmra.mxu0 %v339
  %v431 = vpop.f32.mrf.mxu0
  %v432 = vadd.f32 0.0, %v431
  %v433 = vpop.f32.mrf.mxu0
  %434 = vmatprep.mubr.f32.mxu0 0.0
  %435 = vmatmul.mubr.f32.gmra.mxu0 %v342
  %v436 = vpop.f32.mrf.mxu0
  %v437 = vadd.f32 0.0, %v436
  %v438 = vpop.f32.mrf.mxu0
  %439 = vmatprep.mubr.f32.mxu0 0.0
  %440 = vmatmul.mubr.f32.gmra.mxu0 %v345
  %v441 = vpop.f32.mrf.mxu0
  %v442 = vadd.f32 0.0, %v441
  %v443 = vpop.f32.mrf.mxu0
  %444 = vmatprep.mubr.f32.mxu0 0.0
  %445 = vmatmul.mubr.f32.gmra.mxu0 %v348
  %v446 = vpop.f32.mrf.mxu0
  %v447 = vadd.f32 0.0, %v446
  %v448 = vpop.f32.mrf.mxu0
  %449 = vmatprep.mubr.f32.mxu0 0.0
  %450 = vmatmul.mubr.f32.gmra.mxu0 %v351
  %v451 = vpop.f32.mrf.mxu0
  %v452 = vadd.f32 0.0, %v451
  %v453 = vpop.f32.mrf.mxu0
  %454 = vmatprep.mubr.f32.mxu0 0.0
  %455 = vmatmul.mubr.f32.gmra.mxu0 %v354
  %v456 = vpop.f32.mrf.mxu0
  %v457 = vadd.f32 0.0, %v456
  %v458 = vpop.f32.mrf.mxu0
  %459 = vmatprep.mubr.f32.mxu0 0.0
  %460 = vmatmul.mubr.f32.gmra.mxu0 %v357
  %v461 = vpop.f32.mrf.mxu0
  %v462 = vadd.f32 0.0, %v461
  %v463 = vpop.f32.mrf.mxu0
  %464 = vmatprep.mubr.f32.mxu0 0.0
  %465 = vmatmul.mubr.f32.gmra.mxu0 %v360
  %v466 = vpop.f32.mrf.mxu0
  %v467 = vadd.f32 0.0, %v466
  %v468 = vpop.f32.mrf.mxu0
  %469 = vdwg.mxu0
  %vm470 = vcmask 31744
  %v471 = vsel %vm470, %v432, -inf
  %472 = vmax.xlane.f32.xlu0 %v471
  %v473 = vpop.xlane.xlu0 %472
  %v474 = vsel %vm470, %v437, -inf
  %475 = vmax.xlane.f32.xlu0 %v474
  %v476 = vpop.xlane.xlu0 %475
  %v477 = vsel %vm470, %v442, -inf
  %478 = vmax.xlane.f32.xlu0 %v477
  %v479 = vpop.xlane.xlu0 %478
  %v480 = vsel %vm470, %v447, -inf
  %481 = vmax.xlane.f32.xlu0 %v480
  %v482 = vpop.xlane.xlu0 %481
  %v483 = vsel %vm470, %v452, -inf
  %484 = vmax.xlane.f32.xlu0 %v483
  %v485 = vpop.xlane.xlu0 %484
  %v486 = vsel %vm470, %v457, -inf
  %487 = vmax.xlane.f32.xlu0 %v486
  %v488 = vpop.xlane.xlu0 %487
  %v489 = vsel %vm470, %v462, -inf
  %490 = vmax.xlane.f32.xlu0 %v489
  %v491 = vpop.xlane.xlu0 %490
  %v492 = vsel %vm470, %v467, -inf
  %493 = vmax.xlane.f32.xlu0 %v492
  %v494 = vpop.xlane.xlu0 %493
  %v495 = vsub.f32 %v432, %v473
  %v496 = vsub.f32 %v437, %v476
  %v497 = vsub.f32 %v442, %v479
  %v498 = vsub.f32 %v447, %v482
  %v499 = vsub.f32 %v452, %v485
  %v500 = vsub.f32 %v457, %v488
  %v501 = vsub.f32 %v462, %v491
  %v502 = vsub.f32 %v467, %v494
  %v503 = vmul.f32 %v495, 1.442695
  %v504 = vpow.pop %v503
  %v505 = vmul.f32 %v496, 1.442695
  %v506 = vpow.pop %v505
  %v507 = vmul.f32 %v497, 1.442695
  %v508 = vpow.pop %v507
  %v509 = vmul.f32 %v498, 1.442695
  %v510 = vpow.pop %v509
  %v511 = vmul.f32 %v499, 1.442695
  %v512 = vpow.pop %v511
  %v513 = vmul.f32 %v500, 1.442695
  %v514 = vpow.pop %v513
  %v515 = vmul.f32 %v501, 1.442695
  %v516 = vpow.pop %v515
  %v517 = vmul.f32 %v502, 1.442695
  %v518 = vpow.pop %v517
  %v519 = vsel %vm470, %v504, 0.0
  %520 = vadd.xlane.f32.xlu0 %v519
  %v521 = vpop.xlane.xlu0 %520
  %v522 = vsel %vm470, %v506, 0.0
  %523 = vadd.xlane.f32.xlu0 %v522
  %v524 = vpop.xlane.xlu0 %523
  %v525 = vsel %vm470, %v508, 0.0
  %526 = vadd.xlane.f32.xlu0 %v525
  %v527 = vpop.xlane.xlu0 %526
  %v528 = vsel %vm470, %v510, 0.0
  %529 = vadd.xlane.f32.xlu0 %v528
  %v530 = vpop.xlane.xlu0 %529
  %v531 = vsel %vm470, %v512, 0.0
  %532 = vadd.xlane.f32.xlu0 %v531
  %v533 = vpop.xlane.xlu0 %532
  %v534 = vsel %vm470, %v514, 0.0
  %535 = vadd.xlane.f32.xlu0 %v534
  %v536 = vpop.xlane.xlu0 %535
  %v537 = vsel %vm470, %v516, 0.0
  %538 = vadd.xlane.f32.xlu0 %v537
  %v539 = vpop.xlane.xlu0 %538
  %v540 = vsel %vm470, %v518, 0.0
  %541 = vadd.xlane.f32.xlu0 %v540
  %v542 = vpop.xlane.xlu0 %541
  %v543 = vrcp.pop %v521
  %v544 = vrcp.pop %v524
  %v545 = vrcp.pop %v527
  %v546 = vrcp.pop %v530
  %v547 = vrcp.pop %v533
  %v548 = vrcp.pop %v536
  %v549 = vrcp.pop %v539
  %v550 = vrcp.pop %v542
  %v551 = vmul.f32 %v504, %v543
  %v552 = vmul.f32 %v506, %v544
  %v553 = vmul.f32 %v508, %v545
  %v554 = vmul.f32 %v510, %v546
  %v555 = vmul.f32 %v512, %v547
  %v556 = vmul.f32 %v514, %v548
  %v557 = vmul.f32 %v516, %v549
  %v558 = vmul.f32 %v518, %v550
  %v560 = vsel %vm470, %v551, 0
  %v563 = vsel %vm470, %v552, 0
  %v566 = vsel %vm470, %v553, 0
  %v569 = vsel %vm470, %v554, 0
  %v572 = vsel %vm470, %v555, 0
  %v575 = vsel %vm470, %v556, 0
  %v578 = vsel %vm470, %v557, 0
  %v581 = vsel %vm470, %v558, 0
  %vm583 = vcmask 1043456
  %v584 = vsel %vm583, %v336, 0
  %586 = vmatprep.subr.mxu0 0.0
  %587 = vmatpush1.msra.mxu0 0.0
  %588 = vmatprep.subr.mxu0 0.0
  %589 = vmatpush1.msra.mxu0 0.0
  %590 = vmatprep.subr.mxu0 0.0
  %591 = vmatpush1.msra.mxu0 0.0
  %592 = vmatprep.subr.mxu0 0.0
  %593 = vmatpush1.msra.mxu0 0.0
  %594 = vmatprep.subr.mxu0 0.0
  %595 = vmatpush1.msra.mxu0 0.0
  %596 = vmatprep.subr.mxu0 0.0
  %597 = vmatpush1.msra.mxu0 0.0
  %598 = vmatprep.subr.mxu0 0.0
  %599 = vmatpush1.msra.mxu0 0.0
  %600 = vmatprep.subr.mxu0 0.0
  %601 = vmatpush1.msra.mxu0 0.0
  %602 = vmatprep.subr.mxu0 0.0
  %603 = vmatpush1.msra.mxu0 0.0
  %604 = vmatprep.subr.mxu0 0.0
  %605 = vmatpush1.msra.mxu0 0.0
  %606 = vmatprep.subr.mxu0 0.0
  %607 = vmatpush1.msra.mxu0 0.0
  %608 = vmatprep.subr.mxu0 0.0
  %609 = vmatpush1.msra.mxu0 0.0
  %610 = vmatprep.subr.mxu0 0.0
  %611 = vmatpush1.msra.mxu0 0.0
  %612 = vmatprep.subr.mxu0 0.0
  %613 = vmatpush1.msra.mxu0 0.0
  %614 = vmatprep.subr.mxu0 0.0
  %615 = vmatpush1.msra.mxu0 0.0
  %616 = vmatprep.subr.mxu0 0.0
  %617 = vmatpush1.msra.mxu0 %v584
  %618 = vmatprep.subr.mxu0 0.0
  %619 = vmatpush2.msra.mxu0 0.0
  %620 = vmatprep.subr.mxu0 0.0
  %621 = vmatpush2.msra.mxu0 0.0
  %622 = vmatprep.subr.mxu0 0.0
  %623 = vmatpush2.msra.mxu0 0.0
  %624 = vmatprep.subr.mxu0 0.0
  %625 = vmatpush2.msra.mxu0 0.0
  %626 = vmatprep.subr.mxu0 0.0
  %627 = vmatpush2.msra.mxu0 0.0
  %628 = vmatprep.subr.mxu0 0.0
  %629 = vmatpush2.msra.mxu0 0.0
  %630 = vmatprep.subr.mxu0 0.0
  %631 = vmatpush2.msra.mxu0 0.0
  %632 = vmatprep.subr.mxu0 0.0
  %633 = vmatpush2.msra.mxu0 0.0
  %634 = vmatprep.subr.mxu0 0.0
  %635 = vmatpush2.msra.mxu0 0.0
  %636 = vmatprep.subr.mxu0 0.0
  %637 = vmatpush2.msra.mxu0 0.0
  %638 = vmatprep.subr.mxu0 0.0
  %639 = vmatpush2.msra.mxu0 0.0
  %640 = vmatprep.subr.mxu0 0.0
  %641 = vmatpush2.msra.mxu0 0.0
  %642 = vmatprep.subr.mxu0 0.0
  %643 = vmatpush2.msra.mxu0 0.0
  %644 = vmatprep.subr.mxu0 0.0
  %645 = vmatpush2.msra.mxu0 0.0
  %646 = vmatprep.subr.mxu0 0.0
  %647 = vmatpush2.msra.mxu0 0.0
  %648 = vmatprep.subr.mxu0 0.0
  %649 = vmatpush2.msra.mxu0 0.0
  %650 = vmatprep.mubr.f32.mxu0 0.0
  %651 = vmatmul.mubr.f32.gmra.mxu0 %v560
  %v652 = vpop.f32.mrf.mxu0
  %v653 = vadd.f32 0.0, %v652
  %v654 = vpop.f32.mrf.mxu0
  %655 = vmatprep.mubr.f32.mxu0 0.0
  %656 = vmatmul.mubr.f32.gmra.mxu0 %v563
  %v657 = vpop.f32.mrf.mxu0
  %v658 = vadd.f32 0.0, %v657
  %v659 = vpop.f32.mrf.mxu0
  %660 = vmatprep.mubr.f32.mxu0 0.0
  %661 = vmatmul.mubr.f32.gmra.mxu0 %v566
  %v662 = vpop.f32.mrf.mxu0
  %v663 = vadd.f32 0.0, %v662
  %v664 = vpop.f32.mrf.mxu0
  %665 = vmatprep.mubr.f32.mxu0 0.0
  %666 = vmatmul.mubr.f32.gmra.mxu0 %v569
  %v667 = vpop.f32.mrf.mxu0
  %v668 = vadd.f32 0.0, %v667
  %v669 = vpop.f32.mrf.mxu0
  %670 = vmatprep.mubr.f32.mxu0 0.0
  %671 = vmatmul.mubr.f32.gmra.mxu0 %v572
  %v672 = vpop.f32.mrf.mxu0
  %v673 = vadd.f32 0.0, %v672
  %v674 = vpop.f32.mrf.mxu0
  %675 = vmatprep.mubr.f32.mxu0 0.0
  %676 = vmatmul.mubr.f32.gmra.mxu0 %v575
  %v677 = vpop.f32.mrf.mxu0
  %v678 = vadd.f32 0.0, %v677
  %v679 = vpop.f32.mrf.mxu0
  %680 = vmatprep.mubr.f32.mxu0 0.0
  %681 = vmatmul.mubr.f32.gmra.mxu0 %v578
  %v682 = vpop.f32.mrf.mxu0
  %v683 = vadd.f32 0.0, %v682
  %v684 = vpop.f32.mrf.mxu0
  %685 = vmatprep.mubr.f32.mxu0 0.0
  %686 = vmatmul.mubr.f32.gmra.mxu0 %v581
  %v687 = vpop.f32.mrf.mxu0
  %v688 = vadd.f32 0.0, %v687
  %v689 = vpop.f32.mrf.mxu0
  %690 = vdwg.mxu0
  %v691 = vadd.f32 %v328, %v653
  %v692 = vadd.f32 %v329, %v658
  %v693 = vadd.f32 %v330, %v663
  %v694 = vadd.f32 %v331, %v668
  %v695 = vadd.f32 %v332, %v673
  %v696 = vadd.f32 %v333, %v678
  %v697 = vadd.f32 %v334, %v683
  %v698 = vadd.f32 %v335, %v688
  %v699 = vld [vmem:[%s5] sm:$0xf]
  %v701 = vsel %vm337, %v699, 0
  %703 = vmatprep.subr.mxu0 0.0
  %704 = vmatpush1.xpose.msra.mxu0 0.0
  %705 = vmatprep.subr.mxu0 0.0
  %706 = vmatpush1.xpose.msra.mxu0 0.0
  %707 = vmatprep.subr.mxu0 0.0
  %708 = vmatpush1.xpose.msra.mxu0 0.0
  %709 = vmatprep.subr.mxu0 0.0
  %710 = vmatpush1.xpose.msra.mxu0 0.0
  %711 = vmatprep.subr.mxu0 0.0
  %712 = vmatpush1.xpose.msra.mxu0 0.0
  %713 = vmatprep.subr.mxu0 0.0
  %714 = vmatpush1.xpose.msra.mxu0 0.0
  %715 = vmatprep.subr.mxu0 0.0
  %716 = vmatpush1.xpose.msra.mxu0 0.0
  %717 = vmatprep.subr.mxu0 0.0
  %718 = vmatpush1.xpose.msra.mxu0 0.0
  %719 = vmatprep.subr.mxu0 0.0
  %720 = vmatpush1.xpose.msra.mxu0 0.0
  %721 = vmatprep.subr.mxu0 0.0
  %722 = vmatpush1.xpose.msra.mxu0 0.0
  %723 = vmatprep.subr.mxu0 0.0
  %724 = vmatpush1.xpose.msra.mxu0 0.0
  %725 = vmatprep.subr.mxu0 0.0
  %726 = vmatpush1.xpose.msra.mxu0 0.0
  %727 = vmatprep.subr.mxu0 0.0
  %728 = vmatpush1.xpose.msra.mxu0 0.0
  %729 = vmatprep.subr.mxu0 0.0
  %730 = vmatpush1.xpose.msra.mxu0 0.0
  %731 = vmatprep.subr.mxu0 0.0
  %732 = vmatpush1.xpose.msra.mxu0 0.0
  %733 = vmatprep.subr.mxu0 0.0
  %734 = vmatpush1.xpose.msra.mxu0 %v701
  %735 = vmatprep.subr.mxu0 0.0
  %736 = vmatpush2.xpose.msra.mxu0 0.0
  %737 = vmatprep.subr.mxu0 0.0
  %738 = vmatpush2.xpose.msra.mxu0 0.0
  %739 = vmatprep.subr.mxu0 0.0
  %740 = vmatpush2.xpose.msra.mxu0 0.0
  %741 = vmatprep.subr.mxu0 0.0
  %742 = vmatpush2.xpose.msra.mxu0 0.0
  %743 = vmatprep.subr.mxu0 0.0
  %744 = vmatpush2.xpose.msra.mxu0 0.0
  %745 = vmatprep.subr.mxu0 0.0
  %746 = vmatpush2.xpose.msra.mxu0 0.0
  %747 = vmatprep.subr.mxu0 0.0
  %748 = vmatpush2.xpose.msra.mxu0 0.0
  %749 = vmatprep.subr.mxu0 0.0
  %750 = vmatpush2.xpose.msra.mxu0 0.0
  %751 = vmatprep.subr.mxu0 0.0
  %752 = vmatpush2.xpose.msra.mxu0 0.0
  %753 = vmatprep.subr.mxu0 0.0
  %754 = vmatpush2.xpose.msra.mxu0 0.0
  %755 = vmatprep.subr.mxu0 0.0
  %756 = vmatpush2.xpose.msra.mxu0 0.0
  %757 = vmatprep.subr.mxu0 0.0
  %758 = vmatpush2.xpose.msra.mxu0 0.0
  %759 = vmatprep.subr.mxu0 0.0
  %760 = vmatpush2.xpose.msra.mxu0 0.0
  %761 = vmatprep.subr.mxu0 0.0
  %762 = vmatpush2.xpose.msra.mxu0 0.0
  %763 = vmatprep.subr.mxu0 0.0
  %764 = vmatpush2.xpose.msra.mxu0 0.0
  %765 = vmatprep.subr.mxu0 0.0
  %766 = vmatpush2.xpose.msra.mxu0 0.0
  %767 = vmatprep.mubr.f32.mxu0 0.0
  %768 = vmatmul.mubr.f32.gmra.mxu0 %v339
  %v769 = vpop.f32.mrf.mxu0
  %v770 = vadd.f32 0.0, %v769
  %v771 = vpop.f32.mrf.mxu0
  %772 = vmatprep.mubr.f32.mxu0 0.0
  %773 = vmatmul.mubr.f32.gmra.mxu0 %v342
  %v774 = vpop.f32.mrf.mxu0
  %v775 = vadd.f32 0.0, %v774
  %v776 = vpop.f32.mrf.mxu0
  %777 = vmatprep.mubr.f32.mxu0 0.0
  %778 = vmatmul.mubr.f32.gmra.mxu0 %v345
  %v779 = vpop.f32.mrf.mxu0
  %v780 = vadd.f32 0.0, %v779
  %v781 = vpop.f32.mrf.mxu0
  %782 = vmatprep.mubr.f32.mxu0 0.0
  %783 = vmatmul.mubr.f32.gmra.mxu0 %v348
  %v784 = vpop.f32.mrf.mxu0
  %v785 = vadd.f32 0.0, %v784
  %v786 = vpop.f32.mrf.mxu0
  %787 = vmatprep.mubr.f32.mxu0 0.0
  %788 = vmatmul.mubr.f32.gmra.mxu0 %v351
  %v789 = vpop.f32.mrf.mxu0
  %v790 = vadd.f32 0.0, %v789
  %v791 = vpop.f32.mrf.mxu0
  %792 = vmatprep.mubr.f32.mxu0 0.0
  %793 = vmatmul.mubr.f32.gmra.mxu0 %v354
  %v794 = vpop.f32.mrf.mxu0
  %v795 = vadd.f32 0.0, %v794
  %v796 = vpop.f32.mrf.mxu0
  %797 = vmatprep.mubr.f32.mxu0 0.0
  %798 = vmatmul.mubr.f32.gmra.mxu0 %v357
  %v799 = vpop.f32.mrf.mxu0
  %v800 = vadd.f32 0.0, %v799
  %v801 = vpop.f32.mrf.mxu0
  %802 = vmatprep.mubr.f32.mxu0 0.0
  %803 = vmatmul.mubr.f32.gmra.mxu0 %v360
  %v804 = vpop.f32.mrf.mxu0
  %v805 = vadd.f32 0.0, %v804
  %v806 = vpop.f32.mrf.mxu0
  %807 = vdwg.mxu0
  %v808 = vsel %vm470, %v770, -inf
  %809 = vmax.xlane.f32.xlu0 %v808
  %v810 = vpop.xlane.xlu0 %809
  %v811 = vsel %vm470, %v775, -inf
  %812 = vmax.xlane.f32.xlu0 %v811
  %v813 = vpop.xlane.xlu0 %812
  %v814 = vsel %vm470, %v780, -inf
  %815 = vmax.xlane.f32.xlu0 %v814
  %v816 = vpop.xlane.xlu0 %815
  %v817 = vsel %vm470, %v785, -inf
  %818 = vmax.xlane.f32.xlu0 %v817
  %v819 = vpop.xlane.xlu0 %818
  %v820 = vsel %vm470, %v790, -inf
  %821 = vmax.xlane.f32.xlu0 %v820
  %v822 = vpop.xlane.xlu0 %821
  %v823 = vsel %vm470, %v795, -inf
  %824 = vmax.xlane.f32.xlu0 %v823
  %v825 = vpop.xlane.xlu0 %824
  %v826 = vsel %vm470, %v800, -inf
  %827 = vmax.xlane.f32.xlu0 %v826
  %v828 = vpop.xlane.xlu0 %827
  %v829 = vsel %vm470, %v805, -inf
  %830 = vmax.xlane.f32.xlu0 %v829
  %v831 = vpop.xlane.xlu0 %830
  %v832 = vsub.f32 %v770, %v810
  %v833 = vsub.f32 %v775, %v813
  %v834 = vsub.f32 %v780, %v816
  %v835 = vsub.f32 %v785, %v819
  %v836 = vsub.f32 %v790, %v822
  %v837 = vsub.f32 %v795, %v825
  %v838 = vsub.f32 %v800, %v828
  %v839 = vsub.f32 %v805, %v831
  %v840 = vmul.f32 %v832, 1.442695
  %v841 = vpow.pop %v840
  %v842 = vmul.f32 %v833, 1.442695
  %v843 = vpow.pop %v842
  %v844 = vmul.f32 %v834, 1.442695
  %v845 = vpow.pop %v844
  %v846 = vmul.f32 %v835, 1.442695
  %v847 = vpow.pop %v846
  %v848 = vmul.f32 %v836, 1.442695
  %v849 = vpow.pop %v848
  %v850 = vmul.f32 %v837, 1.442695
  %v851 = vpow.pop %v850
  %v852 = vmul.f32 %v838, 1.442695
  %v853 = vpow.pop %v852
  %v854 = vmul.f32 %v839, 1.442695
  %v855 = vpow.pop %v854
  %v856 = vsel %vm470, %v841, 0.0
  %857 = vadd.xlane.f32.xlu0 %v856
  %v858 = vpop.xlane.xlu0 %857
  %v859 = vsel %vm470, %v843, 0.0
  %860 = vadd.xlane.f32.xlu0 %v859
  %v861 = vpop.xlane.xlu0 %860
  %v862 = vsel %vm470, %v845, 0.0
  %863 = vadd.xlane.f32.xlu0 %v862
  %v864 = vpop.xlane.xlu0 %863
  %v865 = vsel %vm470, %v847, 0.0
  %866 = vadd.xlane.f32.xlu0 %v865
  %v867 = vpop.xlane.xlu0 %866
  %v868 = vsel %vm470, %v849, 0.0
  %869 = vadd.xlane.f32.xlu0 %v868
  %v870 = vpop.xlane.xlu0 %869
  %v871 = vsel %vm470, %v851, 0.0
  %872 = vadd.xlane.f32.xlu0 %v871
  %v873 = vpop.xlane.xlu0 %872
  %v874 = vsel %vm470, %v853, 0.0
  %875 = vadd.xlane.f32.xlu0 %v874
  %v876 = vpop.xlane.xlu0 %875
  %v877 = vsel %vm470, %v855, 0.0
  %878 = vadd.xlane.f32.xlu0 %v877
  %v879 = vpop.xlane.xlu0 %878
  %v880 = vrcp.pop %v858
  %v881 = vrcp.pop %v861
  %v882 = vrcp.pop %v864
  %v883 = vrcp.pop %v867
  %v884 = vrcp.pop %v870
  %v885 = vrcp.pop %v873
  %v886 = vrcp.pop %v876
  %v887 = vrcp.pop %v879
  %v888 = vmul.f32 %v841, %v880
  %v889 = vmul.f32 %v843, %v881
  %v890 = vmul.f32 %v845, %v882
  %v891 = vmul.f32 %v847, %v883
  %v892 = vmul.f32 %v849, %v884
  %v893 = vmul.f32 %v851, %v885
  %v894 = vmul.f32 %v853, %v886
  %v895 = vmul.f32 %v855, %v887
  %v897 = vsel %vm470, %v888, 0
  %v900 = vsel %vm470, %v889, 0
  %v903 = vsel %vm470, %v890, 0
  %v906 = vsel %vm470, %v891, 0
  %v909 = vsel %vm470, %v892, 0
  %v912 = vsel %vm470, %v893, 0
  %v915 = vsel %vm470, %v894, 0
  %v918 = vsel %vm470, %v895, 0
  %v920 = vsel %vm583, %v699, 0
  %922 = vmatprep.subr.mxu0 0.0
  %923 = vmatpush1.msra.mxu0 0.0
  %924 = vmatprep.subr.mxu0 0.0
  %925 = vmatpush1.msra.mxu0 0.0
  %926 = vmatprep.subr.mxu0 0.0
  %927 = vmatpush1.msra.mxu0 0.0
  %928 = vmatprep.subr.mxu0 0.0
  %929 = vmatpush1.msra.mxu0 0.0
  %930 = vmatprep.subr.mxu0 0.0
  %931 = vmatpush1.msra.mxu0 0.0
  %932 = vmatprep.subr.mxu0 0.0
  %933 = vmatpush1.msra.mxu0 0.0
  %934 = vmatprep.subr.mxu0 0.0
  %935 = vmatpush1.msra.mxu0 0.0
  %936 = vmatprep.subr.mxu0 0.0
  %937 = vmatpush1.msra.mxu0 0.0
  %938 = vmatprep.subr.mxu0 0.0
  %939 = vmatpush1.msra.mxu0 0.0
  %940 = vmatprep.subr.mxu0 0.0
  %941 = vmatpush1.msra.mxu0 0.0
  %942 = vmatprep.subr.mxu0 0.0
  %943 = vmatpush1.msra.mxu0 0.0
  %944 = vmatprep.subr.mxu0 0.0
  %945 = vmatpush1.msra.mxu0 0.0
  %946 = vmatprep.subr.mxu0 0.0
  %947 = vmatpush1.msra.mxu0 0.0
  %948 = vmatprep.subr.mxu0 0.0
  %949 = vmatpush1.msra.mxu0 0.0
  %950 = vmatprep.subr.mxu0 0.0
  %951 = vmatpush1.msra.mxu0 0.0
  %952 = vmatprep.subr.mxu0 0.0
  %953 = vmatpush1.msra.mxu0 %v920
  %954 = vmatprep.subr.mxu0 0.0
  %955 = vmatpush2.msra.mxu0 0.0
  %956 = vmatprep.subr.mxu0 0.0
  %957 = vmatpush2.msra.mxu0 0.0
  %958 = vmatprep.subr.mxu0 0.0
  %959 = vmatpush2.msra.mxu0 0.0
  %960 = vmatprep.subr.mxu0 0.0
  %961 = vmatpush2.msra.mxu0 0.0
  %962 = vmatprep.subr.mxu0 0.0
  %963 = vmatpush2.msra.mxu0 0.0
  %964 = vmatprep.subr.mxu0 0.0
  %965 = vmatpush2.msra.mxu0 0.0
  %966 = vmatprep.subr.mxu0 0.0
  %967 = vmatpush2.msra.mxu0 0.0
  %968 = vmatprep.subr.mxu0 0.0
  %969 = vmatpush2.msra.mxu0 0.0
  %970 = vmatprep.subr.mxu0 0.0
  %971 = vmatpush2.msra.mxu0 0.0
  %972 = vmatprep.subr.mxu0 0.0
  %973 = vmatpush2.msra.mxu0 0.0
  %974 = vmatprep.subr.mxu0 0.0
  %975 = vmatpush2.msra.mxu0 0.0
  %976 = vmatprep.subr.mxu0 0.0
  %977 = vmatpush2.msra.mxu0 0.0
  %978 = vmatprep.subr.mxu0 0.0
  %979 = vmatpush2.msra.mxu0 0.0
  %980 = vmatprep.subr.mxu0 0.0
  %981 = vmatpush2.msra.mxu0 0.0
  %982 = vmatprep.subr.mxu0 0.0
  %983 = vmatpush2.msra.mxu0 0.0
  %984 = vmatprep.subr.mxu0 0.0
  %985 = vmatpush2.msra.mxu0 0.0
  %986 = vmatprep.mubr.f32.mxu0 0.0
  %987 = vmatmul.mubr.f32.gmra.mxu0 %v897
  %v988 = vpop.f32.mrf.mxu0
  %v989 = vadd.f32 0.0, %v988
  %v990 = vpop.f32.mrf.mxu0
  %991 = vmatprep.mubr.f32.mxu0 0.0
  %992 = vmatmul.mubr.f32.gmra.mxu0 %v900
  %v993 = vpop.f32.mrf.mxu0
  %v994 = vadd.f32 0.0, %v993
  %v995 = vpop.f32.mrf.mxu0
  %996 = vmatprep.mubr.f32.mxu0 0.0
  %997 = vmatmul.mubr.f32.gmra.mxu0 %v903
  %v998 = vpop.f32.mrf.mxu0
  %v999 = vadd.f32 0.0, %v998
  %v1000 = vpop.f32.mrf.mxu0
  %1001 = vmatprep.mubr.f32.mxu0 0.0
  %1002 = vmatmul.mubr.f32.gmra.mxu0 %v906
  %v1003 = vpop.f32.mrf.mxu0
  %v1004 = vadd.f32 0.0, %v1003
  %v1005 = vpop.f32.mrf.mxu0
  %1006 = vmatprep.mubr.f32.mxu0 0.0
  %1007 = vmatmul.mubr.f32.gmra.mxu0 %v909
  %v1008 = vpop.f32.mrf.mxu0
  %v1009 = vadd.f32 0.0, %v1008
  %v1010 = vpop.f32.mrf.mxu0
  %1011 = vmatprep.mubr.f32.mxu0 0.0
  %1012 = vmatmul.mubr.f32.gmra.mxu0 %v912
  %v1013 = vpop.f32.mrf.mxu0
  %v1014 = vadd.f32 0.0, %v1013
  %v1015 = vpop.f32.mrf.mxu0
  %1016 = vmatprep.mubr.f32.mxu0 0.0
  %1017 = vmatmul.mubr.f32.gmra.mxu0 %v915
  %v1018 = vpop.f32.mrf.mxu0
  %v1019 = vadd.f32 0.0, %v1018
  %v1020 = vpop.f32.mrf.mxu0
  %1021 = vmatprep.mubr.f32.mxu0 0.0
  %1022 = vmatmul.mubr.f32.gmra.mxu0 %v918
  %v1023 = vpop.f32.mrf.mxu0
  %v1024 = vadd.f32 0.0, %v1023
  %v1025 = vpop.f32.mrf.mxu0
  %1026 = vdwg.mxu0
  %v1027 = vadd.f32 %v328, %v989
  %v1028 = vadd.f32 %v329, %v994
  %v1029 = vadd.f32 %v330, %v999
  %v1030 = vadd.f32 %v331, %v1004
  %v1031 = vadd.f32 %v332, %v1009
  %v1032 = vadd.f32 %v333, %v1014
  %v1033 = vadd.f32 %v334, %v1019
  %v1034 = vadd.f32 %v335, %v1024
  %v1035 = vand.u32 2147483647, %v1027
  %v1036 = vand.u32 2147483647, %v1028
  %v1037 = vand.u32 2147483647, %v1029
  %v1038 = vand.u32 2147483647, %v1030
  %v1039 = vand.u32 2147483647, %v1031
  %v1040 = vand.u32 2147483647, %v1032
  %v1041 = vand.u32 2147483647, %v1033
  %v1042 = vand.u32 2147483647, %v1034
  %1051 = vrot.lane.b32.xlu0 %v1035, 32
  %v1052 = vpop.permute.xlu0 %1051
  %1053 = vrot.lane.b32.xlu0 %v1036, 32
  %v1054 = vpop.permute.xlu0 %1053
  %1055 = vrot.lane.b32.xlu0 %v1037, 32
  %v1056 = vpop.permute.xlu0 %1055
  %1057 = vrot.lane.b32.xlu0 %v1038, 32
  %v1058 = vpop.permute.xlu0 %1057
  %1059 = vrot.lane.b32.xlu0 %v1039, 32
  %v1060 = vpop.permute.xlu0 %1059
  %1061 = vrot.lane.b32.xlu0 %v1040, 32
  %v1062 = vpop.permute.xlu0 %1061
  %1063 = vrot.lane.b32.xlu0 %v1041, 32
  %v1064 = vpop.permute.xlu0 %1063
  %1065 = vrot.lane.b32.xlu0 %v1042, 32
  %v1066 = vpop.permute.xlu0 %1065
  %v1075 = vsel %vm337, %v691, %v1052
  %v1076 = vsel %vm337, %v692, %v1054
  %v1077 = vsel %vm337, %v693, %v1056
  %v1078 = vsel %vm337, %v694, %v1058
  %v1079 = vsel %vm337, %v695, %v1060
  %v1080 = vsel %vm337, %v696, %v1062
  %v1081 = vsel %vm337, %v697, %v1064
  %v1082 = vsel %vm337, %v698, %v1066
  %v1083 = vld [vmem:[%s6] sm:$0xff]
  %v1084 = vld [vmem:[%s6 + $0x8] sm:$0xff]
  %v1085 = vld [vmem:[%s6 + $0x10] sm:$0xff]
  %v1086 = vld [vmem:[%s6 + $0x18] sm:$0xff]
  %v1087 = vld [vmem:[%s6 + $0x20] sm:$0xff]
  %v1088 = vld [vmem:[%s6 + $0x28] sm:$0xff]
  %v1089 = vld [vmem:[%s6 + $0x30] sm:$0xff]
  %v1090 = vld [vmem:[%s6 + $0x38] sm:$0xff]
  %v1091 = vld [vmem:[%s7] sm:$0x1]
  %v1093 = vlaneseq
  %v1094 = vshrl.u32 %v1093, 7
  %v1095 = vsub.s32 0, %v1094
  %v1096 = vrot.slane %v1091, %v1095
  %vm1098 = vcmask 523264
  %v1100 = vsel %vm1098, %v1075, 0
  %v1103 = vsel %vm1098, %v1076, 0
  %v1106 = vsel %vm1098, %v1077, 0
  %v1109 = vsel %vm1098, %v1078, 0
  %v1112 = vsel %vm1098, %v1079, 0
  %v1115 = vsel %vm1098, %v1080, 0
  %v1118 = vsel %vm1098, %v1081, 0
  %v1121 = vsel %vm1098, %v1082, 0
  %1123 = vmatprep.subr.mxu0 0.0
  %1124 = vmatpush1.msra.mxu0 0.0
  %1125 = vmatprep.subr.mxu0 0.0
  %1126 = vmatpush1.msra.mxu0 0.0
  %1127 = vmatprep.subr.mxu0 0.0
  %1128 = vmatpush1.msra.mxu0 0.0
  %1129 = vmatprep.subr.mxu0 0.0
  %1130 = vmatpush1.msra.mxu0 0.0
  %1131 = vmatprep.subr.mxu0 0.0
  %1132 = vmatpush1.msra.mxu0 0.0
  %1133 = vmatprep.subr.mxu0 0.0
  %1134 = vmatpush1.msra.mxu0 0.0
  %1135 = vmatprep.subr.mxu0 0.0
  %1136 = vmatpush1.msra.mxu0 0.0
  %1137 = vmatprep.subr.mxu0 0.0
  %1138 = vmatpush1.msra.mxu0 0.0
  %1139 = vmatprep.subr.mxu0 0.0
  %1140 = vmatpush1.msra.mxu0 %v1090
  %1141 = vmatprep.subr.mxu0 0.0
  %1142 = vmatpush1.msra.mxu0 %v1089
  %1143 = vmatprep.subr.mxu0 0.0
  %1144 = vmatpush1.msra.mxu0 %v1088
  %1145 = vmatprep.subr.mxu0 0.0
  %1146 = vmatpush1.msra.mxu0 %v1087
  %1147 = vmatprep.subr.mxu0 0.0
  %1148 = vmatpush1.msra.mxu0 %v1086
  %1149 = vmatprep.subr.mxu0 0.0
  %1150 = vmatpush1.msra.mxu0 %v1085
  %1151 = vmatprep.subr.mxu0 0.0
  %1152 = vmatpush1.msra.mxu0 %v1084
  %1153 = vmatprep.subr.mxu0 0.0
  %1154 = vmatpush1.msra.mxu0 %v1083
  %1155 = vmatprep.subr.mxu0 0.0
  %1156 = vmatpush2.msra.mxu0 0.0
  %1157 = vmatprep.subr.mxu0 0.0
  %1158 = vmatpush2.msra.mxu0 0.0
  %1159 = vmatprep.subr.mxu0 0.0
  %1160 = vmatpush2.msra.mxu0 0.0
  %1161 = vmatprep.subr.mxu0 0.0
  %1162 = vmatpush2.msra.mxu0 0.0
  %1163 = vmatprep.subr.mxu0 0.0
  %1164 = vmatpush2.msra.mxu0 0.0
  %1165 = vmatprep.subr.mxu0 0.0
  %1166 = vmatpush2.msra.mxu0 0.0
  %1167 = vmatprep.subr.mxu0 0.0
  %1168 = vmatpush2.msra.mxu0 0.0
  %1169 = vmatprep.subr.mxu0 0.0
  %1170 = vmatpush2.msra.mxu0 0.0
  %1171 = vmatprep.subr.mxu0 0.0
  %1172 = vmatpush2.msra.mxu0 0.0
  %1173 = vmatprep.subr.mxu0 0.0
  %1174 = vmatpush2.msra.mxu0 0.0
  %1175 = vmatprep.subr.mxu0 0.0
  %1176 = vmatpush2.msra.mxu0 0.0
  %1177 = vmatprep.subr.mxu0 0.0
  %1178 = vmatpush2.msra.mxu0 0.0
  %1179 = vmatprep.subr.mxu0 0.0
  %1180 = vmatpush2.msra.mxu0 0.0
  %1181 = vmatprep.subr.mxu0 0.0
  %1182 = vmatpush2.msra.mxu0 0.0
  %1183 = vmatprep.subr.mxu0 0.0
  %1184 = vmatpush2.msra.mxu0 0.0
  %1185 = vmatprep.subr.mxu0 0.0
  %1186 = vmatpush2.msra.mxu0 0.0
  %1187 = vmatprep.mubr.f32.mxu0 0.0
  %1188 = vmatmul.mubr.f32.gmra.mxu0 %v1100
  %v1189 = vpop.f32.mrf.mxu0
  %v1190 = vadd.f32 %v1096, %v1189
  %v1191 = vpop.f32.mrf.mxu0
  %1192 = vmatprep.mubr.f32.mxu0 0.0
  %1193 = vmatmul.mubr.f32.gmra.mxu0 %v1103
  %v1194 = vpop.f32.mrf.mxu0
  %v1195 = vadd.f32 %v1096, %v1194
  %v1196 = vpop.f32.mrf.mxu0
  %1197 = vmatprep.mubr.f32.mxu0 0.0
  %1198 = vmatmul.mubr.f32.gmra.mxu0 %v1106
  %v1199 = vpop.f32.mrf.mxu0
  %v1200 = vadd.f32 %v1096, %v1199
  %v1201 = vpop.f32.mrf.mxu0
  %1202 = vmatprep.mubr.f32.mxu0 0.0
  %1203 = vmatmul.mubr.f32.gmra.mxu0 %v1109
  %v1204 = vpop.f32.mrf.mxu0
  %v1205 = vadd.f32 %v1096, %v1204
  %v1206 = vpop.f32.mrf.mxu0
  %1207 = vmatprep.mubr.f32.mxu0 0.0
  %1208 = vmatmul.mubr.f32.gmra.mxu0 %v1112
  %v1209 = vpop.f32.mrf.mxu0
  %v1210 = vadd.f32 %v1096, %v1209
  %v1211 = vpop.f32.mrf.mxu0
  %1212 = vmatprep.mubr.f32.mxu0 0.0
  %1213 = vmatmul.mubr.f32.gmra.mxu0 %v1115
  %v1214 = vpop.f32.mrf.mxu0
  %v1215 = vadd.f32 %v1096, %v1214
  %v1216 = vpop.f32.mrf.mxu0
  %1217 = vmatprep.mubr.f32.mxu0 0.0
  %1218 = vmatmul.mubr.f32.gmra.mxu0 %v1118
  %v1219 = vpop.f32.mrf.mxu0
  %v1220 = vadd.f32 %v1096, %v1219
  %v1221 = vpop.f32.mrf.mxu0
  %1222 = vmatprep.mubr.f32.mxu0 0.0
  %1223 = vmatmul.mubr.f32.gmra.mxu0 %v1121
  %v1224 = vpop.f32.mrf.mxu0
  %v1225 = vadd.f32 %v1096, %v1224
  %v1226 = vpop.f32.mrf.mxu0
  %1227 = vdwg.mxu0
  %v1228 = vmax.f32 %v1190, 0.0
  %v1229 = vmax.f32 %v1195, 0.0
  %v1230 = vmax.f32 %v1200, 0.0
  %v1231 = vmax.f32 %v1205, 0.0
  %v1232 = vmax.f32 %v1210, 0.0
  %v1233 = vmax.f32 %v1215, 0.0
  %v1234 = vmax.f32 %v1220, 0.0
  %v1235 = vmax.f32 %v1225, 0.0
  %v1236 = vld [vmem:[%s8] sm:$0xff]
  %v1237 = vld [vmem:[%s8 + $0x8] sm:$0xff]
  %v1238 = vld [vmem:[%s8 + $0x10] sm:$0xff]
  %v1239 = vld [vmem:[%s8 + $0x18] sm:$0xff]
  %v1240 = vld [vmem:[%s8 + $0x20] sm:$0xff]
  %v1241 = vld [vmem:[%s8 + $0x28] sm:$0xff]
  %v1242 = vld [vmem:[%s8 + $0x30] sm:$0xff]
  %v1243 = vld [vmem:[%s8 + $0x38] sm:$0xff]
  %v1244 = vld [vmem:[%s9] sm:$0x1]
  %v1246 = vlaneseq
  %v1247 = vshrl.u32 %v1246, 7
  %v1248 = vsub.s32 0, %v1247
  %v1249 = vrot.slane %v1244, %v1248
  %v1252 = vsel %vm1098, %v1228, 0
  %v1255 = vsel %vm1098, %v1229, 0
  %v1258 = vsel %vm1098, %v1230, 0
  %v1261 = vsel %vm1098, %v1231, 0
  %v1264 = vsel %vm1098, %v1232, 0
  %v1267 = vsel %vm1098, %v1233, 0
  %v1270 = vsel %vm1098, %v1234, 0
  %v1273 = vsel %vm1098, %v1235, 0
  %1275 = vmatprep.subr.mxu0 0.0
  %1276 = vmatpush1.msra.mxu0 0.0
  %1277 = vmatprep.subr.mxu0 0.0
  %1278 = vmatpush1.msra.mxu0 0.0
  %1279 = vmatprep.subr.mxu0 0.0
  %1280 = vmatpush1.msra.mxu0 0.0
  %1281 = vmatprep.subr.mxu0 0.0
  %1282 = vmatpush1.msra.mxu0 0.0
  %1283 = vmatprep.subr.mxu0 0.0
  %1284 = vmatpush1.msra.mxu0 0.0
  %1285 = vmatprep.subr.mxu0 0.0
  %1286 = vmatpush1.msra.mxu0 0.0
  %1287 = vmatprep.subr.mxu0 0.0
  %1288 = vmatpush1.msra.mxu0 0.0
  %1289 = vmatprep.subr.mxu0 0.0
  %1290 = vmatpush1.msra.mxu0 0.0
  %1291 = vmatprep.subr.mxu0 0.0
  %1292 = vmatpush1.msra.mxu0 %v1243
  %1293 = vmatprep.subr.mxu0 0.0
  %1294 = vmatpush1.msra.mxu0 %v1242
  %1295 = vmatprep.subr.mxu0 0.0
  %1296 = vmatpush1.msra.mxu0 %v1241
  %1297 = vmatprep.subr.mxu0 0.0
  %1298 = vmatpush1.msra.mxu0 %v1240
  %1299 = vmatprep.subr.mxu0 0.0
  %1300 = vmatpush1.msra.mxu0 %v1239
  %1301 = vmatprep.subr.mxu0 0.0
  %1302 = vmatpush1.msra.mxu0 %v1238
  %1303 = vmatprep.subr.mxu0 0.0
  %1304 = vmatpush1.msra.mxu0 %v1237
  %1305 = vmatprep.subr.mxu0 0.0
  %1306 = vmatpush1.msra.mxu0 %v1236
  %1307 = vmatprep.subr.mxu0 0.0
  %1308 = vmatpush2.msra.mxu0 0.0
  %1309 = vmatprep.subr.mxu0 0.0
  %1310 = vmatpush2.msra.mxu0 0.0
  %1311 = vmatprep.subr.mxu0 0.0
  %1312 = vmatpush2.msra.mxu0 0.0
  %1313 = vmatprep.subr.mxu0 0.0
  %1314 = vmatpush2.msra.mxu0 0.0
  %1315 = vmatprep.subr.mxu0 0.0
  %1316 = vmatpush2.msra.mxu0 0.0
  %1317 = vmatprep.subr.mxu0 0.0
  %1318 = vmatpush2.msra.mxu0 0.0
  %1319 = vmatprep.subr.mxu0 0.0
  %1320 = vmatpush2.msra.mxu0 0.0
  %1321 = vmatprep.subr.mxu0 0.0
  %1322 = vmatpush2.msra.mxu0 0.0
  %1323 = vmatprep.subr.mxu0 0.0
  %1324 = vmatpush2.msra.mxu0 0.0
  %1325 = vmatprep.subr.mxu0 0.0
  %1326 = vmatpush2.msra.mxu0 0.0
  %1327 = vmatprep.subr.mxu0 0.0
  %1328 = vmatpush2.msra.mxu0 0.0
  %1329 = vmatprep.subr.mxu0 0.0
  %1330 = vmatpush2.msra.mxu0 0.0
  %1331 = vmatprep.subr.mxu0 0.0
  %1332 = vmatpush2.msra.mxu0 0.0
  %1333 = vmatprep.subr.mxu0 0.0
  %1334 = vmatpush2.msra.mxu0 0.0
  %1335 = vmatprep.subr.mxu0 0.0
  %1336 = vmatpush2.msra.mxu0 0.0
  %1337 = vmatprep.subr.mxu0 0.0
  %1338 = vmatpush2.msra.mxu0 0.0
  %1339 = vmatprep.mubr.f32.mxu0 0.0
  %1340 = vmatmul.mubr.f32.gmra.mxu0 %v1252
  %v1341 = vpop.f32.mrf.mxu0
  %v1342 = vadd.f32 %v1249, %v1341
  %v1343 = vpop.f32.mrf.mxu0
  %1344 = vmatprep.mubr.f32.mxu0 0.0
  %1345 = vmatmul.mubr.f32.gmra.mxu0 %v1255
  %v1346 = vpop.f32.mrf.mxu0
  %v1347 = vadd.f32 %v1249, %v1346
  %v1348 = vpop.f32.mrf.mxu0
  %1349 = vmatprep.mubr.f32.mxu0 0.0
  %1350 = vmatmul.mubr.f32.gmra.mxu0 %v1258
  %v1351 = vpop.f32.mrf.mxu0
  %v1352 = vadd.f32 %v1249, %v1351
  %v1353 = vpop.f32.mrf.mxu0
  %1354 = vmatprep.mubr.f32.mxu0 0.0
  %1355 = vmatmul.mubr.f32.gmra.mxu0 %v1261
  %v1356 = vpop.f32.mrf.mxu0
  %v1357 = vadd.f32 %v1249, %v1356
  %v1358 = vpop.f32.mrf.mxu0
  %1359 = vmatprep.mubr.f32.mxu0 0.0
  %1360 = vmatmul.mubr.f32.gmra.mxu0 %v1264
  %v1361 = vpop.f32.mrf.mxu0
  %v1362 = vadd.f32 %v1249, %v1361
  %v1363 = vpop.f32.mrf.mxu0
  %1364 = vmatprep.mubr.f32.mxu0 0.0
  %1365 = vmatmul.mubr.f32.gmra.mxu0 %v1267
  %v1366 = vpop.f32.mrf.mxu0
  %v1367 = vadd.f32 %v1249, %v1366
  %v1368 = vpop.f32.mrf.mxu0
  %1369 = vmatprep.mubr.f32.mxu0 0.0
  %1370 = vmatmul.mubr.f32.gmra.mxu0 %v1270
  %v1371 = vpop.f32.mrf.mxu0
  %v1372 = vadd.f32 %v1249, %v1371
  %v1373 = vpop.f32.mrf.mxu0
  %1374 = vmatprep.mubr.f32.mxu0 0.0
  %1375 = vmatmul.mubr.f32.gmra.mxu0 %v1273
  %v1376 = vpop.f32.mrf.mxu0
  %v1377 = vadd.f32 %v1249, %v1376
  %v1378 = vpop.f32.mrf.mxu0
  %1379 = vdwg.mxu0
  %vm1380 = vcmask 56320
  %1381 = vst.msk [vmem:[%s10] sm:$0xff] %vm1380, %v1342
  %1382 = vst.msk [vmem:[%s10 + $0x8] sm:$0xff] %vm1380, %v1347
  %1383 = vst.msk [vmem:[%s10 + $0x10] sm:$0xff] %vm1380, %v1352
  %1384 = vst.msk [vmem:[%s10 + $0x18] sm:$0xff] %vm1380, %v1357
  %1385 = vst.msk [vmem:[%s10 + $0x20] sm:$0xff] %vm1380, %v1362
  %1386 = vst.msk [vmem:[%s10 + $0x28] sm:$0xff] %vm1380, %v1367
  %1387 = vst.msk [vmem:[%s10 + $0x30] sm:$0xff] %vm1380, %v1372
  %1388 = vst.msk [vmem:[%s10 + $0x38] sm:$0xff] %vm1380, %v1377
  // Predicated region
  $region42: #{downstream_forward.3} parent=0 // pred_check
    _
  $region43: #{downstream_forward.3} parent=0 // pred_check_branch
    %1390 = sbr.rel (0) target = $region45
  $region44: #{downstream_forward.3} parent=0 // pred_region
    _
  $region45: #{downstream_forward.3} parent=0 // pred_fallthru
    _
  // Predicated region
  $region46: #{downstream_forward.3} parent=0 // pred_check
    _
  $region47: #{downstream_forward.3} parent=0 // pred_check_branch
    %1392 = sbr.rel (0) target = $region49
  $region48: #{downstream_forward.3} parent=0 // pred_region
    _
  $region49: #{downstream_forward.3} parent=0 // pred_fallthru
    _

</llo_original>
